<compile_context>
chip_gen: v5e
topology: v5e:2x2
jax: 0.10.0
libtpu: 0.0.40
codegen_flags: <defaults>
</compile_context>

<pallas_src>
import functools

import jax
import jax.numpy as jnp
from jax.experimental import pallas as pl
from jax.experimental.pallas import tpu as pltpu


def _conv_tanh_kernel(col_ref, x_ref, w_ref, b_ref, o_ref, *, H, W, KH, KW):
    """One (image, Cout-block) step: in-kernel im2col via rolls + 9 MXU dots + tanh."""
    x = x_ref[0]                       # (Cin, H*W) f32, lane-dense
    col = col_ref[...]                 # (1, H*W) int32: w-coordinate of each lane
    hw = x.shape[1]
    cout_blk = o_ref.shape[1]
    ph, pw = (KH - 1) // 2, (KW - 1) // 2

    # Flat output index along the lane axis; H-boundary masks are range compares.
    hw_idx = jax.lax.broadcasted_iota(jnp.int32, (1, hw), 1)

    # Bias folded into the accumulator init (no separate bias-add pass).
    acc = jnp.broadcast_to(b_ref[...], (cout_blk, hw)).astype(jnp.float32)

    for kh in range(KH):
        dh = kh - ph
        for kw in range(KW):
            dw = kw - pw
            d = dh * W + dw
            # Shifted view: xs[:, h*W + w] = x[:, (h+dh)*W + (w+dw)]  (XLU roll).
            xs = x if d == 0 else pltpu.roll(x, shift=(-d) % hw, axis=1)
            # Zero-padding masks; they also cover the roll wrap-around region.
            conds = []
            if dh < 0:
                conds.append(hw_idx >= (-dh) * W)       # h + dh >= 0
            if dh > 0:
                conds.append(hw_idx < (H - dh) * W)     # h + dh <  H
            if dw < 0:
                conds.append(col >= -dw)                # w + dw >= 0
            if dw > 0:
                conds.append(col < W - dw)              # w + dw <  W
            if conds:
                valid = functools.reduce(jnp.logical_and, conds)
                xs = jnp.where(valid, xs, 0.0)
            # (Cout_blk, Cin) @ (Cin, H*W) on the MXU, f32 accumulation.
            acc = acc + jnp.dot(w_ref[kh * KW + kw], xs,
                                preferred_element_type=jnp.float32)

    o_ref[0] = jnp.tanh(acc)           # EUP tanh; (Cout_blk, H*W) unmasked stores


def conv2d_tanh(x_nchw, weight_oihw, bias):
    """Equivalent of torch: tanh(Conv2d(Cin, Cout, 3, padding=1, stride=1)(x))."""
    N, Cin, H, W = x_nchw.shape
    Cout, _, KH, KW = weight_oihw.shape
    HW = H * W
    assert HW % 128 == 0, "flattened spatial axis must be a multiple of 128"
    cout_blk = 8 if (Cout % 8 == 0 and Cout > 8) else Cout
    n_cblk = Cout // cout_blk

    x_flat = x_nchw.reshape(N, Cin, HW).astype(jnp.float32)            # free reshape
    # weight[co, ci, kh, kw] -> w_taps[kh*KW + kw, co, ci]
    w_taps = jnp.transpose(weight_oihw, (2, 3, 0, 1)).reshape(KH * KW, Cout, Cin)
    w_taps = w_taps.astype(jnp.float32)
    b_col = bias.reshape(Cout, 1).astype(jnp.float32)
    # Column coordinate per flattened pixel (avoids vector int div/mod in-kernel).
    col_ids = jnp.broadcast_to(jnp.arange(W, dtype=jnp.int32), (H, W)).reshape(1, HW)

    kernel = functools.partial(_conv_tanh_kernel, H=H, W=W, KH=KH, KW=KW)

    out_flat = pl.pallas_call(
        kernel,
        out_shape=jax.ShapeDtypeStruct((N, Cout, HW), jnp.float32),
        grid=(N, n_cblk),
        in_specs=[
            pl.BlockSpec((1, HW), lambda n, c: (0, 0)),                      # col ids
            pl.BlockSpec((1, Cin, HW), lambda n, c: (n, 0, 0)),              # image
            pl.BlockSpec((KH * KW, cout_blk, Cin), lambda n, c: (0, c, 0)),  # weights
            pl.BlockSpec((cout_blk, 1), lambda n, c: (c, 0)),                # bias
        ],
        out_specs=pl.BlockSpec((1, cout_blk, HW), lambda n, c: (n, c, 0)),
        compiler_params=pltpu.CompilerParams(
            dimension_semantics=("parallel", "parallel")),
    )(col_ids, x_flat, w_taps, b_col)

    # (N, Cout, H*W) is already NCHW-ordered; the reshape is a free metadata op.
    return out_flat.reshape(N, Cout, H, W)


if __name__ == "__main__":
    key = jax.random.PRNGKey(0)
    kx, kw, kb = jax.random.split(key, 3)

    # Shapes from the PyTorch module: x = torch.randn(1, 3, 48, 48), Conv2d(3, 16, 3, padding=1).
    x = jax.random.normal(kx, (1, 3, 48, 48), dtype=jnp.float32)
    fan_in = 3 * 3 * 3
    bound = 1.0 / (fan_in ** 0.5)
    weight = jax.random.uniform(kw, (16, 3, 3, 3), dtype=jnp.float32,
                                minval=-bound, maxval=bound)
    bias = jax.random.uniform(kb, (16,), dtype=jnp.float32,
                              minval=-bound, maxval=bound)

    out = jax.block_until_ready(conv2d_tanh(x, weight, bias))

    # Cross-check against XLA's conv for correctness.
    ref = jnp.tanh(
        jax.lax.conv_general_dilated(
            x, weight, window_strides=(1, 1), padding=((1, 1), (1, 1)),
            dimension_numbers=("NCHW", "OIHW", "NCHW"))
        + bias.reshape(1, 16, 1, 1))
    assert out.shape == (1, 16, 48, 48)
    assert jnp.allclose(out, ref, atol=1e-5, rtol=1e-5), \
        float(jnp.max(jnp.abs(out - ref)))

    print("KERNEL_OK")
</pallas_src>

<mosaic_0001>
module attributes {stable_mosaic.version = 11 : i64} {
  func.func @_conv_tanh_kernel(%arg0: i32, %arg1: i32, %arg2: memref<1x2304xi32, #tpu.memory_space<vmem>>, %arg3: memref<1x3x2304xf32, #tpu.memory_space<vmem>>, %arg4: memref<9x8x3xf32, #tpu.memory_space<vmem>>, %arg5: memref<8x1xf32, #tpu.memory_space<vmem>>, %arg6: memref<1x8x2304xf32, #tpu.memory_space<vmem>>) attributes {dimension_semantics = [#tpu.dimension_semantics<parallel>, #tpu.dimension_semantics<parallel>], iteration_bounds = array<i64: 1, 2>, scalar_prefetch = 0 : i64, scratch_operands = 0 : i64, tpu.core_type = #tpu.core_type<tc>, window_params = [{pipeline_mode = #tpu.pipeline_mode<synchronous>, transform_indices = @transform_0, window_bounds = array<i64: 1, 2304>}, {transform_indices = @transform_1, window_bounds = array<i64: 1, 3, 2304>}, {transform_indices = @transform_2, window_bounds = array<i64: 9, 8, 3>}, {transform_indices = @transform_3, window_bounds = array<i64: 8, 1>}, {transform_indices = @transform_4, window_bounds = array<i64: 1, 8, 2304>}]} {
    %c0 = arith.constant 0 : index
    %c0_0 = arith.constant 0 : index
    %c0_1 = arith.constant 0 : index
    %0 = vector.load %arg3[%c0, %c0_0, %c0_1] : memref<1x3x2304xf32, #tpu.memory_space<vmem>>, vector<1x3x2304xf32>
    %1 = vector.shape_cast %0 : vector<1x3x2304xf32> to vector<3x2304xf32>
    %c0_2 = arith.constant 0 : index
    %c0_3 = arith.constant 0 : index
    %2 = vector.load %arg2[%c0_2, %c0_3] : memref<1x2304xi32, #tpu.memory_space<vmem>>, vector<1x2304xi32>
    %3 = tpu.iota {dimensions = array<i32: 1>} : vector<1x2304xi32>
    %c0_4 = arith.constant 0 : index
    %c0_5 = arith.constant 0 : index
    %4 = vector.load %arg5[%c0_4, %c0_5] : memref<8x1xf32, #tpu.memory_space<vmem>>, vector<8x1xf32>
    %5 = vector.shape_cast %4 : vector<8x1xf32> to vector<8x1xf32>
    %6 = vector.broadcast %5 : vector<8x1xf32> to vector<8x2304xf32>
    %c49_i32 = arith.constant 49 : i32
    %7 = tpu.dynamic_rotate %1 by %c49_i32 dim 1 : vector<3x2304xf32>, i32 -> vector<3x2304xf32>
    %c48_i32 = arith.constant 48 : i32
    %8 = vector.broadcast %c48_i32 : i32 to vector<1x2304xi32>
    %9 = arith.cmpi sge, %3, %8 : vector<1x2304xi32>
    %c1_i32 = arith.constant 1 : i32
    %10 = vector.broadcast %c1_i32 : i32 to vector<1x2304xi32>
    %11 = arith.cmpi sge, %2, %10 : vector<1x2304xi32>
    %12 = arith.andi %9, %11 : vector<1x2304xi1>
    %cst = arith.constant 0.000000e+00 : f32
    %13 = vector.shape_cast %12 : vector<1x2304xi1> to vector<1x2304xi1>
    %14 = vector.broadcast %13 : vector<1x2304xi1> to vector<3x2304xi1>
    %15 = vector.broadcast %cst : f32 to vector<3x2304xf32>
    %16 = arith.select %14, %7, %15 : vector<3x2304xi1>, vector<3x2304xf32>
    %c0_6 = arith.constant 0 : index
    %c0_7 = arith.constant 0 : index
    %c0_8 = arith.constant 0 : index
    %17 = vector.load %arg4[%c0_6, %c0_7, %c0_8] : memref<9x8x3xf32, #tpu.memory_space<vmem>>, vector<1x8x3xf32>
    %18 = vector.shape_cast %17 : vector<1x8x3xf32> to vector<8x3xf32>
    %cst_9 = arith.constant dense<0.000000e+00> : vector<8x2304xf32>
    %19 = tpu.matmul %18, %16, %cst_9 {dimension_numbers = #tpu.dot_dimension_numbers<[1], [0], [0], [1], [0, 0, 1, 1], [], []>} : vector<8x3xf32>, vector<3x2304xf32>, vector<8x2304xf32> -> vector<8x2304xf32>
    %20 = arith.addf %6, %19 : vector<8x2304xf32>
    %c48_i32_10 = arith.constant 48 : i32
    %21 = tpu.dynamic_rotate %1 by %c48_i32_10 dim 1 : vector<3x2304xf32>, i32 -> vector<3x2304xf32>
    %c48_i32_11 = arith.constant 48 : i32
    %22 = vector.broadcast %c48_i32_11 : i32 to vector<1x2304xi32>
    %23 = arith.cmpi sge, %3, %22 : vector<1x2304xi32>
    %cst_12 = arith.constant 0.000000e+00 : f32
    %24 = vector.shape_cast %23 : vector<1x2304xi1> to vector<1x2304xi1>
    %25 = vector.broadcast %24 : vector<1x2304xi1> to vector<3x2304xi1>
    %26 = vector.broadcast %cst_12 : f32 to vector<3x2304xf32>
    %27 = arith.select %25, %21, %26 : vector<3x2304xi1>, vector<3x2304xf32>
    %c1 = arith.constant 1 : index
    %c0_13 = arith.constant 0 : index
    %c0_14 = arith.constant 0 : index
    %28 = vector.load %arg4[%c1, %c0_13, %c0_14] : memref<9x8x3xf32, #tpu.memory_space<vmem>>, vector<1x8x3xf32>
    %29 = vector.shape_cast %28 : vector<1x8x3xf32> to vector<8x3xf32>
    %cst_15 = arith.constant dense<0.000000e+00> : vector<8x2304xf32>
    %30 = tpu.matmul %29, %27, %cst_15 {dimension_numbers = #tpu.dot_dimension_numbers<[1], [0], [0], [1], [0, 0, 1, 1], [], []>} : vector<8x3xf32>, vector<3x2304xf32>, vector<8x2304xf32> -> vector<8x2304xf32>
    %31 = arith.addf %20, %30 : vector<8x2304xf32>
    %c47_i32 = arith.constant 47 : i32
    %32 = tpu.dynamic_rotate %1 by %c47_i32 dim 1 : vector<3x2304xf32>, i32 -> vector<3x2304xf32>
    %c48_i32_16 = arith.constant 48 : i32
    %33 = vector.broadcast %c48_i32_16 : i32 to vector<1x2304xi32>
    %34 = arith.cmpi sge, %3, %33 : vector<1x2304xi32>
    %c47_i32_17 = arith.constant 47 : i32
    %35 = vector.broadcast %c47_i32_17 : i32 to vector<1x2304xi32>
    %36 = arith.cmpi slt, %2, %35 : vector<1x2304xi32>
    %37 = arith.andi %34, %36 : vector<1x2304xi1>
    %cst_18 = arith.constant 0.000000e+00 : f32
    %38 = vector.shape_cast %37 : vector<1x2304xi1> to vector<1x2304xi1>
    %39 = vector.broadcast %38 : vector<1x2304xi1> to vector<3x2304xi1>
    %40 = vector.broadcast %cst_18 : f32 to vector<3x2304xf32>
    %41 = arith.select %39, %32, %40 : vector<3x2304xi1>, vector<3x2304xf32>
    %c2 = arith.constant 2 : index
    %c0_19 = arith.constant 0 : index
    %c0_20 = arith.constant 0 : index
    %42 = vector.load %arg4[%c2, %c0_19, %c0_20] : memref<9x8x3xf32, #tpu.memory_space<vmem>>, vector<1x8x3xf32>
    %43 = vector.shape_cast %42 : vector<1x8x3xf32> to vector<8x3xf32>
    %cst_21 = arith.constant dense<0.000000e+00> : vector<8x2304xf32>
    %44 = tpu.matmul %43, %41, %cst_21 {dimension_numbers = #tpu.dot_dimension_numbers<[1], [0], [0], [1], [0, 0, 1, 1], [], []>} : vector<8x3xf32>, vector<3x2304xf32>, vector<8x2304xf32> -> vector<8x2304xf32>
    %45 = arith.addf %31, %44 : vector<8x2304xf32>
    %c1_i32_22 = arith.constant 1 : i32
    %46 = tpu.dynamic_rotate %1 by %c1_i32_22 dim 1 : vector<3x2304xf32>, i32 -> vector<3x2304xf32>
    %c1_i32_23 = arith.constant 1 : i32
    %47 = vector.broadcast %c1_i32_23 : i32 to vector<1x2304xi32>
    %48 = arith.cmpi sge, %2, %47 : vector<1x2304xi32>
    %cst_24 = arith.constant 0.000000e+00 : f32
    %49 = vector.shape_cast %48 : vector<1x2304xi1> to vector<1x2304xi1>
    %50 = vector.broadcast %49 : vector<1x2304xi1> to vector<3x2304xi1>
    %51 = vector.broadcast %cst_24 : f32 to vector<3x2304xf32>
    %52 = arith.select %50, %46, %51 : vector<3x2304xi1>, vector<3x2304xf32>
    %c3 = arith.constant 3 : index
    %c0_25 = arith.constant 0 : index
    %c0_26 = arith.constant 0 : index
    %53 = vector.load %arg4[%c3, %c0_25, %c0_26] : memref<9x8x3xf32, #tpu.memory_space<vmem>>, vector<1x8x3xf32>
    %54 = vector.shape_cast %53 : vector<1x8x3xf32> to vector<8x3xf32>
    %cst_27 = arith.constant dense<0.000000e+00> : vector<8x2304xf32>
    %55 = tpu.matmul %54, %52, %cst_27 {dimension_numbers = #tpu.dot_dimension_numbers<[1], [0], [0], [1], [0, 0, 1, 1], [], []>} : vector<8x3xf32>, vector<3x2304xf32>, vector<8x2304xf32> -> vector<8x2304xf32>
    %56 = arith.addf %45, %55 : vector<8x2304xf32>
    %c4 = arith.constant 4 : index
    %c0_28 = arith.constant 0 : index
    %c0_29 = arith.constant 0 : index
    %57 = vector.load %arg4[%c4, %c0_28, %c0_29] : memref<9x8x3xf32, #tpu.memory_space<vmem>>, vector<1x8x3xf32>
    %58 = vector.shape_cast %57 : vector<1x8x3xf32> to vector<8x3xf32>
    %cst_30 = arith.constant dense<0.000000e+00> : vector<8x2304xf32>
    %59 = tpu.matmul %58, %1, %cst_30 {dimension_numbers = #tpu.dot_dimension_numbers<[1], [0], [0], [1], [0, 0, 1, 1], [], []>} : vector<8x3xf32>, vector<3x2304xf32>, vector<8x2304xf32> -> vector<8x2304xf32>
    %60 = arith.addf %56, %59 : vector<8x2304xf32>
    %c2303_i32 = arith.constant 2303 : i32
    %61 = tpu.dynamic_rotate %1 by %c2303_i32 dim 1 : vector<3x2304xf32>, i32 -> vector<3x2304xf32>
    %c47_i32_31 = arith.constant 47 : i32
    %62 = vector.broadcast %c47_i32_31 : i32 to vector<1x2304xi32>
    %63 = arith.cmpi slt, %2, %62 : vector<1x2304xi32>
    %cst_32 = arith.constant 0.000000e+00 : f32
    %64 = vector.shape_cast %63 : vector<1x2304xi1> to vector<1x2304xi1>
    %65 = vector.broadcast %64 : vector<1x2304xi1> to vector<3x2304xi1>
    %66 = vector.broadcast %cst_32 : f32 to vector<3x2304xf32>
    %67 = arith.select %65, %61, %66 : vector<3x2304xi1>, vector<3x2304xf32>
    %c5 = arith.constant 5 : index
    %c0_33 = arith.constant 0 : index
    %c0_34 = arith.constant 0 : index
    %68 = vector.load %arg4[%c5, %c0_33, %c0_34] : memref<9x8x3xf32, #tpu.memory_space<vmem>>, vector<1x8x3xf32>
    %69 = vector.shape_cast %68 : vector<1x8x3xf32> to vector<8x3xf32>
    %cst_35 = arith.constant dense<0.000000e+00> : vector<8x2304xf32>
    %70 = tpu.matmul %69, %67, %cst_35 {dimension_numbers = #tpu.dot_dimension_numbers<[1], [0], [0], [1], [0, 0, 1, 1], [], []>} : vector<8x3xf32>, vector<3x2304xf32>, vector<8x2304xf32> -> vector<8x2304xf32>
    %71 = arith.addf %60, %70 : vector<8x2304xf32>
    %c2257_i32 = arith.constant 2257 : i32
    %72 = tpu.dynamic_rotate %1 by %c2257_i32 dim 1 : vector<3x2304xf32>, i32 -> vector<3x2304xf32>
    %c2256_i32 = arith.constant 2256 : i32
    %73 = vector.broadcast %c2256_i32 : i32 to vector<1x2304xi32>
    %74 = arith.cmpi slt, %3, %73 : vector<1x2304xi32>
    %c1_i32_36 = arith.constant 1 : i32
    %75 = vector.broadcast %c1_i32_36 : i32 to vector<1x2304xi32>
    %76 = arith.cmpi sge, %2, %75 : vector<1x2304xi32>
    %77 = arith.andi %74, %76 : vector<1x2304xi1>
    %cst_37 = arith.constant 0.000000e+00 : f32
    %78 = vector.shape_cast %77 : vector<1x2304xi1> to vector<1x2304xi1>
    %79 = vector.broadcast %78 : vector<1x2304xi1> to vector<3x2304xi1>
    %80 = vector.broadcast %cst_37 : f32 to vector<3x2304xf32>
    %81 = arith.select %79, %72, %80 : vector<3x2304xi1>, vector<3x2304xf32>
    %c6 = arith.constant 6 : index
    %c0_38 = arith.constant 0 : index
    %c0_39 = arith.constant 0 : index
    %82 = vector.load %arg4[%c6, %c0_38, %c0_39] : memref<9x8x3xf32, #tpu.memory_space<vmem>>, vector<1x8x3xf32>
    %83 = vector.shape_cast %82 : vector<1x8x3xf32> to vector<8x3xf32>
    %cst_40 = arith.constant dense<0.000000e+00> : vector<8x2304xf32>
    %84 = tpu.matmul %83, %81, %cst_40 {dimension_numbers = #tpu.dot_dimension_numbers<[1], [0], [0], [1], [0, 0, 1, 1], [], []>} : vector<8x3xf32>, vector<3x2304xf32>, vector<8x2304xf32> -> vector<8x2304xf32>
    %85 = arith.addf %71, %84 : vector<8x2304xf32>
    %c2256_i32_41 = arith.constant 2256 : i32
    %86 = tpu.dynamic_rotate %1 by %c2256_i32_41 dim 1 : vector<3x2304xf32>, i32 -> vector<3x2304xf32>
    %c2256_i32_42 = arith.constant 2256 : i32
    %87 = vector.broadcast %c2256_i32_42 : i32 to vector<1x2304xi32>
    %88 = arith.cmpi slt, %3, %87 : vector<1x2304xi32>
    %cst_43 = arith.constant 0.000000e+00 : f32
    %89 = vector.shape_cast %88 : vector<1x2304xi1> to vector<1x2304xi1>
    %90 = vector.broadcast %89 : vector<1x2304xi1> to vector<3x2304xi1>
    %91 = vector.broadcast %cst_43 : f32 to vector<3x2304xf32>
    %92 = arith.select %90, %86, %91 : vector<3x2304xi1>, vector<3x2304xf32>
    %c7 = arith.constant 7 : index
    %c0_44 = arith.constant 0 : index
    %c0_45 = arith.constant 0 : index
    %93 = vector.load %arg4[%c7, %c0_44, %c0_45] : memref<9x8x3xf32, #tpu.memory_space<vmem>>, vector<1x8x3xf32>
    %94 = vector.shape_cast %93 : vector<1x8x3xf32> to vector<8x3xf32>
    %cst_46 = arith.constant dense<0.000000e+00> : vector<8x2304xf32>
    %95 = tpu.matmul %94, %92, %cst_46 {dimension_numbers = #tpu.dot_dimension_numbers<[1], [0], [0], [1], [0, 0, 1, 1], [], []>} : vector<8x3xf32>, vector<3x2304xf32>, vector<8x2304xf32> -> vector<8x2304xf32>
    %96 = arith.addf %85, %95 : vector<8x2304xf32>
    %c2255_i32 = arith.constant 2255 : i32
    %97 = tpu.dynamic_rotate %1 by %c2255_i32 dim 1 : vector<3x2304xf32>, i32 -> vector<3x2304xf32>
    %c2256_i32_47 = arith.constant 2256 : i32
    %98 = vector.broadcast %c2256_i32_47 : i32 to vector<1x2304xi32>
    %99 = arith.cmpi slt, %3, %98 : vector<1x2304xi32>
    %c47_i32_48 = arith.constant 47 : i32
    %100 = vector.broadcast %c47_i32_48 : i32 to vector<1x2304xi32>
    %101 = arith.cmpi slt, %2, %100 : vector<1x2304xi32>
    %102 = arith.andi %99, %101 : vector<1x2304xi1>
    %cst_49 = arith.constant 0.000000e+00 : f32
    %103 = vector.shape_cast %102 : vector<1x2304xi1> to vector<1x2304xi1>
    %104 = vector.broadcast %103 : vector<1x2304xi1> to vector<3x2304xi1>
    %105 = vector.broadcast %cst_49 : f32 to vector<3x2304xf32>
    %106 = arith.select %104, %97, %105 : vector<3x2304xi1>, vector<3x2304xf32>
    %c8 = arith.constant 8 : index
    %c0_50 = arith.constant 0 : index
    %c0_51 = arith.constant 0 : index
    %107 = vector.load %arg4[%c8, %c0_50, %c0_51] : memref<9x8x3xf32, #tpu.memory_space<vmem>>, vector<1x8x3xf32>
    %108 = vector.shape_cast %107 : vector<1x8x3xf32> to vector<8x3xf32>
    %cst_52 = arith.constant dense<0.000000e+00> : vector<8x2304xf32>
    %109 = tpu.matmul %108, %106, %cst_52 {dimension_numbers = #tpu.dot_dimension_numbers<[1], [0], [0], [1], [0, 0, 1, 1], [], []>} : vector<8x3xf32>, vector<3x2304xf32>, vector<8x2304xf32> -> vector<8x2304xf32>
    %110 = arith.addf %96, %109 : vector<8x2304xf32>
    %111 = math.tanh %110 : vector<8x2304xf32>
    %c0_53 = arith.constant 0 : index
    %c0_54 = arith.constant 0 : index
    %c0_55 = arith.constant 0 : index
    %112 = vector.load %arg6[%c0_53, %c0_54, %c0_55] : memref<1x8x2304xf32, #tpu.memory_space<vmem>>, vector<1x8x2304xf32>
    %113 = vector.shape_cast %112 : vector<1x8x2304xf32> to vector<8x2304xf32>
    %114 = vector.shape_cast %111 : vector<8x2304xf32> to vector<1x8x2304xf32>
    tpu.vector_store %arg6[%c0_53, %c0_54, %c0_55], %114 {strides = array<i32>} : memref<1x8x2304xf32, #tpu.memory_space<vmem>>, vector<1x8x2304xf32>,
    return
  }
  func.func @transform_0(%arg0: i32, %arg1: i32) -> (i32, i32) {
    %c0_i32 = arith.constant 0 : i32
    %c0_i32_0 = arith.constant 0 : i32
    %c0_i32_1 = arith.constant 0 : i32
    return %c0_i32, %c0_i32_0 : i32, i32
  }
  func.func @transform_1(%arg0: i32, %arg1: i32) -> (i32, i32, i32) {
    %c0_i32 = arith.constant 0 : i32
    %c0_i32_0 = arith.constant 0 : i32
    %c0_i32_1 = arith.constant 0 : i32
    return %arg0, %c0_i32, %c0_i32_0 : i32, i32, i32
  }
  func.func @transform_2(%arg0: i32, %arg1: i32) -> (i32, i32, i32) {
    %c0_i32 = arith.constant 0 : i32
    %c0_i32_0 = arith.constant 0 : i32
    %c0_i32_1 = arith.constant 0 : i32
    return %c0_i32, %arg1, %c0_i32_0 : i32, i32, i32
  }
  func.func @transform_3(%arg0: i32, %arg1: i32) -> (i32, i32) {
    %c0_i32 = arith.constant 0 : i32
    %c0_i32_0 = arith.constant 0 : i32
    return %arg1, %c0_i32 : i32, i32
  }
  func.func @transform_4(%arg0: i32, %arg1: i32) -> (i32, i32, i32) {
    %c0_i32 = arith.constant 0 : i32
    %c0_i32_0 = arith.constant 0 : i32
    return %arg0, %arg1, %c0_i32 : i32, i32, i32
  }
}

</mosaic_0001>

<llo_original>
// kernel: tpu_custom_call.1
$region0: #{tpu_custom_call.1}
  #allocation0 [shape = 'u32[]', space=smem, size = 0x4, offset = 0x4, fixed_abs, tag = 'smem constant byte address 0x4 - core index']
  #allocation1 [shape = 'u32[72,128]{1,0:T(1,128)}', space=vmem, size = 0x9000, scoped, tag = 'internal scratch']
  %s0 = inlined_call_operand.vmem [shape: s32[1,2304], index: 0, kind: input, shape index: {}]
  %s1 = inlined_call_operand.vmem [shape: f32[1,3,2304], index: 1, kind: input, shape index: {}]
  %s2 = inlined_call_operand.vmem [shape: f32[9,16,3], index: 2, kind: input, shape index: {}]
  %s3 = inlined_call_operand.vmem [shape: f32[16,1], index: 3, kind: input, shape index: {}]
  %s4 = inlined_call_operand.hbm [shape: f32[1,16,2304], index: 4, kind: output, shape index: {}]
  %s5 = sld [smem:[#allocation0]]
  $region87: #{tpu_custom_call.1} parent=0
    _
  %s7 = ssub.s32 1, %s5
  %s8 = scalar_select 0, %s7, %s5
  $region1: #{tpu_custom_call.1} parent=0
    #allocation2 [shape = 'u8[73728]{0}', space=vmem, size = 0x12000, scoped, tag = 'input window, operand 2']
    #allocation3 [shape = 'u8[147456]{0}', space=vmem, size = 0x24000, scoped, tag = 'output window, operand 0']
    #allocation4 [shape = 's32[2]{0}', space=sflag, size = 0x8, scoped, tag = 'scoped memory for tpu_custom_call.1']
    %9 = vsyncpa [#allocation4], 0
    %s10 = scalar_lea.sflag [#allocation4], 1
    %11 = vsyncpa %s10, 0
    loop: start=0, step=1, limit=4
    $region2: #{tpu_custom_call.1} parent=1 // loop_pre_header
      _
    $region3: #{tpu_custom_call.1} parent=1 // loop_header
      %s13 = sphi 0, %s17
      %p14 = scmp.ge.s32.totalorder %s13, 4
      %s20 = sphi 0, %s32
      %s21 = sphi 0, %s28
      %s22 = sphi 0, %s20
      %s23 = sphi 0, %s21
      %s24 = sphi 0, %s22
      %s25 = sphi 0, %s23
      %s33 = sphi 0, %s33
      %s35 = sphi 0, %s33
      %s36 = sphi 0, %s35
      %s50 = sphi 0, %s36
      %s56 = sphi 0, %s58
      %s59 = sphi 0, %s56
      %s60 = sphi 0, %s59
      %s76 = sphi 0, %s60
      %s82 = sphi 0, %s84
      %s85 = sphi 0, %s82
      %s86 = sphi 0, %s85
      %s102 = sphi 0, %s86
      %s108 = sphi 0, %s110
      %s111 = sphi 0, %s108
      %s112 = sphi 0, %s111
      %s128 = sphi 0, %s112
      %s136 = sphi 0, %s138
      %s139 = sphi 0, %s136
      %s140 = sphi 0, %s139
      %s156 = sphi 0, %s140
    $region4: #{tpu_custom_call.1} parent=1 // loop_header_branch
      %16 = sbr.rel (%p14) target = $region8
    $region5: #{tpu_custom_call.1} parent=1 // loop_body
      %s18 = ssub.s32 %s13, 1
      %s19 = ssub.s32 %s13, 2
      %s26 = sadd.s32 1, %s21
      %p27 = scmp.ge.s32.totalorder %s26, 2
      %s28 = scalar_select %p27, 0, %s26
      %s29 = sadd.s32 1, %s20
      %s30 = scalar_select %p27, %s29, %s20
      %p31 = scmp.ge.s32.totalorder %s30, 1
      %s32 = scalar_select %p31, 0, %s30
      %s34 = sadd.s32 %s33, 1
      %p37 = scmp.eq.s32.totalorder %s13, 1
      %p38 = scmp.ne.s32.totalorder %s33, %s35
      %p39 = scmp.eq.s32.totalorder %s13, 0
      %p40 = por %p38, %p39
      %p41 = scmp.ne.s32.totalorder %s33, %s35
      %p42 = scmp.eq.s32.totalorder %s18, 1
      %p43 = por %p41, %p42
      %p44 = scmp.ne.s32.totalorder %s35, %s36
      %p45 = scmp.eq.s32.totalorder %s18, 0
      %p46 = por %p44, %p45
      %p47 = scmp.ne.s32.totalorder %s35, %s36
      %p48 = scmp.eq.s32.totalorder %s19, 1
      %p49 = por %p47, %p48
      %p51 = scmp.ne.s32.totalorder %s36, %s50
      %p52 = scmp.eq.s32.totalorder %s19, 0
      %p53 = por %p51, %p52
      %s54 = ssub.s32 %s20, %s32
      %p55 = scmp.eq.s32.totalorder %s54, 0
      %s57 = sadd.s32 %s56, 1
      %s58 = scalar_select %p55, %s56, %s57
      %p61 = pneg %p55
      %p62 = scmp.eq.s32.totalorder %s13, 1
      %p63 = por %p61, %p62
      %p64 = scmp.ne.s32.totalorder %s56, %s59
      %p65 = scmp.eq.s32.totalorder %s13, 0
      %p66 = por %p64, %p65
      %p67 = scmp.ne.s32.totalorder %s56, %s59
      %p68 = scmp.eq.s32.totalorder %s18, 1
      %p69 = por %p67, %p68
      %p70 = scmp.ne.s32.totalorder %s59, %s60
      %p71 = scmp.eq.s32.totalorder %s18, 0
      %p72 = por %p70, %p71
      %p73 = scmp.ne.s32.totalorder %s59, %s60
      %p74 = scmp.eq.s32.totalorder %s19, 1
      %p75 = por %p73, %p74
      %p77 = scmp.ne.s32.totalorder %s60, %s76
      %p78 = scmp.eq.s32.totalorder %s19, 0
      %p79 = por %p77, %p78
      %s80 = ssub.s32 %s21, %s28
      %p81 = scmp.eq.s32.totalorder %s80, 0
      %s83 = sadd.s32 %s82, 1
      %s84 = scalar_select %p81, %s82, %s83
      %p87 = pneg %p81
      %p88 = scmp.eq.s32.totalorder %s13, 1
      %p89 = por %p87, %p88
      %p90 = scmp.ne.s32.totalorder %s82, %s85
      %p91 = scmp.eq.s32.totalorder %s13, 0
      %p92 = por %p90, %p91
      %p93 = scmp.ne.s32.totalorder %s82, %s85
      %p94 = scmp.eq.s32.totalorder %s18, 1
      %p95 = por %p93, %p94
      %p96 = scmp.ne.s32.totalorder %s85, %s86
      %p97 = scmp.eq.s32.totalorder %s18, 0
      %p98 = por %p96, %p97
      %p99 = scmp.ne.s32.totalorder %s85, %s86
      %p100 = scmp.eq.s32.totalorder %s19, 1
      %p101 = por %p99, %p100
      %p103 = scmp.ne.s32.totalorder %s86, %s102
      %p104 = scmp.eq.s32.totalorder %s19, 0
      %p105 = por %p103, %p104
      %s106 = ssub.s32 %s21, %s28
      %p107 = scmp.eq.s32.totalorder %s106, 0
      %s109 = sadd.s32 %s108, 1
      %s110 = scalar_select %p107, %s108, %s109
      %p113 = pneg %p107
      %p114 = scmp.eq.s32.totalorder %s13, 1
      %p115 = por %p113, %p114
      %p116 = scmp.ne.s32.totalorder %s108, %s111
      %p117 = scmp.eq.s32.totalorder %s13, 0
      %p118 = por %p116, %p117
      %p119 = scmp.ne.s32.totalorder %s108, %s111
      %p120 = scmp.eq.s32.totalorder %s18, 1
      %p121 = por %p119, %p120
      %p122 = scmp.ne.s32.totalorder %s111, %s112
      %p123 = scmp.eq.s32.totalorder %s18, 0
      %p124 = por %p122, %p123
      %p125 = scmp.ne.s32.totalorder %s111, %s112
      %p126 = scmp.eq.s32.totalorder %s19, 1
      %p127 = por %p125, %p126
      %p129 = scmp.ne.s32.totalorder %s112, %s128
      %p130 = scmp.eq.s32.totalorder %s19, 0
      %p131 = por %p129, %p130
      %s132 = ssub.s32 %s20, %s32
      %s133 = ssub.s32 %s21, %s28
      %s134 = sor.u32 %s132, %s133
      %p135 = scmp.eq.s32.totalorder %s134, 0
      %s137 = sadd.s32 %s136, 1
      %s138 = scalar_select %p135, %s136, %s137
      %p141 = pneg %p135
      %p142 = scmp.eq.s32.totalorder %s13, 1
      %p143 = por %p141, %p142
      %p144 = scmp.ne.s32.totalorder %s136, %s139
      %p145 = scmp.eq.s32.totalorder %s13, 0
      %p146 = por %p144, %p145
      %p147 = scmp.ne.s32.totalorder %s136, %s139
      %p148 = scmp.eq.s32.totalorder %s18, 1
      %p149 = por %p147, %p148
      %p150 = scmp.ne.s32.totalorder %s139, %s140
      %p151 = scmp.eq.s32.totalorder %s18, 0
      %p152 = por %p150, %p151
      %p153 = scmp.ne.s32.totalorder %s139, %s140
      %p154 = scmp.eq.s32.totalorder %s19, 1
      %p155 = por %p153, %p154
      %p157 = scmp.ne.s32.totalorder %s140, %s156
      %p158 = scmp.eq.s32.totalorder %s19, 0
      %p159 = por %p157, %p158
      %p160 = scmp.le.s32.totalorder 1, %s13
      %p161 = scmp.lt.s32.totalorder %s13, 3
      %p162 = pnand %p160, %p161
      %p163 = pneg %p162
      // Predicated region
      $region9: #{tpu_custom_call.1} parent=5 // pred_check
        _
      $region10: #{tpu_custom_call.1} parent=5 // pred_check_branch
        %165 = sbr.rel (%p162) target = $region12
      $region11: #{tpu_custom_call.1} parent=5 // pred_region
        %s166 = ssub.s32 %s13, 1
        // Predicated region
        $region13: #{tpu_custom_call.1} parent=11 // pred_check
          %p167 = pneg %p46
        $region14: #{tpu_custom_call.1} parent=11 // pred_check_branch
          %169 = sbr.rel (%p167) target = $region16
        $region15: #{tpu_custom_call.1} parent=11 // pred_region
          _
        $region16: #{tpu_custom_call.1} parent=11 // pred_fallthru
          _
        // Predicated region
        $region17: #{tpu_custom_call.1} parent=11 // pred_check
          %p170 = pneg %p72
        $region18: #{tpu_custom_call.1} parent=11 // pred_check_branch
          %172 = sbr.rel (%p170) target = $region20
        $region19: #{tpu_custom_call.1} parent=11 // pred_region
          %p173 = scmp.lt.s32.totalorder %s22, 0
          %s174 = scalar_select %p173, %s22, 0
          %s175 = smul.addr %s174, 18
          %s176 = smul.addr %s175, 4
          %s177 = scalar_lea.vmem %s1, %s176
        $region20: #{tpu_custom_call.1} parent=11 // pred_fallthru
          _
      $region12: #{tpu_custom_call.1} parent=5 // pred_fallthru
        _
      %p178 = scmp.lt.s32.totalorder %s13, 2
      // Predicated region
      $region21: #{tpu_custom_call.1} parent=5 // pred_check
        %p179 = pneg %p178
      $region22: #{tpu_custom_call.1} parent=5 // pred_check_branch
        %181 = sbr.rel (%p179) target = $region24
      $region23: #{tpu_custom_call.1} parent=5 // pred_region
        // Predicated region
        $region25: #{tpu_custom_call.1} parent=23 // pred_check
          %p182 = pneg %p92
        $region26: #{tpu_custom_call.1} parent=23 // pred_check_branch
          %184 = sbr.rel (%p182) target = $region28
        $region27: #{tpu_custom_call.1} parent=23 // pred_region
          %s185 = sand.u32 %s82, 1
          %s186 = sand.u32 %s82, 1
          %s187 = smul.addr %s186, 72
          %s188 = scalar_lea.vmem [#allocation2], %s187
          %s189 = smul.addr %s21, 8
          %s190 = scalar_lea.vmem %s2, %s189
          // Predicated region
          $region29: #{tpu_custom_call.1} parent=27 // pred_check
            _
          $region30: #{tpu_custom_call.1} parent=27 // pred_check_branch
            %192 = sbr.rel (0) target = $region32
          $region31: #{tpu_custom_call.1} parent=27 // pred_region
            // Predicated region
            $region33: #{tpu_custom_call.1} parent=31 // pred_check
              _
            $region34: #{tpu_custom_call.1} parent=31 // pred_check_branch
              %194 = sbr.rel (0) target = $region36
            $region35: #{tpu_custom_call.1} parent=31 // pred_region
              // Predicated region
              $region48: #{tpu_custom_call.1} parent=35 // pred_check
                _
              $region49: #{tpu_custom_call.1} parent=35 // pred_check_branch
                %226 = sbr.rel (0) target = $region51
              $region50: #{tpu_custom_call.1} parent=35 // pred_region
                loop: start=0, step=1, limit=1
                $region52: #{tpu_custom_call.1} parent=50 // loop_pre_header
                  _
                $region53: #{tpu_custom_call.1} parent=50 // loop_header
                  %s228 = sphi 0, %s232
                  %p229 = scmp.ge.s32.totalorder %s228, 1
                  %s233 = sphi %s190, %s190
                  %s234 = sphi %s188, %s188
                $region54: #{tpu_custom_call.1} parent=50 // loop_header_branch
                  %231 = sbr.rel (%p229) target = $region58
                $region55: #{tpu_custom_call.1} parent=50 // loop_body
                  %v235 = vld [vmem:[%s233] sm:$0xff]
                  %236 = vst [vmem:[%s234] sm:$0xff] %v235
                  %v237 = vld [vmem:[%s233 + $0x10] sm:$0xff]
                  %238 = vst [vmem:[%s234 + $0x8] sm:$0xff] %v237
                  %v239 = vld [vmem:[%s233 + $0x20] sm:$0xff]
                  %240 = vst [vmem:[%s234 + $0x10] sm:$0xff] %v239
                  %v241 = vld [vmem:[%s233 + $0x30] sm:$0xff]
                  %242 = vst [vmem:[%s234 + $0x18] sm:$0xff] %v241
                  %v243 = vld [vmem:[%s233 + $0x40] sm:$0xff]
                  %244 = vst [vmem:[%s234 + $0x20] sm:$0xff] %v243
                  %v245 = vld [vmem:[%s233 + $0x50] sm:$0xff]
                  %246 = vst [vmem:[%s234 + $0x28] sm:$0xff] %v245
                  %v247 = vld [vmem:[%s233 + $0x60] sm:$0xff]
                  %248 = vst [vmem:[%s234 + $0x30] sm:$0xff] %v247
                  %v249 = vld [vmem:[%s233 + $0x70] sm:$0xff]
                  %250 = vst [vmem:[%s234 + $0x38] sm:$0xff] %v249
                  %v251 = vld [vmem:[%s233 + $0x80] sm:$0xff]
                  %252 = vst [vmem:[%s234 + $0x40] sm:$0xff] %v251
                $region56: #{tpu_custom_call.1} parent=50 // loop_footer
                  %s232 = sadd.s32 1, %s228
                $region57: #{tpu_custom_call.1} parent=50 // loop_footer_branch
                  %227 = sbr.rel target = $region53
                $region58: #{tpu_custom_call.1} parent=50 // loop_exit
                  _
              $region51: #{tpu_custom_call.1} parent=35 // pred_fallthru
                _
              // Predicated region
              $region59: #{tpu_custom_call.1} parent=35 // pred_check
                _
              $region60: #{tpu_custom_call.1} parent=35 // pred_check_branch
                %254 = sbr.rel target = $region62
              $region61: #{tpu_custom_call.1} parent=35 // pred_region
                _
              $region62: #{tpu_custom_call.1} parent=35 // pred_fallthru
                _
            $region36: #{tpu_custom_call.1} parent=31 // pred_fallthru
              _
            // Predicated region
            $region37: #{tpu_custom_call.1} parent=31 // pred_check
              _
            $region38: #{tpu_custom_call.1} parent=31 // pred_check_branch
              %196 = sbr.rel target = $region40
            $region39: #{tpu_custom_call.1} parent=31 // pred_region
              %s198 = ssub.s32 256, 1
              loop: start=0, step=1, limit=1
              $region41: #{tpu_custom_call.1} parent=39 // loop_pre_header
                _
              $region42: #{tpu_custom_call.1} parent=39 // loop_header
                %s200 = sphi 0, %s204
                %p201 = scmp.ge.s32.totalorder %s200, 1
                %s205 = sphi %s190, %s190
                %s206 = sphi %s188, %s188
              $region43: #{tpu_custom_call.1} parent=39 // loop_header_branch
                %203 = sbr.rel (%p201) target = $region47
              $region44: #{tpu_custom_call.1} parent=39 // loop_body
                %v207 = vld [vmem:[%s205] sm:%s198]
                %208 = vst [vmem:[%s206] sm:%s198] %v207
                %v209 = vld [vmem:[%s205 + $0x10] sm:%s198]
                %210 = vst [vmem:[%s206 + $0x8] sm:%s198] %v209
                %v211 = vld [vmem:[%s205 + $0x20] sm:%s198]
                %212 = vst [vmem:[%s206 + $0x10] sm:%s198] %v211
                %v213 = vld [vmem:[%s205 + $0x30] sm:%s198]
                %214 = vst [vmem:[%s206 + $0x18] sm:%s198] %v213
                %v215 = vld [vmem:[%s205 + $0x40] sm:%s198]
                %216 = vst [vmem:[%s206 + $0x20] sm:%s198] %v215
                %v217 = vld [vmem:[%s205 + $0x50] sm:%s198]
                %218 = vst [vmem:[%s206 + $0x28] sm:%s198] %v217
                %v219 = vld [vmem:[%s205 + $0x60] sm:%s198]
                %220 = vst [vmem:[%s206 + $0x30] sm:%s198] %v219
                %v221 = vld [vmem:[%s205 + $0x70] sm:%s198]
                %222 = vst [vmem:[%s206 + $0x38] sm:%s198] %v221
                %v223 = vld [vmem:[%s205 + $0x80] sm:%s198]
                %224 = vst [vmem:[%s206 + $0x40] sm:%s198] %v223
              $region45: #{tpu_custom_call.1} parent=39 // loop_footer
                %s204 = sadd.s32 1, %s200
              $region46: #{tpu_custom_call.1} parent=39 // loop_footer_branch
                %199 = sbr.rel target = $region42
              $region47: #{tpu_custom_call.1} parent=39 // loop_exit
                _
            $region40: #{tpu_custom_call.1} parent=31 // pred_fallthru
              _
          $region32: #{tpu_custom_call.1} parent=27 // pred_fallthru
            _
          %255 = vnop
        $region28: #{tpu_custom_call.1} parent=23 // pred_fallthru
          _
        // Predicated region
        $region63: #{tpu_custom_call.1} parent=23 // pred_check
          %p256 = pneg %p118
        $region64: #{tpu_custom_call.1} parent=23 // pred_check_branch
          %258 = sbr.rel (%p256) target = $region66
        $region65: #{tpu_custom_call.1} parent=23 // pred_region
          %p259 = scmp.lt.s32.totalorder %s21, 1
          %s260 = scalar_select %p259, %s21, 1
          %s261 = smul.addr %s260, 8
          %s262 = scalar_lea.vmem %s3, %s261
        $region66: #{tpu_custom_call.1} parent=23 // pred_fallthru
          _
      $region24: #{tpu_custom_call.1} parent=5 // pred_fallthru
        _
      %p263 = scmp.le.s32.totalorder 1, %s13
      %p264 = scmp.lt.s32.totalorder %s13, 3
      %p265 = pnand %p263, %p264
      %p266 = pneg %p265
      // Predicated region
      $region67: #{tpu_custom_call.1} parent=5 // pred_check
        _
      $region68: #{tpu_custom_call.1} parent=5 // pred_check_branch
        %268 = sbr.rel (%p265) target = $region70
      $region69: #{tpu_custom_call.1} parent=5 // pred_region
        %s269 = ssub.s32 %s13, 1
        %s270 = sand.u32 %s85, 1
        %s271 = sand.u32 %s85, 1
        %s272 = smul.addr %s271, 72
        %s273 = scalar_lea.vmem [#allocation2], %s272
        // Predicated region
        $region71: #{tpu_custom_call.1} parent=69 // pred_check
          %p274 = pneg %p98
        $region72: #{tpu_custom_call.1} parent=69 // pred_check_branch
          %276 = sbr.rel (%p274) target = $region74
        $region73: #{tpu_custom_call.1} parent=69 // pred_region
          _
        $region74: #{tpu_custom_call.1} parent=69 // pred_fallthru
          _
        %p277 = pneg %p46
        %p278 = pneg %p43
        %p279 = scmp.lt.s32.totalorder %s22, 0
        %s280 = scalar_select %p279, %s22, 0
        %s281 = smul.addr %s280, 18
        %s282 = smul.addr %s281, 4
        %s283 = scalar_lea.vmem %s1, %s282
        %p284 = pneg %p72
        %p285 = pneg %p69
        %s286 = sand.u32 %s85, 1
        %s287 = sand.u32 %s85, 1
        %s288 = smul.addr %s287, 72
        %s289 = scalar_lea.vmem [#allocation2], %s288
        %p290 = pneg %p98
        %p291 = pneg %p95
        %p292 = scmp.lt.s32.totalorder %s23, 1
        %s293 = scalar_select %p292, %s23, 1
        %s294 = smul.addr %s293, 8
        %s295 = scalar_lea.vmem %s3, %s294
        %p296 = pneg %p124
        %p297 = pneg %p121
        %p298 = pneg %p152
        %p299 = pneg %p149
        %s300 = sand.u32 %s139, 1
        %s301 = scalar_lea.sflag [#allocation4], %s300
        %s302 = sand.u32 %s139, 1
        %s303 = smul.addr %s302, 144
        %s304 = scalar_lea.vmem [#allocation3], %s303
        %p305 = scmp.lt.s32.totalorder %s22, 0
        %s306 = scalar_select %p305, %s22, 0
        %s307 = smul.addr %s306, 18
        %s308 = smul.addr %s307, 4
        %s309 = scalar_lea.vmem %s1, %s308
        %p310 = scmp.lt.s32.totalorder %s23, 1
        %s311 = scalar_select %p310, %s23, 1
        %s312 = smul.addr %s311, 8
        %s313 = scalar_lea.vmem %s3, %s312
        %v314 = vld [vmem:[%s309] sm:$0x77]
        %v315 = vld [vmem:[%s309 + $0x8] sm:$0x77]
        %v316 = vld [vmem:[%s309 + $0x10] sm:$0x77]
        %v317 = vld [vmem:[%s309 + $0x18] sm:$0x77]
        %v318 = vld [vmem:[%s309 + $0x20] sm:$0x77]
        %v319 = vld [vmem:[%s309 + $0x28] sm:$0x77]
        %v320 = vld [vmem:[%s309 + $0x30] sm:$0x77]
        %v321 = vld [vmem:[%s309 + $0x38] sm:$0x77]
        %v322 = vld [vmem:[%s309 + $0x40] sm:$0x77]
        %v323 = vld [vmem:[%s0] sm:$0xff]
        %v324 = vld [vmem:[%s0 + $0x8] sm:$0xff]
        %v325 = vld [vmem:[%s0 + $0x10] sm:$0x3]
        %v326 = vlaneseq
        %v327 = vand.u32 %v326, 127
        %v328 = vadd.s32 %v327, 128
        %v329 = vadd.s32 %v327, 256
        %v330 = vadd.s32 %v327, 384
        %v331 = vadd.s32 %v327, 512
        %v332 = vadd.s32 %v327, 640
        %v333 = vadd.s32 %v327, 768
        %v334 = vadd.s32 %v327, 896
        %v335 = vadd.s32 %v327, 1024
        %v336 = vadd.s32 %v327, 1152
        %v337 = vadd.s32 %v327, 1280
        %v338 = vadd.s32 %v327, 1408
        %v339 = vadd.s32 %v327, 1536
        %v340 = vadd.s32 %v327, 1664
        %v341 = vadd.s32 %v327, 1792
        %v342 = vadd.s32 %v327, 1920
        %v343 = vadd.s32 %v327, 2048
        %v344 = vadd.s32 %v327, 2176
        %v345 = vld [vmem:[%s313] sm:$0xff]
        %347 = vset.pattern.permute.xlu0 0
        %348 = vperm.xlu0 %347, %v345
        %v349 = vpop.permute.xlu0 %348
        %360 = vst [vmem:[#allocation1] ss:$2 sm:$0xff] %v314
        %s361 = scalar_lea.vmem [#allocation1], 16
        %362 = vst [vmem:[%s361] ss:$2 sm:$0xff] %v315
        %s363 = scalar_lea.vmem [#allocation1], 32
        %364 = vst [vmem:[%s363] ss:$2 sm:$0xff] %v316
        %s365 = scalar_lea.vmem [#allocation1], 48
        %366 = vst [vmem:[%s365] ss:$2 sm:$0xff] %v317
        %v367 = vld.sshfl [vmem:[#allocation1] sm:$0xff pattern:$0x75316420]
        %v368 = vld.sshfl [vmem:[#allocation1 + $0x8] sm:$0xff pattern:$0x75316420]
        %v369 = vld.sshfl [vmem:[#allocation1 + $0x10] sm:$0xff pattern:$0x75316420]
        %v370 = vld.sshfl [vmem:[#allocation1 + $0x18] sm:$0xff pattern:$0x75316420]
        %v371 = vld.sshfl [vmem:[#allocation1 + $0x20] sm:$0xff pattern:$0x75316420]
        %v372 = vld.sshfl [vmem:[#allocation1 + $0x28] sm:$0xff pattern:$0x75316420]
        %v373 = vld.sshfl [vmem:[#allocation1 + $0x30] sm:$0xff pattern:$0x75316420]
        %v374 = vld.sshfl [vmem:[#allocation1 + $0x38] sm:$0xff pattern:$0x75316420]
        %375 = vst [vmem:[#allocation1] ss:$2 sm:$0xff] %v318
        %376 = vst [vmem:[%s361] ss:$2 sm:$0xff] %v319
        %377 = vst [vmem:[%s363] ss:$2 sm:$0xff] %v320
        %378 = vst [vmem:[%s365] ss:$2 sm:$0xff] %v321
        %v379 = vld.sshfl [vmem:[#allocation1] sm:$0xff pattern:$0x75316420]
        %v380 = vld.sshfl [vmem:[#allocation1 + $0x8] sm:$0xff pattern:$0x75316420]
        %v381 = vld.sshfl [vmem:[#allocation1 + $0x10] sm:$0xff pattern:$0x75316420]
        %v382 = vld.sshfl [vmem:[#allocation1 + $0x18] sm:$0xff pattern:$0x75316420]
        %v383 = vld.sshfl [vmem:[#allocation1 + $0x20] sm:$0xff pattern:$0x75316420]
        %v384 = vld.sshfl [vmem:[#allocation1 + $0x28] sm:$0xff pattern:$0x75316420]
        %v385 = vld.sshfl [vmem:[#allocation1 + $0x30] sm:$0xff pattern:$0x75316420]
        %v386 = vld.sshfl [vmem:[#allocation1 + $0x38] sm:$0xff pattern:$0x75316420]
        %387 = vst [vmem:[#allocation1] ss:$2 sm:$0xff] %v322
        %v388 = vld.sshfl [vmem:[#allocation1] sm:$0xff pattern:$0x75316420]
        %v389 = vld.sshfl [vmem:[#allocation1 + $0x8] sm:$0xff pattern:$0x75316420]
        %408 = vrot.lane.b32.xlu0 %v367, 49
        %v409 = vpop.permute.xlu0 %408
        %410 = vrot.lane.b32.xlu0 %v368, 49
        %v411 = vpop.permute.xlu0 %410
        %412 = vrot.lane.b32.xlu0 %v369, 49
        %v413 = vpop.permute.xlu0 %412
        %414 = vrot.lane.b32.xlu0 %v370, 49
        %v415 = vpop.permute.xlu0 %414
        %416 = vrot.lane.b32.xlu0 %v371, 49
        %v417 = vpop.permute.xlu0 %416
        %418 = vrot.lane.b32.xlu0 %v372, 49
        %v419 = vpop.permute.xlu0 %418
        %420 = vrot.lane.b32.xlu0 %v373, 49
        %v421 = vpop.permute.xlu0 %420
        %422 = vrot.lane.b32.xlu0 %v374, 49
        %v423 = vpop.permute.xlu0 %422
        %424 = vrot.lane.b32.xlu0 %v379, 49
        %v425 = vpop.permute.xlu0 %424
        %426 = vrot.lane.b32.xlu0 %v380, 49
        %v427 = vpop.permute.xlu0 %426
        %428 = vrot.lane.b32.xlu0 %v381, 49
        %v429 = vpop.permute.xlu0 %428
        %430 = vrot.lane.b32.xlu0 %v382, 49
        %v431 = vpop.permute.xlu0 %430
        %432 = vrot.lane.b32.xlu0 %v383, 49
        %v433 = vpop.permute.xlu0 %432
        %434 = vrot.lane.b32.xlu0 %v384, 49
        %v435 = vpop.permute.xlu0 %434
        %436 = vrot.lane.b32.xlu0 %v385, 49
        %v437 = vpop.permute.xlu0 %436
        %438 = vrot.lane.b32.xlu0 %v386, 49
        %v439 = vpop.permute.xlu0 %438
        %440 = vrot.lane.b32.xlu0 %v388, 49
        %v441 = vpop.permute.xlu0 %440
        %442 = vrot.lane.b32.xlu0 %v389, 49
        %v443 = vpop.permute.xlu0 %442
        %vm444 = vcmp.lt.s32.totalorder %v327, 49
        %v445 = vsel %vm444, %v441, %v443
        %v446 = vsel %vm444, %v439, %v441
        %v447 = vsel %vm444, %v437, %v439
        %v448 = vsel %vm444, %v435, %v437
        %v449 = vsel %vm444, %v433, %v435
        %v450 = vsel %vm444, %v431, %v433
        %v451 = vsel %vm444, %v429, %v431
        %v452 = vsel %vm444, %v427, %v429
        %v453 = vsel %vm444, %v425, %v427
        %v454 = vsel %vm444, %v423, %v425
        %v455 = vsel %vm444, %v421, %v423
        %v456 = vsel %vm444, %v419, %v421
        %v457 = vsel %vm444, %v417, %v419
        %v458 = vsel %vm444, %v415, %v417
        %v459 = vsel %vm444, %v413, %v415
        %v460 = vsel %vm444, %v411, %v413
        %v461 = vsel %vm444, %v409, %v411
        %v462 = vsel %vm444, %v443, %v409
        %vm463 = vcmp.ge.s32.totalorder %v327, 48
        %vm464 = vcmp.ge.s32.totalorder %v328, 48
        %vm465 = vcmp.ge.s32.totalorder %v329, 48
        %vm466 = vcmp.ge.s32.totalorder %v330, 48
        %vm467 = vcmp.ge.s32.totalorder %v331, 48
        %vm468 = vcmp.ge.s32.totalorder %v332, 48
        %vm469 = vcmp.ge.s32.totalorder %v333, 48
        %vm470 = vcmp.ge.s32.totalorder %v334, 48
        %vm471 = vcmp.ge.s32.totalorder %v335, 48
        %vm472 = vcmp.ge.s32.totalorder %v336, 48
        %vm473 = vcmp.ge.s32.totalorder %v337, 48
        %vm474 = vcmp.ge.s32.totalorder %v338, 48
        %vm475 = vcmp.ge.s32.totalorder %v339, 48
        %vm476 = vcmp.ge.s32.totalorder %v340, 48
        %vm477 = vcmp.ge.s32.totalorder %v341, 48
        %vm478 = vcmp.ge.s32.totalorder %v342, 48
        %vm479 = vcmp.ge.s32.totalorder %v343, 48
        %vm480 = vcmp.ge.s32.totalorder %v344, 48
        %vm481 = vcmp.ge.s32.totalorder %v323, 1
        %vm482 = vcmp.ge.s32.totalorder %v324, 1
        %vm483 = vcmp.ge.s32.totalorder %v325, 1
        %v484 = vsel %vm481, 1, 0
        %v485 = vsel %vm482, 1, 0
        %v486 = vsel %vm483, 1, 0
        %v487 = vperm.slane %v484, 0
        %v488 = vperm.slane %v484, 1
        %v489 = vperm.slane %v484, 2
        %v490 = vperm.slane %v484, 3
        %v491 = vperm.slane %v484, 4
        %v492 = vperm.slane %v484, 5
        %v493 = vperm.slane %v484, 6
        %v494 = vperm.slane %v484, 7
        %v495 = vperm.slane %v485, 0
        %v496 = vperm.slane %v485, 1
        %v497 = vperm.slane %v485, 2
        %v498 = vperm.slane %v485, 3
        %v499 = vperm.slane %v485, 4
        %v500 = vperm.slane %v485, 5
        %v501 = vperm.slane %v485, 6
        %v502 = vperm.slane %v485, 7
        %v503 = vperm.slane %v486, 0
        %v504 = vperm.slane %v486, 1
        %vm505 = vcmp.ne.s32.totalorder %v487, 0
        %vm506 = vcmp.ne.s32.totalorder %v488, 0
        %vm507 = vcmp.ne.s32.totalorder %v489, 0
        %vm508 = vcmp.ne.s32.totalorder %v490, 0
        %vm509 = vcmp.ne.s32.totalorder %v491, 0
        %vm510 = vcmp.ne.s32.totalorder %v492, 0
        %vm511 = vcmp.ne.s32.totalorder %v493, 0
        %vm512 = vcmp.ne.s32.totalorder %v494, 0
        %vm513 = vcmp.ne.s32.totalorder %v495, 0
        %vm514 = vcmp.ne.s32.totalorder %v496, 0
        %vm515 = vcmp.ne.s32.totalorder %v497, 0
        %vm516 = vcmp.ne.s32.totalorder %v498, 0
        %vm517 = vcmp.ne.s32.totalorder %v499, 0
        %vm518 = vcmp.ne.s32.totalorder %v500, 0
        %vm519 = vcmp.ne.s32.totalorder %v501, 0
        %vm520 = vcmp.ne.s32.totalorder %v502, 0
        %vm521 = vcmp.ne.s32.totalorder %v503, 0
        %vm522 = vcmp.ne.s32.totalorder %v504, 0
        %vm523 = vmand %vm463, %vm505
        %vm524 = vmand %vm464, %vm506
        %vm525 = vmand %vm465, %vm507
        %vm526 = vmand %vm466, %vm508
        %vm527 = vmand %vm467, %vm509
        %vm528 = vmand %vm468, %vm510
        %vm529 = vmand %vm469, %vm511
        %vm530 = vmand %vm470, %vm512
        %vm531 = vmand %vm471, %vm513
        %vm532 = vmand %vm472, %vm514
        %vm533 = vmand %vm473, %vm515
        %vm534 = vmand %vm474, %vm516
        %vm535 = vmand %vm475, %vm517
        %vm536 = vmand %vm476, %vm518
        %vm537 = vmand %vm477, %vm519
        %vm538 = vmand %vm478, %vm520
        %vm539 = vmand %vm479, %vm521
        %vm540 = vmand %vm480, %vm522
        %v541 = vsel %vm523, 1, 0
        %v542 = vsel %vm524, 1, 0
        %v543 = vsel %vm525, 1, 0
        %v544 = vsel %vm526, 1, 0
        %v545 = vsel %vm527, 1, 0
        %v546 = vsel %vm528, 1, 0
        %v547 = vsel %vm529, 1, 0
        %v548 = vsel %vm530, 1, 0
        %v549 = vsel %vm531, 1, 0
        %v550 = vsel %vm532, 1, 0
        %v551 = vsel %vm533, 1, 0
        %v552 = vsel %vm534, 1, 0
        %v553 = vsel %vm535, 1, 0
        %v554 = vsel %vm536, 1, 0
        %v555 = vsel %vm537, 1, 0
        %v556 = vsel %vm538, 1, 0
        %v557 = vsel %vm539, 1, 0
        %v558 = vsel %vm540, 1, 0
        %v559 = vperm.slane %v541, 0
        %v560 = vperm.slane %v542, 0
        %v561 = vperm.slane %v543, 0
        %v562 = vperm.slane %v544, 0
        %v563 = vperm.slane %v545, 0
        %v564 = vperm.slane %v546, 0
        %v565 = vperm.slane %v547, 0
        %v566 = vperm.slane %v548, 0
        %v567 = vperm.slane %v549, 0
        %v568 = vperm.slane %v550, 0
        %v569 = vperm.slane %v551, 0
        %v570 = vperm.slane %v552, 0
        %v571 = vperm.slane %v553, 0
        %v572 = vperm.slane %v554, 0
        %v573 = vperm.slane %v555, 0
        %v574 = vperm.slane %v556, 0
        %v575 = vperm.slane %v557, 0
        %v576 = vperm.slane %v558, 0
        %vm577 = vcmp.eq.s32.totalorder %v559, 1
        %vm578 = vcmp.eq.s32.totalorder %v560, 1
        %vm579 = vcmp.eq.s32.totalorder %v561, 1
        %vm580 = vcmp.eq.s32.totalorder %v562, 1
        %vm581 = vcmp.eq.s32.totalorder %v563, 1
        %vm582 = vcmp.eq.s32.totalorder %v564, 1
        %vm583 = vcmp.eq.s32.totalorder %v565, 1
        %vm584 = vcmp.eq.s32.totalorder %v566, 1
        %vm585 = vcmp.eq.s32.totalorder %v567, 1
        %vm586 = vcmp.eq.s32.totalorder %v568, 1
        %vm587 = vcmp.eq.s32.totalorder %v569, 1
        %vm588 = vcmp.eq.s32.totalorder %v570, 1
        %vm589 = vcmp.eq.s32.totalorder %v571, 1
        %vm590 = vcmp.eq.s32.totalorder %v572, 1
        %vm591 = vcmp.eq.s32.totalorder %v573, 1
        %vm592 = vcmp.eq.s32.totalorder %v574, 1
        %vm593 = vcmp.eq.s32.totalorder %v575, 1
        %vm594 = vcmp.eq.s32.totalorder %v576, 1
        %v595 = vsel %vm577, %v462, 0.0
        %v596 = vsel %vm578, %v461, 0.0
        %v597 = vsel %vm579, %v460, 0.0
        %v598 = vsel %vm580, %v459, 0.0
        %v599 = vsel %vm581, %v458, 0.0
        %v600 = vsel %vm582, %v457, 0.0
        %v601 = vsel %vm583, %v456, 0.0
        %v602 = vsel %vm584, %v455, 0.0
        %v603 = vsel %vm585, %v454, 0.0
        %v604 = vsel %vm586, %v453, 0.0
        %v605 = vsel %vm587, %v452, 0.0
        %v606 = vsel %vm588, %v451, 0.0
        %v607 = vsel %vm589, %v450, 0.0
        %v608 = vsel %vm590, %v449, 0.0
        %v609 = vsel %vm591, %v448, 0.0
        %v610 = vsel %vm592, %v447, 0.0
        %v611 = vsel %vm593, %v446, 0.0
        %v612 = vsel %vm594, %v445, 0.0
        %v613 = vld [vmem:[%s273] sm:$0xff]
        %vm614 = vcmask 23552
        %v616 = vsel %vm614, %v613, 0
        %vm618 = vcmask 1042432
        %v620 = vsel %vm618, %v595, 0
        %v623 = vsel %vm618, %v596, 0
        %v626 = vsel %vm618, %v597, 0
        %v629 = vsel %vm618, %v598, 0
        %v632 = vsel %vm618, %v599, 0
        %v635 = vsel %vm618, %v600, 0
        %v638 = vsel %vm618, %v601, 0
        %v641 = vsel %vm618, %v602, 0
        %v644 = vsel %vm618, %v603, 0
        %v647 = vsel %vm618, %v604, 0
        %v650 = vsel %vm618, %v605, 0
        %v653 = vsel %vm618, %v606, 0
        %v656 = vsel %vm618, %v607, 0
        %v659 = vsel %vm618, %v608, 0
        %v662 = vsel %vm618, %v609, 0
        %v665 = vsel %vm618, %v610, 0
        %v668 = vsel %vm618, %v611, 0
        %v671 = vsel %vm618, %v612, 0
        %673 = vmatpush.msra.mxu0 0.0
        %674 = vmatpush.msra.mxu0 0.0
        %675 = vmatpush.msra.mxu0 0.0
        %676 = vmatpush.msra.mxu0 0.0
        %677 = vmatpush.msra.mxu0 0.0
        %678 = vmatpush.msra.mxu0 0.0
        %679 = vmatpush.msra.mxu0 0.0
        %680 = vmatpush.msra.mxu0 0.0
        %681 = vmatpush.msra.mxu0 0.0
        %682 = vmatpush.msra.mxu0 0.0
        %683 = vmatpush.msra.mxu0 0.0
        %684 = vmatpush.msra.mxu0 0.0
        %685 = vmatpush.msra.mxu0 0.0
        %686 = vmatpush.msra.mxu0 0.0
        %687 = vmatpush.msra.mxu0 0.0
        %688 = vmatpush.msra.mxu0 %v620
        %689 = vmatmul.f32.gmra.mxu0 %v616
        %v690 = vpop.f32.mrf.mxu0
        %v691 = vadd.f32 0.0, %v690
        %692 = vdwg.mxu0
        %693 = vmatpush.msra.mxu0 0.0
        %694 = vmatpush.msra.mxu0 0.0
        %695 = vmatpush.msra.mxu0 0.0
        %696 = vmatpush.msra.mxu0 0.0
        %697 = vmatpush.msra.mxu0 0.0
        %698 = vmatpush.msra.mxu0 0.0
        %699 = vmatpush.msra.mxu0 0.0
        %700 = vmatpush.msra.mxu0 0.0
        %701 = vmatpush.msra.mxu0 0.0
        %702 = vmatpush.msra.mxu0 0.0
        %703 = vmatpush.msra.mxu0 0.0
        %704 = vmatpush.msra.mxu0 0.0
        %705 = vmatpush.msra.mxu0 0.0
        %706 = vmatpush.msra.mxu0 0.0
        %707 = vmatpush.msra.mxu0 0.0
        %708 = vmatpush.msra.mxu0 %v623
        %709 = vmatmul.f32.gmra.mxu0 %v616
        %v710 = vpop.f32.mrf.mxu0
        %v711 = vadd.f32 0.0, %v710
        %712 = vdwg.mxu0
        %713 = vmatpush.msra.mxu0 0.0
        %714 = vmatpush.msra.mxu0 0.0
        %715 = vmatpush.msra.mxu0 0.0
        %716 = vmatpush.msra.mxu0 0.0
        %717 = vmatpush.msra.mxu0 0.0
        %718 = vmatpush.msra.mxu0 0.0
        %719 = vmatpush.msra.mxu0 0.0
        %720 = vmatpush.msra.mxu0 0.0
        %721 = vmatpush.msra.mxu0 0.0
        %722 = vmatpush.msra.mxu0 0.0
        %723 = vmatpush.msra.mxu0 0.0
        %724 = vmatpush.msra.mxu0 0.0
        %725 = vmatpush.msra.mxu0 0.0
        %726 = vmatpush.msra.mxu0 0.0
        %727 = vmatpush.msra.mxu0 0.0
        %728 = vmatpush.msra.mxu0 %v626
        %729 = vmatmul.f32.gmra.mxu0 %v616
        %v730 = vpop.f32.mrf.mxu0
        %v731 = vadd.f32 0.0, %v730
        %732 = vdwg.mxu0
        %733 = vmatpush.msra.mxu0 0.0
        %734 = vmatpush.msra.mxu0 0.0
        %735 = vmatpush.msra.mxu0 0.0
        %736 = vmatpush.msra.mxu0 0.0
        %737 = vmatpush.msra.mxu0 0.0
        %738 = vmatpush.msra.mxu0 0.0
        %739 = vmatpush.msra.mxu0 0.0
        %740 = vmatpush.msra.mxu0 0.0
        %741 = vmatpush.msra.mxu0 0.0
        %742 = vmatpush.msra.mxu0 0.0
        %743 = vmatpush.msra.mxu0 0.0
        %744 = vmatpush.msra.mxu0 0.0
        %745 = vmatpush.msra.mxu0 0.0
        %746 = vmatpush.msra.mxu0 0.0
        %747 = vmatpush.msra.mxu0 0.0
        %748 = vmatpush.msra.mxu0 %v629
        %749 = vmatmul.f32.gmra.mxu0 %v616
        %v750 = vpop.f32.mrf.mxu0
        %v751 = vadd.f32 0.0, %v750
        %752 = vdwg.mxu0
        %753 = vmatpush.msra.mxu0 0.0
        %754 = vmatpush.msra.mxu0 0.0
        %755 = vmatpush.msra.mxu0 0.0
        %756 = vmatpush.msra.mxu0 0.0
        %757 = vmatpush.msra.mxu0 0.0
        %758 = vmatpush.msra.mxu0 0.0
        %759 = vmatpush.msra.mxu0 0.0
        %760 = vmatpush.msra.mxu0 0.0
        %761 = vmatpush.msra.mxu0 0.0
        %762 = vmatpush.msra.mxu0 0.0
        %763 = vmatpush.msra.mxu0 0.0
        %764 = vmatpush.msra.mxu0 0.0
        %765 = vmatpush.msra.mxu0 0.0
        %766 = vmatpush.msra.mxu0 0.0
        %767 = vmatpush.msra.mxu0 0.0
        %768 = vmatpush.msra.mxu0 %v632
        %769 = vmatmul.f32.gmra.mxu0 %v616
        %v770 = vpop.f32.mrf.mxu0
        %v771 = vadd.f32 0.0, %v770
        %772 = vdwg.mxu0
        %773 = vmatpush.msra.mxu0 0.0
        %774 = vmatpush.msra.mxu0 0.0
        %775 = vmatpush.msra.mxu0 0.0
        %776 = vmatpush.msra.mxu0 0.0
        %777 = vmatpush.msra.mxu0 0.0
        %778 = vmatpush.msra.mxu0 0.0
        %779 = vmatpush.msra.mxu0 0.0
        %780 = vmatpush.msra.mxu0 0.0
        %781 = vmatpush.msra.mxu0 0.0
        %782 = vmatpush.msra.mxu0 0.0
        %783 = vmatpush.msra.mxu0 0.0
        %784 = vmatpush.msra.mxu0 0.0
        %785 = vmatpush.msra.mxu0 0.0
        %786 = vmatpush.msra.mxu0 0.0
        %787 = vmatpush.msra.mxu0 0.0
        %788 = vmatpush.msra.mxu0 %v635
        %789 = vmatmul.f32.gmra.mxu0 %v616
        %v790 = vpop.f32.mrf.mxu0
        %v791 = vadd.f32 0.0, %v790
        %792 = vdwg.mxu0
        %793 = vmatpush.msra.mxu0 0.0
        %794 = vmatpush.msra.mxu0 0.0
        %795 = vmatpush.msra.mxu0 0.0
        %796 = vmatpush.msra.mxu0 0.0
        %797 = vmatpush.msra.mxu0 0.0
        %798 = vmatpush.msra.mxu0 0.0
        %799 = vmatpush.msra.mxu0 0.0
        %800 = vmatpush.msra.mxu0 0.0
        %801 = vmatpush.msra.mxu0 0.0
        %802 = vmatpush.msra.mxu0 0.0
        %803 = vmatpush.msra.mxu0 0.0
        %804 = vmatpush.msra.mxu0 0.0
        %805 = vmatpush.msra.mxu0 0.0
        %806 = vmatpush.msra.mxu0 0.0
        %807 = vmatpush.msra.mxu0 0.0
        %808 = vmatpush.msra.mxu0 %v638
        %809 = vmatmul.f32.gmra.mxu0 %v616
        %v810 = vpop.f32.mrf.mxu0
        %v811 = vadd.f32 0.0, %v810
        %812 = vdwg.mxu0
        %813 = vmatpush.msra.mxu0 0.0
        %814 = vmatpush.msra.mxu0 0.0
        %815 = vmatpush.msra.mxu0 0.0
        %816 = vmatpush.msra.mxu0 0.0
        %817 = vmatpush.msra.mxu0 0.0
        %818 = vmatpush.msra.mxu0 0.0
        %819 = vmatpush.msra.mxu0 0.0
        %820 = vmatpush.msra.mxu0 0.0
        %821 = vmatpush.msra.mxu0 0.0
        %822 = vmatpush.msra.mxu0 0.0
        %823 = vmatpush.msra.mxu0 0.0
        %824 = vmatpush.msra.mxu0 0.0
        %825 = vmatpush.msra.mxu0 0.0
        %826 = vmatpush.msra.mxu0 0.0
        %827 = vmatpush.msra.mxu0 0.0
        %828 = vmatpush.msra.mxu0 %v641
        %829 = vmatmul.f32.gmra.mxu0 %v616
        %v830 = vpop.f32.mrf.mxu0
        %v831 = vadd.f32 0.0, %v830
        %832 = vdwg.mxu0
        %833 = vmatpush.msra.mxu0 0.0
        %834 = vmatpush.msra.mxu0 0.0
        %835 = vmatpush.msra.mxu0 0.0
        %836 = vmatpush.msra.mxu0 0.0
        %837 = vmatpush.msra.mxu0 0.0
        %838 = vmatpush.msra.mxu0 0.0
        %839 = vmatpush.msra.mxu0 0.0
        %840 = vmatpush.msra.mxu0 0.0
        %841 = vmatpush.msra.mxu0 0.0
        %842 = vmatpush.msra.mxu0 0.0
        %843 = vmatpush.msra.mxu0 0.0
        %844 = vmatpush.msra.mxu0 0.0
        %845 = vmatpush.msra.mxu0 0.0
        %846 = vmatpush.msra.mxu0 0.0
        %847 = vmatpush.msra.mxu0 0.0
        %848 = vmatpush.msra.mxu0 %v644
        %849 = vmatmul.f32.gmra.mxu0 %v616
        %v850 = vpop.f32.mrf.mxu0
        %v851 = vadd.f32 0.0, %v850
        %852 = vdwg.mxu0
        %853 = vmatpush.msra.mxu0 0.0
        %854 = vmatpush.msra.mxu0 0.0
        %855 = vmatpush.msra.mxu0 0.0
        %856 = vmatpush.msra.mxu0 0.0
        %857 = vmatpush.msra.mxu0 0.0
        %858 = vmatpush.msra.mxu0 0.0
        %859 = vmatpush.msra.mxu0 0.0
        %860 = vmatpush.msra.mxu0 0.0
        %861 = vmatpush.msra.mxu0 0.0
        %862 = vmatpush.msra.mxu0 0.0
        %863 = vmatpush.msra.mxu0 0.0
        %864 = vmatpush.msra.mxu0 0.0
        %865 = vmatpush.msra.mxu0 0.0
        %866 = vmatpush.msra.mxu0 0.0
        %867 = vmatpush.msra.mxu0 0.0
        %868 = vmatpush.msra.mxu0 %v647
        %869 = vmatmul.f32.gmra.mxu0 %v616
        %v870 = vpop.f32.mrf.mxu0
        %v871 = vadd.f32 0.0, %v870
        %872 = vdwg.mxu0
        %873 = vmatpush.msra.mxu0 0.0
        %874 = vmatpush.msra.mxu0 0.0
        %875 = vmatpush.msra.mxu0 0.0
        %876 = vmatpush.msra.mxu0 0.0
        %877 = vmatpush.msra.mxu0 0.0
        %878 = vmatpush.msra.mxu0 0.0
        %879 = vmatpush.msra.mxu0 0.0
        %880 = vmatpush.msra.mxu0 0.0
        %881 = vmatpush.msra.mxu0 0.0
        %882 = vmatpush.msra.mxu0 0.0
        %883 = vmatpush.msra.mxu0 0.0
        %884 = vmatpush.msra.mxu0 0.0
        %885 = vmatpush.msra.mxu0 0.0
        %886 = vmatpush.msra.mxu0 0.0
        %887 = vmatpush.msra.mxu0 0.0
        %888 = vmatpush.msra.mxu0 %v650
        %889 = vmatmul.f32.gmra.mxu0 %v616
        %v890 = vpop.f32.mrf.mxu0
        %v891 = vadd.f32 0.0, %v890
        %892 = vdwg.mxu0
        %893 = vmatpush.msra.mxu0 0.0
        %894 = vmatpush.msra.mxu0 0.0
        %895 = vmatpush.msra.mxu0 0.0
        %896 = vmatpush.msra.mxu0 0.0
        %897 = vmatpush.msra.mxu0 0.0
        %898 = vmatpush.msra.mxu0 0.0
        %899 = vmatpush.msra.mxu0 0.0
        %900 = vmatpush.msra.mxu0 0.0
        %901 = vmatpush.msra.mxu0 0.0
        %902 = vmatpush.msra.mxu0 0.0
        %903 = vmatpush.msra.mxu0 0.0
        %904 = vmatpush.msra.mxu0 0.0
        %905 = vmatpush.msra.mxu0 0.0
        %906 = vmatpush.msra.mxu0 0.0
        %907 = vmatpush.msra.mxu0 0.0
        %908 = vmatpush.msra.mxu0 %v653
        %909 = vmatmul.f32.gmra.mxu0 %v616
        %v910 = vpop.f32.mrf.mxu0
        %v911 = vadd.f32 0.0, %v910
        %912 = vdwg.mxu0
        %913 = vmatpush.msra.mxu0 0.0
        %914 = vmatpush.msra.mxu0 0.0
        %915 = vmatpush.msra.mxu0 0.0
        %916 = vmatpush.msra.mxu0 0.0
        %917 = vmatpush.msra.mxu0 0.0
        %918 = vmatpush.msra.mxu0 0.0
        %919 = vmatpush.msra.mxu0 0.0
        %920 = vmatpush.msra.mxu0 0.0
        %921 = vmatpush.msra.mxu0 0.0
        %922 = vmatpush.msra.mxu0 0.0
        %923 = vmatpush.msra.mxu0 0.0
        %924 = vmatpush.msra.mxu0 0.0
        %925 = vmatpush.msra.mxu0 0.0
        %926 = vmatpush.msra.mxu0 0.0
        %927 = vmatpush.msra.mxu0 0.0
        %928 = vmatpush.msra.mxu0 %v656
        %929 = vmatmul.f32.gmra.mxu0 %v616
        %v930 = vpop.f32.mrf.mxu0
        %v931 = vadd.f32 0.0, %v930
        %932 = vdwg.mxu0
        %933 = vmatpush.msra.mxu0 0.0
        %934 = vmatpush.msra.mxu0 0.0
        %935 = vmatpush.msra.mxu0 0.0
        %936 = vmatpush.msra.mxu0 0.0
        %937 = vmatpush.msra.mxu0 0.0
        %938 = vmatpush.msra.mxu0 0.0
        %939 = vmatpush.msra.mxu0 0.0
        %940 = vmatpush.msra.mxu0 0.0
        %941 = vmatpush.msra.mxu0 0.0
        %942 = vmatpush.msra.mxu0 0.0
        %943 = vmatpush.msra.mxu0 0.0
        %944 = vmatpush.msra.mxu0 0.0
        %945 = vmatpush.msra.mxu0 0.0
        %946 = vmatpush.msra.mxu0 0.0
        %947 = vmatpush.msra.mxu0 0.0
        %948 = vmatpush.msra.mxu0 %v659
        %949 = vmatmul.f32.gmra.mxu0 %v616
        %v950 = vpop.f32.mrf.mxu0
        %v951 = vadd.f32 0.0, %v950
        %952 = vdwg.mxu0
        %953 = vmatpush.msra.mxu0 0.0
        %954 = vmatpush.msra.mxu0 0.0
        %955 = vmatpush.msra.mxu0 0.0
        %956 = vmatpush.msra.mxu0 0.0
        %957 = vmatpush.msra.mxu0 0.0
        %958 = vmatpush.msra.mxu0 0.0
        %959 = vmatpush.msra.mxu0 0.0
        %960 = vmatpush.msra.mxu0 0.0
        %961 = vmatpush.msra.mxu0 0.0
        %962 = vmatpush.msra.mxu0 0.0
        %963 = vmatpush.msra.mxu0 0.0
        %964 = vmatpush.msra.mxu0 0.0
        %965 = vmatpush.msra.mxu0 0.0
        %966 = vmatpush.msra.mxu0 0.0
        %967 = vmatpush.msra.mxu0 0.0
        %968 = vmatpush.msra.mxu0 %v662
        %969 = vmatmul.f32.gmra.mxu0 %v616
        %v970 = vpop.f32.mrf.mxu0
        %v971 = vadd.f32 0.0, %v970
        %972 = vdwg.mxu0
        %973 = vmatpush.msra.mxu0 0.0
        %974 = vmatpush.msra.mxu0 0.0
        %975 = vmatpush.msra.mxu0 0.0
        %976 = vmatpush.msra.mxu0 0.0
        %977 = vmatpush.msra.mxu0 0.0
        %978 = vmatpush.msra.mxu0 0.0
        %979 = vmatpush.msra.mxu0 0.0
        %980 = vmatpush.msra.mxu0 0.0
        %981 = vmatpush.msra.mxu0 0.0
        %982 = vmatpush.msra.mxu0 0.0
        %983 = vmatpush.msra.mxu0 0.0
        %984 = vmatpush.msra.mxu0 0.0
        %985 = vmatpush.msra.mxu0 0.0
        %986 = vmatpush.msra.mxu0 0.0
        %987 = vmatpush.msra.mxu0 0.0
        %988 = vmatpush.msra.mxu0 %v665
        %989 = vmatmul.f32.gmra.mxu0 %v616
        %v990 = vpop.f32.mrf.mxu0
        %v991 = vadd.f32 0.0, %v990
        %992 = vdwg.mxu0
        %993 = vmatpush.msra.mxu0 0.0
        %994 = vmatpush.msra.mxu0 0.0
        %995 = vmatpush.msra.mxu0 0.0
        %996 = vmatpush.msra.mxu0 0.0
        %997 = vmatpush.msra.mxu0 0.0
        %998 = vmatpush.msra.mxu0 0.0
        %999 = vmatpush.msra.mxu0 0.0
        %1000 = vmatpush.msra.mxu0 0.0
        %1001 = vmatpush.msra.mxu0 0.0
        %1002 = vmatpush.msra.mxu0 0.0
        %1003 = vmatpush.msra.mxu0 0.0
        %1004 = vmatpush.msra.mxu0 0.0
        %1005 = vmatpush.msra.mxu0 0.0
        %1006 = vmatpush.msra.mxu0 0.0
        %1007 = vmatpush.msra.mxu0 0.0
        %1008 = vmatpush.msra.mxu0 %v668
        %1009 = vmatmul.f32.gmra.mxu0 %v616
        %v1010 = vpop.f32.mrf.mxu0
        %v1011 = vadd.f32 0.0, %v1010
        %1012 = vdwg.mxu0
        %1013 = vmatpush.msra.mxu0 0.0
        %1014 = vmatpush.msra.mxu0 0.0
        %1015 = vmatpush.msra.mxu0 0.0
        %1016 = vmatpush.msra.mxu0 0.0
        %1017 = vmatpush.msra.mxu0 0.0
        %1018 = vmatpush.msra.mxu0 0.0
        %1019 = vmatpush.msra.mxu0 0.0
        %1020 = vmatpush.msra.mxu0 0.0
        %1021 = vmatpush.msra.mxu0 0.0
        %1022 = vmatpush.msra.mxu0 0.0
        %1023 = vmatpush.msra.mxu0 0.0
        %1024 = vmatpush.msra.mxu0 0.0
        %1025 = vmatpush.msra.mxu0 0.0
        %1026 = vmatpush.msra.mxu0 0.0
        %1027 = vmatpush.msra.mxu0 0.0
        %1028 = vmatpush.msra.mxu0 %v671
        %1029 = vmatmul.f32.gmra.mxu0 %v616
        %v1030 = vpop.f32.mrf.mxu0
        %v1031 = vadd.f32 0.0, %v1030
        %1032 = vdwg.mxu0
        %v1033 = vadd.f32 %v349, %v691
        %v1034 = vadd.f32 %v349, %v711
        %v1035 = vadd.f32 %v349, %v731
        %v1036 = vadd.f32 %v349, %v751
        %v1037 = vadd.f32 %v349, %v771
        %v1038 = vadd.f32 %v349, %v791
        %v1039 = vadd.f32 %v349, %v811
        %v1040 = vadd.f32 %v349, %v831
        %v1041 = vadd.f32 %v349, %v851
        %v1042 = vadd.f32 %v349, %v871
        %v1043 = vadd.f32 %v349, %v891
        %v1044 = vadd.f32 %v349, %v911
        %v1045 = vadd.f32 %v349, %v931
        %v1046 = vadd.f32 %v349, %v951
        %v1047 = vadd.f32 %v349, %v971
        %v1048 = vadd.f32 %v349, %v991
        %v1049 = vadd.f32 %v349, %v1011
        %v1050 = vadd.f32 %v349, %v1031
        %1051 = vst [vmem:[#allocation1] ss:$2 sm:$0xff] %v314
        %s1052 = scalar_lea.vmem [#allocation1], 16
        %1053 = vst [vmem:[%s1052] ss:$2 sm:$0xff] %v315
        %s1054 = scalar_lea.vmem [#allocation1], 32
        %1055 = vst [vmem:[%s1054] ss:$2 sm:$0xff] %v316
        %s1056 = scalar_lea.vmem [#allocation1], 48
        %1057 = vst [vmem:[%s1056] ss:$2 sm:$0xff] %v317
        %v1058 = vld.sshfl [vmem:[#allocation1] sm:$0xff pattern:$0x75316420]
        %v1059 = vld.sshfl [vmem:[#allocation1 + $0x8] sm:$0xff pattern:$0x75316420]
        %v1060 = vld.sshfl [vmem:[#allocation1 + $0x10] sm:$0xff pattern:$0x75316420]
        %v1061 = vld.sshfl [vmem:[#allocation1 + $0x18] sm:$0xff pattern:$0x75316420]
        %v1062 = vld.sshfl [vmem:[#allocation1 + $0x20] sm:$0xff pattern:$0x75316420]
        %v1063 = vld.sshfl [vmem:[#allocation1 + $0x28] sm:$0xff pattern:$0x75316420]
        %v1064 = vld.sshfl [vmem:[#allocation1 + $0x30] sm:$0xff pattern:$0x75316420]
        %v1065 = vld.sshfl [vmem:[#allocation1 + $0x38] sm:$0xff pattern:$0x75316420]
        %1066 = vst [vmem:[#allocation1] ss:$2 sm:$0xff] %v318
        %1067 = vst [vmem:[%s1052] ss:$2 sm:$0xff] %v319
        %1068 = vst [vmem:[%s1054] ss:$2 sm:$0xff] %v320
        %1069 = vst [vmem:[%s1056] ss:$2 sm:$0xff] %v321
        %v1070 = vld.sshfl [vmem:[#allocation1] sm:$0xff pattern:$0x75316420]
        %v1071 = vld.sshfl [vmem:[#allocation1 + $0x8] sm:$0xff pattern:$0x75316420]
        %v1072 = vld.sshfl [vmem:[#allocation1 + $0x10] sm:$0xff pattern:$0x75316420]
        %v1073 = vld.sshfl [vmem:[#allocation1 + $0x18] sm:$0xff pattern:$0x75316420]
        %v1074 = vld.sshfl [vmem:[#allocation1 + $0x20] sm:$0xff pattern:$0x75316420]
        %v1075 = vld.sshfl [vmem:[#allocation1 + $0x28] sm:$0xff pattern:$0x75316420]
        %v1076 = vld.sshfl [vmem:[#allocation1 + $0x30] sm:$0xff pattern:$0x75316420]
        %v1077 = vld.sshfl [vmem:[#allocation1 + $0x38] sm:$0xff pattern:$0x75316420]
        %1078 = vst [vmem:[#allocation1] ss:$2 sm:$0xff] %v322
        %v1079 = vld.sshfl [vmem:[#allocation1] sm:$0xff pattern:$0x75316420]
        %v1080 = vld.sshfl [vmem:[#allocation1 + $0x8] sm:$0xff pattern:$0x75316420]
        %1099 = vrot.lane.b32.xlu0 %v1058, 48
        %v1100 = vpop.permute.xlu0 %1099
        %1101 = vrot.lane.b32.xlu0 %v1059, 48
        %v1102 = vpop.permute.xlu0 %1101
        %1103 = vrot.lane.b32.xlu0 %v1060, 48
        %v1104 = vpop.permute.xlu0 %1103
        %1105 = vrot.lane.b32.xlu0 %v1061, 48
        %v1106 = vpop.permute.xlu0 %1105
        %1107 = vrot.lane.b32.xlu0 %v1062, 48
        %v1108 = vpop.permute.xlu0 %1107
        %1109 = vrot.lane.b32.xlu0 %v1063, 48
        %v1110 = vpop.permute.xlu0 %1109
        %1111 = vrot.lane.b32.xlu0 %v1064, 48
        %v1112 = vpop.permute.xlu0 %1111
        %1113 = vrot.lane.b32.xlu0 %v1065, 48
        %v1114 = vpop.permute.xlu0 %1113
        %1115 = vrot.lane.b32.xlu0 %v1070, 48
        %v1116 = vpop.permute.xlu0 %1115
        %1117 = vrot.lane.b32.xlu0 %v1071, 48
        %v1118 = vpop.permute.xlu0 %1117
        %1119 = vrot.lane.b32.xlu0 %v1072, 48
        %v1120 = vpop.permute.xlu0 %1119
        %1121 = vrot.lane.b32.xlu0 %v1073, 48
        %v1122 = vpop.permute.xlu0 %1121
        %1123 = vrot.lane.b32.xlu0 %v1074, 48
        %v1124 = vpop.permute.xlu0 %1123
        %1125 = vrot.lane.b32.xlu0 %v1075, 48
        %v1126 = vpop.permute.xlu0 %1125
        %1127 = vrot.lane.b32.xlu0 %v1076, 48
        %v1128 = vpop.permute.xlu0 %1127
        %1129 = vrot.lane.b32.xlu0 %v1077, 48
        %v1130 = vpop.permute.xlu0 %1129
        %1131 = vrot.lane.b32.xlu0 %v1079, 48
        %v1132 = vpop.permute.xlu0 %1131
        %1133 = vrot.lane.b32.xlu0 %v1080, 48
        %v1134 = vpop.permute.xlu0 %1133
        %vm1135 = vcmp.lt.s32.totalorder %v327, 48
        %v1136 = vsel %vm1135, %v1132, %v1134
        %v1137 = vsel %vm1135, %v1130, %v1132
        %v1138 = vsel %vm1135, %v1128, %v1130
        %v1139 = vsel %vm1135, %v1126, %v1128
        %v1140 = vsel %vm1135, %v1124, %v1126
        %v1141 = vsel %vm1135, %v1122, %v1124
        %v1142 = vsel %vm1135, %v1120, %v1122
        %v1143 = vsel %vm1135, %v1118, %v1120
        %v1144 = vsel %vm1135, %v1116, %v1118
        %v1145 = vsel %vm1135, %v1114, %v1116
        %v1146 = vsel %vm1135, %v1112, %v1114
        %v1147 = vsel %vm1135, %v1110, %v1112
        %v1148 = vsel %vm1135, %v1108, %v1110
        %v1149 = vsel %vm1135, %v1106, %v1108
        %v1150 = vsel %vm1135, %v1104, %v1106
        %v1151 = vsel %vm1135, %v1102, %v1104
        %v1152 = vsel %vm1135, %v1100, %v1102
        %v1153 = vsel %vm1135, %v1134, %v1100
        %v1154 = vsel %vm463, 1, 0
        %v1155 = vsel %vm464, 1, 0
        %v1156 = vsel %vm465, 1, 0
        %v1157 = vsel %vm466, 1, 0
        %v1158 = vsel %vm467, 1, 0
        %v1159 = vsel %vm468, 1, 0
        %v1160 = vsel %vm469, 1, 0
        %v1161 = vsel %vm470, 1, 0
        %v1162 = vsel %vm471, 1, 0
        %v1163 = vsel %vm472, 1, 0
        %v1164 = vsel %vm473, 1, 0
        %v1165 = vsel %vm474, 1, 0
        %v1166 = vsel %vm475, 1, 0
        %v1167 = vsel %vm476, 1, 0
        %v1168 = vsel %vm477, 1, 0
        %v1169 = vsel %vm478, 1, 0
        %v1170 = vsel %vm479, 1, 0
        %v1171 = vsel %vm480, 1, 0
        %vm1172 = vcmp.eq.s32.totalorder %v1154, 1
        %vm1173 = vcmp.eq.s32.totalorder %v1155, 1
        %vm1174 = vcmp.eq.s32.totalorder %v1156, 1
        %vm1175 = vcmp.eq.s32.totalorder %v1157, 1
        %vm1176 = vcmp.eq.s32.totalorder %v1158, 1
        %vm1177 = vcmp.eq.s32.totalorder %v1159, 1
        %vm1178 = vcmp.eq.s32.totalorder %v1160, 1
        %vm1179 = vcmp.eq.s32.totalorder %v1161, 1
        %vm1180 = vcmp.eq.s32.totalorder %v1162, 1
        %vm1181 = vcmp.eq.s32.totalorder %v1163, 1
        %vm1182 = vcmp.eq.s32.totalorder %v1164, 1
        %vm1183 = vcmp.eq.s32.totalorder %v1165, 1
        %vm1184 = vcmp.eq.s32.totalorder %v1166, 1
        %vm1185 = vcmp.eq.s32.totalorder %v1167, 1
        %vm1186 = vcmp.eq.s32.totalorder %v1168, 1
        %vm1187 = vcmp.eq.s32.totalorder %v1169, 1
        %vm1188 = vcmp.eq.s32.totalorder %v1170, 1
        %vm1189 = vcmp.eq.s32.totalorder %v1171, 1
        %v1190 = vsel %vm1172, %v1153, 0.0
        %v1191 = vsel %vm1173, %v1152, 0.0
        %v1192 = vsel %vm1174, %v1151, 0.0
        %v1193 = vsel %vm1175, %v1150, 0.0
        %v1194 = vsel %vm1176, %v1149, 0.0
        %v1195 = vsel %vm1177, %v1148, 0.0
        %v1196 = vsel %vm1178, %v1147, 0.0
        %v1197 = vsel %vm1179, %v1146, 0.0
        %v1198 = vsel %vm1180, %v1145, 0.0
        %v1199 = vsel %vm1181, %v1144, 0.0
        %v1200 = vsel %vm1182, %v1143, 0.0
        %v1201 = vsel %vm1183, %v1142, 0.0
        %v1202 = vsel %vm1184, %v1141, 0.0
        %v1203 = vsel %vm1185, %v1140, 0.0
        %v1204 = vsel %vm1186, %v1139, 0.0
        %v1205 = vsel %vm1187, %v1138, 0.0
        %v1206 = vsel %vm1188, %v1137, 0.0
        %v1207 = vsel %vm1189, %v1136, 0.0
        %s1208 = scalar_lea.vmem %s273, 8 [#allocation2]
        %v1209 = vld [vmem:[%s1208] sm:$0xff]
        %v1211 = vsel %vm614, %v1209, 0
        %v1214 = vsel %vm618, %v1190, 0
        %v1217 = vsel %vm618, %v1191, 0
        %v1220 = vsel %vm618, %v1192, 0
        %v1223 = vsel %vm618, %v1193, 0
        %v1226 = vsel %vm618, %v1194, 0
        %v1229 = vsel %vm618, %v1195, 0
        %v1232 = vsel %vm618, %v1196, 0
        %v1235 = vsel %vm618, %v1197, 0
        %v1238 = vsel %vm618, %v1198, 0
        %v1241 = vsel %vm618, %v1199, 0
        %v1244 = vsel %vm618, %v1200, 0
        %v1247 = vsel %vm618, %v1201, 0
        %v1250 = vsel %vm618, %v1202, 0
        %v1253 = vsel %vm618, %v1203, 0
        %v1256 = vsel %vm618, %v1204, 0
        %v1259 = vsel %vm618, %v1205, 0
        %v1262 = vsel %vm618, %v1206, 0
        %v1265 = vsel %vm618, %v1207, 0
        %1267 = vmatpush.msra.mxu0 0.0
        %1268 = vmatpush.msra.mxu0 0.0
        %1269 = vmatpush.msra.mxu0 0.0
        %1270 = vmatpush.msra.mxu0 0.0
        %1271 = vmatpush.msra.mxu0 0.0
        %1272 = vmatpush.msra.mxu0 0.0
        %1273 = vmatpush.msra.mxu0 0.0
        %1274 = vmatpush.msra.mxu0 0.0
        %1275 = vmatpush.msra.mxu0 0.0
        %1276 = vmatpush.msra.mxu0 0.0
        %1277 = vmatpush.msra.mxu0 0.0
        %1278 = vmatpush.msra.mxu0 0.0
        %1279 = vmatpush.msra.mxu0 0.0
        %1280 = vmatpush.msra.mxu0 0.0
        %1281 = vmatpush.msra.mxu0 0.0
        %1282 = vmatpush.msra.mxu0 %v1214
        %1283 = vmatmul.f32.gmra.mxu0 %v1211
        %v1284 = vpop.f32.mrf.mxu0
        %v1285 = vadd.f32 0.0, %v1284
        %1286 = vdwg.mxu0
        %1287 = vmatpush.msra.mxu0 0.0
        %1288 = vmatpush.msra.mxu0 0.0
        %1289 = vmatpush.msra.mxu0 0.0
        %1290 = vmatpush.msra.mxu0 0.0
        %1291 = vmatpush.msra.mxu0 0.0
        %1292 = vmatpush.msra.mxu0 0.0
        %1293 = vmatpush.msra.mxu0 0.0
        %1294 = vmatpush.msra.mxu0 0.0
        %1295 = vmatpush.msra.mxu0 0.0
        %1296 = vmatpush.msra.mxu0 0.0
        %1297 = vmatpush.msra.mxu0 0.0
        %1298 = vmatpush.msra.mxu0 0.0
        %1299 = vmatpush.msra.mxu0 0.0
        %1300 = vmatpush.msra.mxu0 0.0
        %1301 = vmatpush.msra.mxu0 0.0
        %1302 = vmatpush.msra.mxu0 %v1217
        %1303 = vmatmul.f32.gmra.mxu0 %v1211
        %v1304 = vpop.f32.mrf.mxu0
        %v1305 = vadd.f32 0.0, %v1304
        %1306 = vdwg.mxu0
        %1307 = vmatpush.msra.mxu0 0.0
        %1308 = vmatpush.msra.mxu0 0.0
        %1309 = vmatpush.msra.mxu0 0.0
        %1310 = vmatpush.msra.mxu0 0.0
        %1311 = vmatpush.msra.mxu0 0.0
        %1312 = vmatpush.msra.mxu0 0.0
        %1313 = vmatpush.msra.mxu0 0.0
        %1314 = vmatpush.msra.mxu0 0.0
        %1315 = vmatpush.msra.mxu0 0.0
        %1316 = vmatpush.msra.mxu0 0.0
        %1317 = vmatpush.msra.mxu0 0.0
        %1318 = vmatpush.msra.mxu0 0.0
        %1319 = vmatpush.msra.mxu0 0.0
        %1320 = vmatpush.msra.mxu0 0.0
        %1321 = vmatpush.msra.mxu0 0.0
        %1322 = vmatpush.msra.mxu0 %v1220
        %1323 = vmatmul.f32.gmra.mxu0 %v1211
        %v1324 = vpop.f32.mrf.mxu0
        %v1325 = vadd.f32 0.0, %v1324
        %1326 = vdwg.mxu0
        %1327 = vmatpush.msra.mxu0 0.0
        %1328 = vmatpush.msra.mxu0 0.0
        %1329 = vmatpush.msra.mxu0 0.0
        %1330 = vmatpush.msra.mxu0 0.0
        %1331 = vmatpush.msra.mxu0 0.0
        %1332 = vmatpush.msra.mxu0 0.0
        %1333 = vmatpush.msra.mxu0 0.0
        %1334 = vmatpush.msra.mxu0 0.0
        %1335 = vmatpush.msra.mxu0 0.0
        %1336 = vmatpush.msra.mxu0 0.0
        %1337 = vmatpush.msra.mxu0 0.0
        %1338 = vmatpush.msra.mxu0 0.0
        %1339 = vmatpush.msra.mxu0 0.0
        %1340 = vmatpush.msra.mxu0 0.0
        %1341 = vmatpush.msra.mxu0 0.0
        %1342 = vmatpush.msra.mxu0 %v1223
        %1343 = vmatmul.f32.gmra.mxu0 %v1211
        %v1344 = vpop.f32.mrf.mxu0
        %v1345 = vadd.f32 0.0, %v1344
        %1346 = vdwg.mxu0
        %1347 = vmatpush.msra.mxu0 0.0
        %1348 = vmatpush.msra.mxu0 0.0
        %1349 = vmatpush.msra.mxu0 0.0
        %1350 = vmatpush.msra.mxu0 0.0
        %1351 = vmatpush.msra.mxu0 0.0
        %1352 = vmatpush.msra.mxu0 0.0
        %1353 = vmatpush.msra.mxu0 0.0
        %1354 = vmatpush.msra.mxu0 0.0
        %1355 = vmatpush.msra.mxu0 0.0
        %1356 = vmatpush.msra.mxu0 0.0
        %1357 = vmatpush.msra.mxu0 0.0
        %1358 = vmatpush.msra.mxu0 0.0
        %1359 = vmatpush.msra.mxu0 0.0
        %1360 = vmatpush.msra.mxu0 0.0
        %1361 = vmatpush.msra.mxu0 0.0
        %1362 = vmatpush.msra.mxu0 %v1226
        %1363 = vmatmul.f32.gmra.mxu0 %v1211
        %v1364 = vpop.f32.mrf.mxu0
        %v1365 = vadd.f32 0.0, %v1364
        %1366 = vdwg.mxu0
        %1367 = vmatpush.msra.mxu0 0.0
        %1368 = vmatpush.msra.mxu0 0.0
        %1369 = vmatpush.msra.mxu0 0.0
        %1370 = vmatpush.msra.mxu0 0.0
        %1371 = vmatpush.msra.mxu0 0.0
        %1372 = vmatpush.msra.mxu0 0.0
        %1373 = vmatpush.msra.mxu0 0.0
        %1374 = vmatpush.msra.mxu0 0.0
        %1375 = vmatpush.msra.mxu0 0.0
        %1376 = vmatpush.msra.mxu0 0.0
        %1377 = vmatpush.msra.mxu0 0.0
        %1378 = vmatpush.msra.mxu0 0.0
        %1379 = vmatpush.msra.mxu0 0.0
        %1380 = vmatpush.msra.mxu0 0.0
        %1381 = vmatpush.msra.mxu0 0.0
        %1382 = vmatpush.msra.mxu0 %v1229
        %1383 = vmatmul.f32.gmra.mxu0 %v1211
        %v1384 = vpop.f32.mrf.mxu0
        %v1385 = vadd.f32 0.0, %v1384
        %1386 = vdwg.mxu0
        %1387 = vmatpush.msra.mxu0 0.0
        %1388 = vmatpush.msra.mxu0 0.0
        %1389 = vmatpush.msra.mxu0 0.0
        %1390 = vmatpush.msra.mxu0 0.0
        %1391 = vmatpush.msra.mxu0 0.0
        %1392 = vmatpush.msra.mxu0 0.0
        %1393 = vmatpush.msra.mxu0 0.0
        %1394 = vmatpush.msra.mxu0 0.0
        %1395 = vmatpush.msra.mxu0 0.0
        %1396 = vmatpush.msra.mxu0 0.0
        %1397 = vmatpush.msra.mxu0 0.0
        %1398 = vmatpush.msra.mxu0 0.0
        %1399 = vmatpush.msra.mxu0 0.0
        %1400 = vmatpush.msra.mxu0 0.0
        %1401 = vmatpush.msra.mxu0 0.0
        %1402 = vmatpush.msra.mxu0 %v1232
        %1403 = vmatmul.f32.gmra.mxu0 %v1211
        %v1404 = vpop.f32.mrf.mxu0
        %v1405 = vadd.f32 0.0, %v1404
        %1406 = vdwg.mxu0
        %1407 = vmatpush.msra.mxu0 0.0
        %1408 = vmatpush.msra.mxu0 0.0
        %1409 = vmatpush.msra.mxu0 0.0
        %1410 = vmatpush.msra.mxu0 0.0
        %1411 = vmatpush.msra.mxu0 0.0
        %1412 = vmatpush.msra.mxu0 0.0
        %1413 = vmatpush.msra.mxu0 0.0
        %1414 = vmatpush.msra.mxu0 0.0
        %1415 = vmatpush.msra.mxu0 0.0
        %1416 = vmatpush.msra.mxu0 0.0
        %1417 = vmatpush.msra.mxu0 0.0
        %1418 = vmatpush.msra.mxu0 0.0
        %1419 = vmatpush.msra.mxu0 0.0
        %1420 = vmatpush.msra.mxu0 0.0
        %1421 = vmatpush.msra.mxu0 0.0
        %1422 = vmatpush.msra.mxu0 %v1235
        %1423 = vmatmul.f32.gmra.mxu0 %v1211
        %v1424 = vpop.f32.mrf.mxu0
        %v1425 = vadd.f32 0.0, %v1424
        %1426 = vdwg.mxu0
        %1427 = vmatpush.msra.mxu0 0.0
        %1428 = vmatpush.msra.mxu0 0.0
        %1429 = vmatpush.msra.mxu0 0.0
        %1430 = vmatpush.msra.mxu0 0.0
        %1431 = vmatpush.msra.mxu0 0.0
        %1432 = vmatpush.msra.mxu0 0.0
        %1433 = vmatpush.msra.mxu0 0.0
        %1434 = vmatpush.msra.mxu0 0.0
        %1435 = vmatpush.msra.mxu0 0.0
        %1436 = vmatpush.msra.mxu0 0.0
        %1437 = vmatpush.msra.mxu0 0.0
        %1438 = vmatpush.msra.mxu0 0.0
        %1439 = vmatpush.msra.mxu0 0.0
        %1440 = vmatpush.msra.mxu0 0.0
        %1441 = vmatpush.msra.mxu0 0.0
        %1442 = vmatpush.msra.mxu0 %v1238
        %1443 = vmatmul.f32.gmra.mxu0 %v1211
        %v1444 = vpop.f32.mrf.mxu0
        %v1445 = vadd.f32 0.0, %v1444
        %1446 = vdwg.mxu0
        %1447 = vmatpush.msra.mxu0 0.0
        %1448 = vmatpush.msra.mxu0 0.0
        %1449 = vmatpush.msra.mxu0 0.0
        %1450 = vmatpush.msra.mxu0 0.0
        %1451 = vmatpush.msra.mxu0 0.0
        %1452 = vmatpush.msra.mxu0 0.0
        %1453 = vmatpush.msra.mxu0 0.0
        %1454 = vmatpush.msra.mxu0 0.0
        %1455 = vmatpush.msra.mxu0 0.0
        %1456 = vmatpush.msra.mxu0 0.0
        %1457 = vmatpush.msra.mxu0 0.0
        %1458 = vmatpush.msra.mxu0 0.0
        %1459 = vmatpush.msra.mxu0 0.0
        %1460 = vmatpush.msra.mxu0 0.0
        %1461 = vmatpush.msra.mxu0 0.0
        %1462 = vmatpush.msra.mxu0 %v1241
        %1463 = vmatmul.f32.gmra.mxu0 %v1211
        %v1464 = vpop.f32.mrf.mxu0
        %v1465 = vadd.f32 0.0, %v1464
        %1466 = vdwg.mxu0
        %1467 = vmatpush.msra.mxu0 0.0
        %1468 = vmatpush.msra.mxu0 0.0
        %1469 = vmatpush.msra.mxu0 0.0
        %1470 = vmatpush.msra.mxu0 0.0
        %1471 = vmatpush.msra.mxu0 0.0
        %1472 = vmatpush.msra.mxu0 0.0
        %1473 = vmatpush.msra.mxu0 0.0
        %1474 = vmatpush.msra.mxu0 0.0
        %1475 = vmatpush.msra.mxu0 0.0
        %1476 = vmatpush.msra.mxu0 0.0
        %1477 = vmatpush.msra.mxu0 0.0
        %1478 = vmatpush.msra.mxu0 0.0
        %1479 = vmatpush.msra.mxu0 0.0
        %1480 = vmatpush.msra.mxu0 0.0
        %1481 = vmatpush.msra.mxu0 0.0
        %1482 = vmatpush.msra.mxu0 %v1244
        %1483 = vmatmul.f32.gmra.mxu0 %v1211
        %v1484 = vpop.f32.mrf.mxu0
        %v1485 = vadd.f32 0.0, %v1484
        %1486 = vdwg.mxu0
        %1487 = vmatpush.msra.mxu0 0.0
        %1488 = vmatpush.msra.mxu0 0.0
        %1489 = vmatpush.msra.mxu0 0.0
        %1490 = vmatpush.msra.mxu0 0.0
        %1491 = vmatpush.msra.mxu0 0.0
        %1492 = vmatpush.msra.mxu0 0.0
        %1493 = vmatpush.msra.mxu0 0.0
        %1494 = vmatpush.msra.mxu0 0.0
        %1495 = vmatpush.msra.mxu0 0.0
        %1496 = vmatpush.msra.mxu0 0.0
        %1497 = vmatpush.msra.mxu0 0.0
        %1498 = vmatpush.msra.mxu0 0.0
        %1499 = vmatpush.msra.mxu0 0.0
        %1500 = vmatpush.msra.mxu0 0.0
        %1501 = vmatpush.msra.mxu0 0.0
        %1502 = vmatpush.msra.mxu0 %v1247
        %1503 = vmatmul.f32.gmra.mxu0 %v1211
        %v1504 = vpop.f32.mrf.mxu0
        %v1505 = vadd.f32 0.0, %v1504
        %1506 = vdwg.mxu0
        %1507 = vmatpush.msra.mxu0 0.0
        %1508 = vmatpush.msra.mxu0 0.0
        %1509 = vmatpush.msra.mxu0 0.0
        %1510 = vmatpush.msra.mxu0 0.0
        %1511 = vmatpush.msra.mxu0 0.0
        %1512 = vmatpush.msra.mxu0 0.0
        %1513 = vmatpush.msra.mxu0 0.0
        %1514 = vmatpush.msra.mxu0 0.0
        %1515 = vmatpush.msra.mxu0 0.0
        %1516 = vmatpush.msra.mxu0 0.0
        %1517 = vmatpush.msra.mxu0 0.0
        %1518 = vmatpush.msra.mxu0 0.0
        %1519 = vmatpush.msra.mxu0 0.0
        %1520 = vmatpush.msra.mxu0 0.0
        %1521 = vmatpush.msra.mxu0 0.0
        %1522 = vmatpush.msra.mxu0 %v1250
        %1523 = vmatmul.f32.gmra.mxu0 %v1211
        %v1524 = vpop.f32.mrf.mxu0
        %v1525 = vadd.f32 0.0, %v1524
        %1526 = vdwg.mxu0
        %1527 = vmatpush.msra.mxu0 0.0
        %1528 = vmatpush.msra.mxu0 0.0
        %1529 = vmatpush.msra.mxu0 0.0
        %1530 = vmatpush.msra.mxu0 0.0
        %1531 = vmatpush.msra.mxu0 0.0
        %1532 = vmatpush.msra.mxu0 0.0
        %1533 = vmatpush.msra.mxu0 0.0
        %1534 = vmatpush.msra.mxu0 0.0
        %1535 = vmatpush.msra.mxu0 0.0
        %1536 = vmatpush.msra.mxu0 0.0
        %1537 = vmatpush.msra.mxu0 0.0
        %1538 = vmatpush.msra.mxu0 0.0
        %1539 = vmatpush.msra.mxu0 0.0
        %1540 = vmatpush.msra.mxu0 0.0
        %1541 = vmatpush.msra.mxu0 0.0
        %1542 = vmatpush.msra.mxu0 %v1253
        %1543 = vmatmul.f32.gmra.mxu0 %v1211
        %v1544 = vpop.f32.mrf.mxu0
        %v1545 = vadd.f32 0.0, %v1544
        %1546 = vdwg.mxu0
        %1547 = vmatpush.msra.mxu0 0.0
        %1548 = vmatpush.msra.mxu0 0.0
        %1549 = vmatpush.msra.mxu0 0.0
        %1550 = vmatpush.msra.mxu0 0.0
        %1551 = vmatpush.msra.mxu0 0.0
        %1552 = vmatpush.msra.mxu0 0.0
        %1553 = vmatpush.msra.mxu0 0.0
        %1554 = vmatpush.msra.mxu0 0.0
        %1555 = vmatpush.msra.mxu0 0.0
        %1556 = vmatpush.msra.mxu0 0.0
        %1557 = vmatpush.msra.mxu0 0.0
        %1558 = vmatpush.msra.mxu0 0.0
        %1559 = vmatpush.msra.mxu0 0.0
        %1560 = vmatpush.msra.mxu0 0.0
        %1561 = vmatpush.msra.mxu0 0.0
        %1562 = vmatpush.msra.mxu0 %v1256
        %1563 = vmatmul.f32.gmra.mxu0 %v1211
        %v1564 = vpop.f32.mrf.mxu0
        %v1565 = vadd.f32 0.0, %v1564
        %1566 = vdwg.mxu0
        %1567 = vmatpush.msra.mxu0 0.0
        %1568 = vmatpush.msra.mxu0 0.0
        %1569 = vmatpush.msra.mxu0 0.0
        %1570 = vmatpush.msra.mxu0 0.0
        %1571 = vmatpush.msra.mxu0 0.0
        %1572 = vmatpush.msra.mxu0 0.0
        %1573 = vmatpush.msra.mxu0 0.0
        %1574 = vmatpush.msra.mxu0 0.0
        %1575 = vmatpush.msra.mxu0 0.0
        %1576 = vmatpush.msra.mxu0 0.0
        %1577 = vmatpush.msra.mxu0 0.0
        %1578 = vmatpush.msra.mxu0 0.0
        %1579 = vmatpush.msra.mxu0 0.0
        %1580 = vmatpush.msra.mxu0 0.0
        %1581 = vmatpush.msra.mxu0 0.0
        %1582 = vmatpush.msra.mxu0 %v1259
        %1583 = vmatmul.f32.gmra.mxu0 %v1211
        %v1584 = vpop.f32.mrf.mxu0
        %v1585 = vadd.f32 0.0, %v1584
        %1586 = vdwg.mxu0
        %1587 = vmatpush.msra.mxu0 0.0
        %1588 = vmatpush.msra.mxu0 0.0
        %1589 = vmatpush.msra.mxu0 0.0
        %1590 = vmatpush.msra.mxu0 0.0
        %1591 = vmatpush.msra.mxu0 0.0
        %1592 = vmatpush.msra.mxu0 0.0
        %1593 = vmatpush.msra.mxu0 0.0
        %1594 = vmatpush.msra.mxu0 0.0
        %1595 = vmatpush.msra.mxu0 0.0
        %1596 = vmatpush.msra.mxu0 0.0
        %1597 = vmatpush.msra.mxu0 0.0
        %1598 = vmatpush.msra.mxu0 0.0
        %1599 = vmatpush.msra.mxu0 0.0
        %1600 = vmatpush.msra.mxu0 0.0
        %1601 = vmatpush.msra.mxu0 0.0
        %1602 = vmatpush.msra.mxu0 %v1262
        %1603 = vmatmul.f32.gmra.mxu0 %v1211
        %v1604 = vpop.f32.mrf.mxu0
        %v1605 = vadd.f32 0.0, %v1604
        %1606 = vdwg.mxu0
        %1607 = vmatpush.msra.mxu0 0.0
        %1608 = vmatpush.msra.mxu0 0.0
        %1609 = vmatpush.msra.mxu0 0.0
        %1610 = vmatpush.msra.mxu0 0.0
        %1611 = vmatpush.msra.mxu0 0.0
        %1612 = vmatpush.msra.mxu0 0.0
        %1613 = vmatpush.msra.mxu0 0.0
        %1614 = vmatpush.msra.mxu0 0.0
        %1615 = vmatpush.msra.mxu0 0.0
        %1616 = vmatpush.msra.mxu0 0.0
        %1617 = vmatpush.msra.mxu0 0.0
        %1618 = vmatpush.msra.mxu0 0.0
        %1619 = vmatpush.msra.mxu0 0.0
        %1620 = vmatpush.msra.mxu0 0.0
        %1621 = vmatpush.msra.mxu0 0.0
        %1622 = vmatpush.msra.mxu0 %v1265
        %1623 = vmatmul.f32.gmra.mxu0 %v1211
        %v1624 = vpop.f32.mrf.mxu0
        %v1625 = vadd.f32 0.0, %v1624
        %1626 = vdwg.mxu0
        %v1627 = vadd.f32 %v1033, %v1285
        %v1628 = vadd.f32 %v1034, %v1305
        %v1629 = vadd.f32 %v1035, %v1325
        %v1630 = vadd.f32 %v1036, %v1345
        %v1631 = vadd.f32 %v1037, %v1365
        %v1632 = vadd.f32 %v1038, %v1385
        %v1633 = vadd.f32 %v1039, %v1405
        %v1634 = vadd.f32 %v1040, %v1425
        %v1635 = vadd.f32 %v1041, %v1445
        %v1636 = vadd.f32 %v1042, %v1465
        %v1637 = vadd.f32 %v1043, %v1485
        %v1638 = vadd.f32 %v1044, %v1505
        %v1639 = vadd.f32 %v1045, %v1525
        %v1640 = vadd.f32 %v1046, %v1545
        %v1641 = vadd.f32 %v1047, %v1565
        %v1642 = vadd.f32 %v1048, %v1585
        %v1643 = vadd.f32 %v1049, %v1605
        %v1644 = vadd.f32 %v1050, %v1625
        %1645 = vst [vmem:[#allocation1] ss:$2 sm:$0xff] %v314
        %s1646 = scalar_lea.vmem [#allocation1], 16
        %1647 = vst [vmem:[%s1646] ss:$2 sm:$0xff] %v315
        %s1648 = scalar_lea.vmem [#allocation1], 32
        %1649 = vst [vmem:[%s1648] ss:$2 sm:$0xff] %v316
        %s1650 = scalar_lea.vmem [#allocation1], 48
        %1651 = vst [vmem:[%s1650] ss:$2 sm:$0xff] %v317
        %v1652 = vld.sshfl [vmem:[#allocation1] sm:$0xff pattern:$0x75316420]
        %v1653 = vld.sshfl [vmem:[#allocation1 + $0x8] sm:$0xff pattern:$0x75316420]
        %v1654 = vld.sshfl [vmem:[#allocation1 + $0x10] sm:$0xff pattern:$0x75316420]
        %v1655 = vld.sshfl [vmem:[#allocation1 + $0x18] sm:$0xff pattern:$0x75316420]
        %v1656 = vld.sshfl [vmem:[#allocation1 + $0x20] sm:$0xff pattern:$0x75316420]
        %v1657 = vld.sshfl [vmem:[#allocation1 + $0x28] sm:$0xff pattern:$0x75316420]
        %v1658 = vld.sshfl [vmem:[#allocation1 + $0x30] sm:$0xff pattern:$0x75316420]
        %v1659 = vld.sshfl [vmem:[#allocation1 + $0x38] sm:$0xff pattern:$0x75316420]
        %1660 = vst [vmem:[#allocation1] ss:$2 sm:$0xff] %v318
        %1661 = vst [vmem:[%s1646] ss:$2 sm:$0xff] %v319
        %1662 = vst [vmem:[%s1648] ss:$2 sm:$0xff] %v320
        %1663 = vst [vmem:[%s1650] ss:$2 sm:$0xff] %v321
        %v1664 = vld.sshfl [vmem:[#allocation1] sm:$0xff pattern:$0x75316420]
        %v1665 = vld.sshfl [vmem:[#allocation1 + $0x8] sm:$0xff pattern:$0x75316420]
        %v1666 = vld.sshfl [vmem:[#allocation1 + $0x10] sm:$0xff pattern:$0x75316420]
        %v1667 = vld.sshfl [vmem:[#allocation1 + $0x18] sm:$0xff pattern:$0x75316420]
        %v1668 = vld.sshfl [vmem:[#allocation1 + $0x20] sm:$0xff pattern:$0x75316420]
        %v1669 = vld.sshfl [vmem:[#allocation1 + $0x28] sm:$0xff pattern:$0x75316420]
        %v1670 = vld.sshfl [vmem:[#allocation1 + $0x30] sm:$0xff pattern:$0x75316420]
        %v1671 = vld.sshfl [vmem:[#allocation1 + $0x38] sm:$0xff pattern:$0x75316420]
        %1672 = vst [vmem:[#allocation1] ss:$2 sm:$0xff] %v322
        %v1673 = vld.sshfl [vmem:[#allocation1] sm:$0xff pattern:$0x75316420]
        %v1674 = vld.sshfl [vmem:[#allocation1 + $0x8] sm:$0xff pattern:$0x75316420]
        %1693 = vrot.lane.b32.xlu0 %v1652, 47
        %v1694 = vpop.permute.xlu0 %1693
        %1695 = vrot.lane.b32.xlu0 %v1653, 47
        %v1696 = vpop.permute.xlu0 %1695
        %1697 = vrot.lane.b32.xlu0 %v1654, 47
        %v1698 = vpop.permute.xlu0 %1697
        %1699 = vrot.lane.b32.xlu0 %v1655, 47
        %v1700 = vpop.permute.xlu0 %1699
        %1701 = vrot.lane.b32.xlu0 %v1656, 47
        %v1702 = vpop.permute.xlu0 %1701
        %1703 = vrot.lane.b32.xlu0 %v1657, 47
        %v1704 = vpop.permute.xlu0 %1703
        %1705 = vrot.lane.b32.xlu0 %v1658, 47
        %v1706 = vpop.permute.xlu0 %1705
        %1707 = vrot.lane.b32.xlu0 %v1659, 47
        %v1708 = vpop.permute.xlu0 %1707
        %1709 = vrot.lane.b32.xlu0 %v1664, 47
        %v1710 = vpop.permute.xlu0 %1709
        %1711 = vrot.lane.b32.xlu0 %v1665, 47
        %v1712 = vpop.permute.xlu0 %1711
        %1713 = vrot.lane.b32.xlu0 %v1666, 47
        %v1714 = vpop.permute.xlu0 %1713
        %1715 = vrot.lane.b32.xlu0 %v1667, 47
        %v1716 = vpop.permute.xlu0 %1715
        %1717 = vrot.lane.b32.xlu0 %v1668, 47
        %v1718 = vpop.permute.xlu0 %1717
        %1719 = vrot.lane.b32.xlu0 %v1669, 47
        %v1720 = vpop.permute.xlu0 %1719
        %1721 = vrot.lane.b32.xlu0 %v1670, 47
        %v1722 = vpop.permute.xlu0 %1721
        %1723 = vrot.lane.b32.xlu0 %v1671, 47
        %v1724 = vpop.permute.xlu0 %1723
        %1725 = vrot.lane.b32.xlu0 %v1673, 47
        %v1726 = vpop.permute.xlu0 %1725
        %1727 = vrot.lane.b32.xlu0 %v1674, 47
        %v1728 = vpop.permute.xlu0 %1727
        %vm1729 = vcmp.lt.s32.totalorder %v327, 47
        %v1730 = vsel %vm1729, %v1726, %v1728
        %v1731 = vsel %vm1729, %v1724, %v1726
        %v1732 = vsel %vm1729, %v1722, %v1724
        %v1733 = vsel %vm1729, %v1720, %v1722
        %v1734 = vsel %vm1729, %v1718, %v1720
        %v1735 = vsel %vm1729, %v1716, %v1718
        %v1736 = vsel %vm1729, %v1714, %v1716
        %v1737 = vsel %vm1729, %v1712, %v1714
        %v1738 = vsel %vm1729, %v1710, %v1712
        %v1739 = vsel %vm1729, %v1708, %v1710
        %v1740 = vsel %vm1729, %v1706, %v1708
        %v1741 = vsel %vm1729, %v1704, %v1706
        %v1742 = vsel %vm1729, %v1702, %v1704
        %v1743 = vsel %vm1729, %v1700, %v1702
        %v1744 = vsel %vm1729, %v1698, %v1700
        %v1745 = vsel %vm1729, %v1696, %v1698
        %v1746 = vsel %vm1729, %v1694, %v1696
        %v1747 = vsel %vm1729, %v1728, %v1694
        %vm1748 = vcmp.lt.s32.totalorder %v323, 47
        %vm1749 = vcmp.lt.s32.totalorder %v324, 47
        %vm1750 = vcmp.lt.s32.totalorder %v325, 47
        %v1751 = vsel %vm1748, 1, 0
        %v1752 = vsel %vm1749, 1, 0
        %v1753 = vsel %vm1750, 1, 0
        %v1754 = vperm.slane %v1751, 0
        %v1755 = vperm.slane %v1751, 1
        %v1756 = vperm.slane %v1751, 2
        %v1757 = vperm.slane %v1751, 3
        %v1758 = vperm.slane %v1751, 4
        %v1759 = vperm.slane %v1751, 5
        %v1760 = vperm.slane %v1751, 6
        %v1761 = vperm.slane %v1751, 7
        %v1762 = vperm.slane %v1752, 0
        %v1763 = vperm.slane %v1752, 1
        %v1764 = vperm.slane %v1752, 2
        %v1765 = vperm.slane %v1752, 3
        %v1766 = vperm.slane %v1752, 4
        %v1767 = vperm.slane %v1752, 5
        %v1768 = vperm.slane %v1752, 6
        %v1769 = vperm.slane %v1752, 7
        %v1770 = vperm.slane %v1753, 0
        %v1771 = vperm.slane %v1753, 1
        %vm1772 = vcmp.ne.s32.totalorder %v1754, 0
        %vm1773 = vcmp.ne.s32.totalorder %v1755, 0
        %vm1774 = vcmp.ne.s32.totalorder %v1756, 0
        %vm1775 = vcmp.ne.s32.totalorder %v1757, 0
        %vm1776 = vcmp.ne.s32.totalorder %v1758, 0
        %vm1777 = vcmp.ne.s32.totalorder %v1759, 0
        %vm1778 = vcmp.ne.s32.totalorder %v1760, 0
        %vm1779 = vcmp.ne.s32.totalorder %v1761, 0
        %vm1780 = vcmp.ne.s32.totalorder %v1762, 0
        %vm1781 = vcmp.ne.s32.totalorder %v1763, 0
        %vm1782 = vcmp.ne.s32.totalorder %v1764, 0
        %vm1783 = vcmp.ne.s32.totalorder %v1765, 0
        %vm1784 = vcmp.ne.s32.totalorder %v1766, 0
        %vm1785 = vcmp.ne.s32.totalorder %v1767, 0
        %vm1786 = vcmp.ne.s32.totalorder %v1768, 0
        %vm1787 = vcmp.ne.s32.totalorder %v1769, 0
        %vm1788 = vcmp.ne.s32.totalorder %v1770, 0
        %vm1789 = vcmp.ne.s32.totalorder %v1771, 0
        %vm1790 = vmand %vm463, %vm1772
        %vm1791 = vmand %vm464, %vm1773
        %vm1792 = vmand %vm465, %vm1774
        %vm1793 = vmand %vm466, %vm1775
        %vm1794 = vmand %vm467, %vm1776
        %vm1795 = vmand %vm468, %vm1777
        %vm1796 = vmand %vm469, %vm1778
        %vm1797 = vmand %vm470, %vm1779
        %vm1798 = vmand %vm471, %vm1780
        %vm1799 = vmand %vm472, %vm1781
        %vm1800 = vmand %vm473, %vm1782
        %vm1801 = vmand %vm474, %vm1783
        %vm1802 = vmand %vm475, %vm1784
        %vm1803 = vmand %vm476, %vm1785
        %vm1804 = vmand %vm477, %vm1786
        %vm1805 = vmand %vm478, %vm1787
        %vm1806 = vmand %vm479, %vm1788
        %vm1807 = vmand %vm480, %vm1789
        %v1808 = vsel %vm1790, 1, 0
        %v1809 = vsel %vm1791, 1, 0
        %v1810 = vsel %vm1792, 1, 0
        %v1811 = vsel %vm1793, 1, 0
        %v1812 = vsel %vm1794, 1, 0
        %v1813 = vsel %vm1795, 1, 0
        %v1814 = vsel %vm1796, 1, 0
        %v1815 = vsel %vm1797, 1, 0
        %v1816 = vsel %vm1798, 1, 0
        %v1817 = vsel %vm1799, 1, 0
        %v1818 = vsel %vm1800, 1, 0
        %v1819 = vsel %vm1801, 1, 0
        %v1820 = vsel %vm1802, 1, 0
        %v1821 = vsel %vm1803, 1, 0
        %v1822 = vsel %vm1804, 1, 0
        %v1823 = vsel %vm1805, 1, 0
        %v1824 = vsel %vm1806, 1, 0
        %v1825 = vsel %vm1807, 1, 0
        %v1826 = vperm.slane %v1808, 0
        %v1827 = vperm.slane %v1809, 0
        %v1828 = vperm.slane %v1810, 0
        %v1829 = vperm.slane %v1811, 0
        %v1830 = vperm.slane %v1812, 0
        %v1831 = vperm.slane %v1813, 0
        %v1832 = vperm.slane %v1814, 0
        %v1833 = vperm.slane %v1815, 0
        %v1834 = vperm.slane %v1816, 0
        %v1835 = vperm.slane %v1817, 0
        %v1836 = vperm.slane %v1818, 0
        %v1837 = vperm.slane %v1819, 0
        %v1838 = vperm.slane %v1820, 0
        %v1839 = vperm.slane %v1821, 0
        %v1840 = vperm.slane %v1822, 0
        %v1841 = vperm.slane %v1823, 0
        %v1842 = vperm.slane %v1824, 0
        %v1843 = vperm.slane %v1825, 0
        %vm1844 = vcmp.eq.s32.totalorder %v1826, 1
        %vm1845 = vcmp.eq.s32.totalorder %v1827, 1
        %vm1846 = vcmp.eq.s32.totalorder %v1828, 1
        %vm1847 = vcmp.eq.s32.totalorder %v1829, 1
        %vm1848 = vcmp.eq.s32.totalorder %v1830, 1
        %vm1849 = vcmp.eq.s32.totalorder %v1831, 1
        %vm1850 = vcmp.eq.s32.totalorder %v1832, 1
        %vm1851 = vcmp.eq.s32.totalorder %v1833, 1
        %vm1852 = vcmp.eq.s32.totalorder %v1834, 1
        %vm1853 = vcmp.eq.s32.totalorder %v1835, 1
        %vm1854 = vcmp.eq.s32.totalorder %v1836, 1
        %vm1855 = vcmp.eq.s32.totalorder %v1837, 1
        %vm1856 = vcmp.eq.s32.totalorder %v1838, 1
        %vm1857 = vcmp.eq.s32.totalorder %v1839, 1
        %vm1858 = vcmp.eq.s32.totalorder %v1840, 1
        %vm1859 = vcmp.eq.s32.totalorder %v1841, 1
        %vm1860 = vcmp.eq.s32.totalorder %v1842, 1
        %vm1861 = vcmp.eq.s32.totalorder %v1843, 1
        %v1862 = vsel %vm1844, %v1747, 0.0
        %v1863 = vsel %vm1845, %v1746, 0.0
        %v1864 = vsel %vm1846, %v1745, 0.0
        %v1865 = vsel %vm1847, %v1744, 0.0
        %v1866 = vsel %vm1848, %v1743, 0.0
        %v1867 = vsel %vm1849, %v1742, 0.0
        %v1868 = vsel %vm1850, %v1741, 0.0
        %v1869 = vsel %vm1851, %v1740, 0.0
        %v1870 = vsel %vm1852, %v1739, 0.0
        %v1871 = vsel %vm1853, %v1738, 0.0
        %v1872 = vsel %vm1854, %v1737, 0.0
        %v1873 = vsel %vm1855, %v1736, 0.0
        %v1874 = vsel %vm1856, %v1735, 0.0
        %v1875 = vsel %vm1857, %v1734, 0.0
        %v1876 = vsel %vm1858, %v1733, 0.0
        %v1877 = vsel %vm1859, %v1732, 0.0
        %v1878 = vsel %vm1860, %v1731, 0.0
        %v1879 = vsel %vm1861, %v1730, 0.0
        %s1880 = scalar_lea.vmem %s273, 16 [#allocation2]
        %v1881 = vld [vmem:[%s1880] sm:$0xff]
        %v1883 = vsel %vm614, %v1881, 0
        %v1886 = vsel %vm618, %v1862, 0
        %v1889 = vsel %vm618, %v1863, 0
        %v1892 = vsel %vm618, %v1864, 0
        %v1895 = vsel %vm618, %v1865, 0
        %v1898 = vsel %vm618, %v1866, 0
        %v1901 = vsel %vm618, %v1867, 0
        %v1904 = vsel %vm618, %v1868, 0
        %v1907 = vsel %vm618, %v1869, 0
        %v1910 = vsel %vm618, %v1870, 0
        %v1913 = vsel %vm618, %v1871, 0
        %v1916 = vsel %vm618, %v1872, 0
        %v1919 = vsel %vm618, %v1873, 0
        %v1922 = vsel %vm618, %v1874, 0
        %v1925 = vsel %vm618, %v1875, 0
        %v1928 = vsel %vm618, %v1876, 0
        %v1931 = vsel %vm618, %v1877, 0
        %v1934 = vsel %vm618, %v1878, 0
        %v1937 = vsel %vm618, %v1879, 0
        %1939 = vmatpush.msra.mxu0 0.0
        %1940 = vmatpush.msra.mxu0 0.0
        %1941 = vmatpush.msra.mxu0 0.0
        %1942 = vmatpush.msra.mxu0 0.0
        %1943 = vmatpush.msra.mxu0 0.0
        %1944 = vmatpush.msra.mxu0 0.0
        %1945 = vmatpush.msra.mxu0 0.0
        %1946 = vmatpush.msra.mxu0 0.0
        %1947 = vmatpush.msra.mxu0 0.0
        %1948 = vmatpush.msra.mxu0 0.0
        %1949 = vmatpush.msra.mxu0 0.0
        %1950 = vmatpush.msra.mxu0 0.0
        %1951 = vmatpush.msra.mxu0 0.0
        %1952 = vmatpush.msra.mxu0 0.0
        %1953 = vmatpush.msra.mxu0 0.0
        %1954 = vmatpush.msra.mxu0 %v1886
        %1955 = vmatmul.f32.gmra.mxu0 %v1883
        %v1956 = vpop.f32.mrf.mxu0
        %v1957 = vadd.f32 0.0, %v1956
        %1958 = vdwg.mxu0
        %1959 = vmatpush.msra.mxu0 0.0
        %1960 = vmatpush.msra.mxu0 0.0
        %1961 = vmatpush.msra.mxu0 0.0
        %1962 = vmatpush.msra.mxu0 0.0
        %1963 = vmatpush.msra.mxu0 0.0
        %1964 = vmatpush.msra.mxu0 0.0
        %1965 = vmatpush.msra.mxu0 0.0
        %1966 = vmatpush.msra.mxu0 0.0
        %1967 = vmatpush.msra.mxu0 0.0
        %1968 = vmatpush.msra.mxu0 0.0
        %1969 = vmatpush.msra.mxu0 0.0
        %1970 = vmatpush.msra.mxu0 0.0
        %1971 = vmatpush.msra.mxu0 0.0
        %1972 = vmatpush.msra.mxu0 0.0
        %1973 = vmatpush.msra.mxu0 0.0
        %1974 = vmatpush.msra.mxu0 %v1889
        %1975 = vmatmul.f32.gmra.mxu0 %v1883
        %v1976 = vpop.f32.mrf.mxu0
        %v1977 = vadd.f32 0.0, %v1976
        %1978 = vdwg.mxu0
        %1979 = vmatpush.msra.mxu0 0.0
        %1980 = vmatpush.msra.mxu0 0.0
        %1981 = vmatpush.msra.mxu0 0.0
        %1982 = vmatpush.msra.mxu0 0.0
        %1983 = vmatpush.msra.mxu0 0.0
        %1984 = vmatpush.msra.mxu0 0.0
        %1985 = vmatpush.msra.mxu0 0.0
        %1986 = vmatpush.msra.mxu0 0.0
        %1987 = vmatpush.msra.mxu0 0.0
        %1988 = vmatpush.msra.mxu0 0.0
        %1989 = vmatpush.msra.mxu0 0.0
        %1990 = vmatpush.msra.mxu0 0.0
        %1991 = vmatpush.msra.mxu0 0.0
        %1992 = vmatpush.msra.mxu0 0.0
        %1993 = vmatpush.msra.mxu0 0.0
        %1994 = vmatpush.msra.mxu0 %v1892
        %1995 = vmatmul.f32.gmra.mxu0 %v1883
        %v1996 = vpop.f32.mrf.mxu0
        %v1997 = vadd.f32 0.0, %v1996
        %1998 = vdwg.mxu0
        %1999 = vmatpush.msra.mxu0 0.0
        %2000 = vmatpush.msra.mxu0 0.0
        %2001 = vmatpush.msra.mxu0 0.0
        %2002 = vmatpush.msra.mxu0 0.0
        %2003 = vmatpush.msra.mxu0 0.0
        %2004 = vmatpush.msra.mxu0 0.0
        %2005 = vmatpush.msra.mxu0 0.0
        %2006 = vmatpush.msra.mxu0 0.0
        %2007 = vmatpush.msra.mxu0 0.0
        %2008 = vmatpush.msra.mxu0 0.0
        %2009 = vmatpush.msra.mxu0 0.0
        %2010 = vmatpush.msra.mxu0 0.0
        %2011 = vmatpush.msra.mxu0 0.0
        %2012 = vmatpush.msra.mxu0 0.0
        %2013 = vmatpush.msra.mxu0 0.0
        %2014 = vmatpush.msra.mxu0 %v1895
        %2015 = vmatmul.f32.gmra.mxu0 %v1883
        %v2016 = vpop.f32.mrf.mxu0
        %v2017 = vadd.f32 0.0, %v2016
        %2018 = vdwg.mxu0
        %2019 = vmatpush.msra.mxu0 0.0
        %2020 = vmatpush.msra.mxu0 0.0
        %2021 = vmatpush.msra.mxu0 0.0
        %2022 = vmatpush.msra.mxu0 0.0
        %2023 = vmatpush.msra.mxu0 0.0
        %2024 = vmatpush.msra.mxu0 0.0
        %2025 = vmatpush.msra.mxu0 0.0
        %2026 = vmatpush.msra.mxu0 0.0
        %2027 = vmatpush.msra.mxu0 0.0
        %2028 = vmatpush.msra.mxu0 0.0
        %2029 = vmatpush.msra.mxu0 0.0
        %2030 = vmatpush.msra.mxu0 0.0
        %2031 = vmatpush.msra.mxu0 0.0
        %2032 = vmatpush.msra.mxu0 0.0
        %2033 = vmatpush.msra.mxu0 0.0
        %2034 = vmatpush.msra.mxu0 %v1898
        %2035 = vmatmul.f32.gmra.mxu0 %v1883
        %v2036 = vpop.f32.mrf.mxu0
        %v2037 = vadd.f32 0.0, %v2036
        %2038 = vdwg.mxu0
        %2039 = vmatpush.msra.mxu0 0.0
        %2040 = vmatpush.msra.mxu0 0.0
        %2041 = vmatpush.msra.mxu0 0.0
        %2042 = vmatpush.msra.mxu0 0.0
        %2043 = vmatpush.msra.mxu0 0.0
        %2044 = vmatpush.msra.mxu0 0.0
        %2045 = vmatpush.msra.mxu0 0.0
        %2046 = vmatpush.msra.mxu0 0.0
        %2047 = vmatpush.msra.mxu0 0.0
        %2048 = vmatpush.msra.mxu0 0.0
        %2049 = vmatpush.msra.mxu0 0.0
        %2050 = vmatpush.msra.mxu0 0.0
        %2051 = vmatpush.msra.mxu0 0.0
        %2052 = vmatpush.msra.mxu0 0.0
        %2053 = vmatpush.msra.mxu0 0.0
        %2054 = vmatpush.msra.mxu0 %v1901
        %2055 = vmatmul.f32.gmra.mxu0 %v1883
        %v2056 = vpop.f32.mrf.mxu0
        %v2057 = vadd.f32 0.0, %v2056
        %2058 = vdwg.mxu0
        %2059 = vmatpush.msra.mxu0 0.0
        %2060 = vmatpush.msra.mxu0 0.0
        %2061 = vmatpush.msra.mxu0 0.0
        %2062 = vmatpush.msra.mxu0 0.0
        %2063 = vmatpush.msra.mxu0 0.0
        %2064 = vmatpush.msra.mxu0 0.0
        %2065 = vmatpush.msra.mxu0 0.0
        %2066 = vmatpush.msra.mxu0 0.0
        %2067 = vmatpush.msra.mxu0 0.0
        %2068 = vmatpush.msra.mxu0 0.0
        %2069 = vmatpush.msra.mxu0 0.0
        %2070 = vmatpush.msra.mxu0 0.0
        %2071 = vmatpush.msra.mxu0 0.0
        %2072 = vmatpush.msra.mxu0 0.0
        %2073 = vmatpush.msra.mxu0 0.0
        %2074 = vmatpush.msra.mxu0 %v1904
        %2075 = vmatmul.f32.gmra.mxu0 %v1883
        %v2076 = vpop.f32.mrf.mxu0
        %v2077 = vadd.f32 0.0, %v2076
        %2078 = vdwg.mxu0
        %2079 = vmatpush.msra.mxu0 0.0
        %2080 = vmatpush.msra.mxu0 0.0
        %2081 = vmatpush.msra.mxu0 0.0
        %2082 = vmatpush.msra.mxu0 0.0
        %2083 = vmatpush.msra.mxu0 0.0
        %2084 = vmatpush.msra.mxu0 0.0
        %2085 = vmatpush.msra.mxu0 0.0
        %2086 = vmatpush.msra.mxu0 0.0
        %2087 = vmatpush.msra.mxu0 0.0
        %2088 = vmatpush.msra.mxu0 0.0
        %2089 = vmatpush.msra.mxu0 0.0
        %2090 = vmatpush.msra.mxu0 0.0
        %2091 = vmatpush.msra.mxu0 0.0
        %2092 = vmatpush.msra.mxu0 0.0
        %2093 = vmatpush.msra.mxu0 0.0
        %2094 = vmatpush.msra.mxu0 %v1907
        %2095 = vmatmul.f32.gmra.mxu0 %v1883
        %v2096 = vpop.f32.mrf.mxu0
        %v2097 = vadd.f32 0.0, %v2096
        %2098 = vdwg.mxu0
        %2099 = vmatpush.msra.mxu0 0.0
        %2100 = vmatpush.msra.mxu0 0.0
        %2101 = vmatpush.msra.mxu0 0.0
        %2102 = vmatpush.msra.mxu0 0.0
        %2103 = vmatpush.msra.mxu0 0.0
        %2104 = vmatpush.msra.mxu0 0.0
        %2105 = vmatpush.msra.mxu0 0.0
        %2106 = vmatpush.msra.mxu0 0.0
        %2107 = vmatpush.msra.mxu0 0.0
        %2108 = vmatpush.msra.mxu0 0.0
        %2109 = vmatpush.msra.mxu0 0.0
        %2110 = vmatpush.msra.mxu0 0.0
        %2111 = vmatpush.msra.mxu0 0.0
        %2112 = vmatpush.msra.mxu0 0.0
        %2113 = vmatpush.msra.mxu0 0.0
        %2114 = vmatpush.msra.mxu0 %v1910
        %2115 = vmatmul.f32.gmra.mxu0 %v1883
        %v2116 = vpop.f32.mrf.mxu0
        %v2117 = vadd.f32 0.0, %v2116
        %2118 = vdwg.mxu0
        %2119 = vmatpush.msra.mxu0 0.0
        %2120 = vmatpush.msra.mxu0 0.0
        %2121 = vmatpush.msra.mxu0 0.0
        %2122 = vmatpush.msra.mxu0 0.0
        %2123 = vmatpush.msra.mxu0 0.0
        %2124 = vmatpush.msra.mxu0 0.0
        %2125 = vmatpush.msra.mxu0 0.0
        %2126 = vmatpush.msra.mxu0 0.0
        %2127 = vmatpush.msra.mxu0 0.0
        %2128 = vmatpush.msra.mxu0 0.0
        %2129 = vmatpush.msra.mxu0 0.0
        %2130 = vmatpush.msra.mxu0 0.0
        %2131 = vmatpush.msra.mxu0 0.0
        %2132 = vmatpush.msra.mxu0 0.0
        %2133 = vmatpush.msra.mxu0 0.0
        %2134 = vmatpush.msra.mxu0 %v1913
        %2135 = vmatmul.f32.gmra.mxu0 %v1883
        %v2136 = vpop.f32.mrf.mxu0
        %v2137 = vadd.f32 0.0, %v2136
        %2138 = vdwg.mxu0
        %2139 = vmatpush.msra.mxu0 0.0
        %2140 = vmatpush.msra.mxu0 0.0
        %2141 = vmatpush.msra.mxu0 0.0
        %2142 = vmatpush.msra.mxu0 0.0
        %2143 = vmatpush.msra.mxu0 0.0
        %2144 = vmatpush.msra.mxu0 0.0
        %2145 = vmatpush.msra.mxu0 0.0
        %2146 = vmatpush.msra.mxu0 0.0
        %2147 = vmatpush.msra.mxu0 0.0
        %2148 = vmatpush.msra.mxu0 0.0
        %2149 = vmatpush.msra.mxu0 0.0
        %2150 = vmatpush.msra.mxu0 0.0
        %2151 = vmatpush.msra.mxu0 0.0
        %2152 = vmatpush.msra.mxu0 0.0
        %2153 = vmatpush.msra.mxu0 0.0
        %2154 = vmatpush.msra.mxu0 %v1916
        %2155 = vmatmul.f32.gmra.mxu0 %v1883
        %v2156 = vpop.f32.mrf.mxu0
        %v2157 = vadd.f32 0.0, %v2156
        %2158 = vdwg.mxu0
        %2159 = vmatpush.msra.mxu0 0.0
        %2160 = vmatpush.msra.mxu0 0.0
        %2161 = vmatpush.msra.mxu0 0.0
        %2162 = vmatpush.msra.mxu0 0.0
        %2163 = vmatpush.msra.mxu0 0.0
        %2164 = vmatpush.msra.mxu0 0.0
        %2165 = vmatpush.msra.mxu0 0.0
        %2166 = vmatpush.msra.mxu0 0.0
        %2167 = vmatpush.msra.mxu0 0.0
        %2168 = vmatpush.msra.mxu0 0.0
        %2169 = vmatpush.msra.mxu0 0.0
        %2170 = vmatpush.msra.mxu0 0.0
        %2171 = vmatpush.msra.mxu0 0.0
        %2172 = vmatpush.msra.mxu0 0.0
        %2173 = vmatpush.msra.mxu0 0.0
        %2174 = vmatpush.msra.mxu0 %v1919
        %2175 = vmatmul.f32.gmra.mxu0 %v1883
        %v2176 = vpop.f32.mrf.mxu0
        %v2177 = vadd.f32 0.0, %v2176
        %2178 = vdwg.mxu0
        %2179 = vmatpush.msra.mxu0 0.0
        %2180 = vmatpush.msra.mxu0 0.0
        %2181 = vmatpush.msra.mxu0 0.0
        %2182 = vmatpush.msra.mxu0 0.0
        %2183 = vmatpush.msra.mxu0 0.0
        %2184 = vmatpush.msra.mxu0 0.0
        %2185 = vmatpush.msra.mxu0 0.0
        %2186 = vmatpush.msra.mxu0 0.0
        %2187 = vmatpush.msra.mxu0 0.0
        %2188 = vmatpush.msra.mxu0 0.0
        %2189 = vmatpush.msra.mxu0 0.0
        %2190 = vmatpush.msra.mxu0 0.0
        %2191 = vmatpush.msra.mxu0 0.0
        %2192 = vmatpush.msra.mxu0 0.0
        %2193 = vmatpush.msra.mxu0 0.0
        %2194 = vmatpush.msra.mxu0 %v1922
        %2195 = vmatmul.f32.gmra.mxu0 %v1883
        %v2196 = vpop.f32.mrf.mxu0
        %v2197 = vadd.f32 0.0, %v2196
        %2198 = vdwg.mxu0
        %2199 = vmatpush.msra.mxu0 0.0
        %2200 = vmatpush.msra.mxu0 0.0
        %2201 = vmatpush.msra.mxu0 0.0
        %2202 = vmatpush.msra.mxu0 0.0
        %2203 = vmatpush.msra.mxu0 0.0
        %2204 = vmatpush.msra.mxu0 0.0
        %2205 = vmatpush.msra.mxu0 0.0
        %2206 = vmatpush.msra.mxu0 0.0
        %2207 = vmatpush.msra.mxu0 0.0
        %2208 = vmatpush.msra.mxu0 0.0
        %2209 = vmatpush.msra.mxu0 0.0
        %2210 = vmatpush.msra.mxu0 0.0
        %2211 = vmatpush.msra.mxu0 0.0
        %2212 = vmatpush.msra.mxu0 0.0
        %2213 = vmatpush.msra.mxu0 0.0
        %2214 = vmatpush.msra.mxu0 %v1925
        %2215 = vmatmul.f32.gmra.mxu0 %v1883
        %v2216 = vpop.f32.mrf.mxu0
        %v2217 = vadd.f32 0.0, %v2216
        %2218 = vdwg.mxu0
        %2219 = vmatpush.msra.mxu0 0.0
        %2220 = vmatpush.msra.mxu0 0.0
        %2221 = vmatpush.msra.mxu0 0.0
        %2222 = vmatpush.msra.mxu0 0.0
        %2223 = vmatpush.msra.mxu0 0.0
        %2224 = vmatpush.msra.mxu0 0.0
        %2225 = vmatpush.msra.mxu0 0.0
        %2226 = vmatpush.msra.mxu0 0.0
        %2227 = vmatpush.msra.mxu0 0.0
        %2228 = vmatpush.msra.mxu0 0.0
        %2229 = vmatpush.msra.mxu0 0.0
        %2230 = vmatpush.msra.mxu0 0.0
        %2231 = vmatpush.msra.mxu0 0.0
        %2232 = vmatpush.msra.mxu0 0.0
        %2233 = vmatpush.msra.mxu0 0.0
        %2234 = vmatpush.msra.mxu0 %v1928
        %2235 = vmatmul.f32.gmra.mxu0 %v1883
        %v2236 = vpop.f32.mrf.mxu0
        %v2237 = vadd.f32 0.0, %v2236
        %2238 = vdwg.mxu0
        %2239 = vmatpush.msra.mxu0 0.0
        %2240 = vmatpush.msra.mxu0 0.0
        %2241 = vmatpush.msra.mxu0 0.0
        %2242 = vmatpush.msra.mxu0 0.0
        %2243 = vmatpush.msra.mxu0 0.0
        %2244 = vmatpush.msra.mxu0 0.0
        %2245 = vmatpush.msra.mxu0 0.0
        %2246 = vmatpush.msra.mxu0 0.0
        %2247 = vmatpush.msra.mxu0 0.0
        %2248 = vmatpush.msra.mxu0 0.0
        %2249 = vmatpush.msra.mxu0 0.0
        %2250 = vmatpush.msra.mxu0 0.0
        %2251 = vmatpush.msra.mxu0 0.0
        %2252 = vmatpush.msra.mxu0 0.0
        %2253 = vmatpush.msra.mxu0 0.0
        %2254 = vmatpush.msra.mxu0 %v1931
        %2255 = vmatmul.f32.gmra.mxu0 %v1883
        %v2256 = vpop.f32.mrf.mxu0
        %v2257 = vadd.f32 0.0, %v2256
        %2258 = vdwg.mxu0
        %2259 = vmatpush.msra.mxu0 0.0
        %2260 = vmatpush.msra.mxu0 0.0
        %2261 = vmatpush.msra.mxu0 0.0
        %2262 = vmatpush.msra.mxu0 0.0
        %2263 = vmatpush.msra.mxu0 0.0
        %2264 = vmatpush.msra.mxu0 0.0
        %2265 = vmatpush.msra.mxu0 0.0
        %2266 = vmatpush.msra.mxu0 0.0
        %2267 = vmatpush.msra.mxu0 0.0
        %2268 = vmatpush.msra.mxu0 0.0
        %2269 = vmatpush.msra.mxu0 0.0
        %2270 = vmatpush.msra.mxu0 0.0
        %2271 = vmatpush.msra.mxu0 0.0
        %2272 = vmatpush.msra.mxu0 0.0
        %2273 = vmatpush.msra.mxu0 0.0
        %2274 = vmatpush.msra.mxu0 %v1934
        %2275 = vmatmul.f32.gmra.mxu0 %v1883
        %v2276 = vpop.f32.mrf.mxu0
        %v2277 = vadd.f32 0.0, %v2276
        %2278 = vdwg.mxu0
        %2279 = vmatpush.msra.mxu0 0.0
        %2280 = vmatpush.msra.mxu0 0.0
        %2281 = vmatpush.msra.mxu0 0.0
        %2282 = vmatpush.msra.mxu0 0.0
        %2283 = vmatpush.msra.mxu0 0.0
        %2284 = vmatpush.msra.mxu0 0.0
        %2285 = vmatpush.msra.mxu0 0.0
        %2286 = vmatpush.msra.mxu0 0.0
        %2287 = vmatpush.msra.mxu0 0.0
        %2288 = vmatpush.msra.mxu0 0.0
        %2289 = vmatpush.msra.mxu0 0.0
        %2290 = vmatpush.msra.mxu0 0.0
        %2291 = vmatpush.msra.mxu0 0.0
        %2292 = vmatpush.msra.mxu0 0.0
        %2293 = vmatpush.msra.mxu0 0.0
        %2294 = vmatpush.msra.mxu0 %v1937
        %2295 = vmatmul.f32.gmra.mxu0 %v1883
        %v2296 = vpop.f32.mrf.mxu0
        %v2297 = vadd.f32 0.0, %v2296
        %2298 = vdwg.mxu0
        %v2299 = vadd.f32 %v1627, %v1957
        %v2300 = vadd.f32 %v1628, %v1977
        %v2301 = vadd.f32 %v1629, %v1997
        %v2302 = vadd.f32 %v1630, %v2017
        %v2303 = vadd.f32 %v1631, %v2037
        %v2304 = vadd.f32 %v1632, %v2057
        %v2305 = vadd.f32 %v1633, %v2077
        %v2306 = vadd.f32 %v1634, %v2097
        %v2307 = vadd.f32 %v1635, %v2117
        %v2308 = vadd.f32 %v1636, %v2137
        %v2309 = vadd.f32 %v1637, %v2157
        %v2310 = vadd.f32 %v1638, %v2177
        %v2311 = vadd.f32 %v1639, %v2197
        %v2312 = vadd.f32 %v1640, %v2217
        %v2313 = vadd.f32 %v1641, %v2237
        %v2314 = vadd.f32 %v1642, %v2257
        %v2315 = vadd.f32 %v1643, %v2277
        %v2316 = vadd.f32 %v1644, %v2297
        %2317 = vst [vmem:[#allocation1] ss:$2 sm:$0xff] %v314
        %s2318 = scalar_lea.vmem [#allocation1], 16
        %2319 = vst [vmem:[%s2318] ss:$2 sm:$0xff] %v315
        %s2320 = scalar_lea.vmem [#allocation1], 32
        %2321 = vst [vmem:[%s2320] ss:$2 sm:$0xff] %v316
        %s2322 = scalar_lea.vmem [#allocation1], 48
        %2323 = vst [vmem:[%s2322] ss:$2 sm:$0xff] %v317
        %v2324 = vld.sshfl [vmem:[#allocation1] sm:$0xff pattern:$0x75316420]
        %v2325 = vld.sshfl [vmem:[#allocation1 + $0x8] sm:$0xff pattern:$0x75316420]
        %v2326 = vld.sshfl [vmem:[#allocation1 + $0x10] sm:$0xff pattern:$0x75316420]
        %v2327 = vld.sshfl [vmem:[#allocation1 + $0x18] sm:$0xff pattern:$0x75316420]
        %v2328 = vld.sshfl [vmem:[#allocation1 + $0x20] sm:$0xff pattern:$0x75316420]
        %v2329 = vld.sshfl [vmem:[#allocation1 + $0x28] sm:$0xff pattern:$0x75316420]
        %v2330 = vld.sshfl [vmem:[#allocation1 + $0x30] sm:$0xff pattern:$0x75316420]
        %v2331 = vld.sshfl [vmem:[#allocation1 + $0x38] sm:$0xff pattern:$0x75316420]
        %2332 = vst [vmem:[#allocation1] ss:$2 sm:$0xff] %v318
        %2333 = vst [vmem:[%s2318] ss:$2 sm:$0xff] %v319
        %2334 = vst [vmem:[%s2320] ss:$2 sm:$0xff] %v320
        %2335 = vst [vmem:[%s2322] ss:$2 sm:$0xff] %v321
        %v2336 = vld.sshfl [vmem:[#allocation1] sm:$0xff pattern:$0x75316420]
        %v2337 = vld.sshfl [vmem:[#allocation1 + $0x8] sm:$0xff pattern:$0x75316420]
        %v2338 = vld.sshfl [vmem:[#allocation1 + $0x10] sm:$0xff pattern:$0x75316420]
        %v2339 = vld.sshfl [vmem:[#allocation1 + $0x18] sm:$0xff pattern:$0x75316420]
        %v2340 = vld.sshfl [vmem:[#allocation1 + $0x20] sm:$0xff pattern:$0x75316420]
        %v2341 = vld.sshfl [vmem:[#allocation1 + $0x28] sm:$0xff pattern:$0x75316420]
        %v2342 = vld.sshfl [vmem:[#allocation1 + $0x30] sm:$0xff pattern:$0x75316420]
        %v2343 = vld.sshfl [vmem:[#allocation1 + $0x38] sm:$0xff pattern:$0x75316420]
        %2344 = vst [vmem:[#allocation1] ss:$2 sm:$0xff] %v322
        %v2345 = vld.sshfl [vmem:[#allocation1] sm:$0xff pattern:$0x75316420]
        %v2346 = vld.sshfl [vmem:[#allocation1 + $0x8] sm:$0xff pattern:$0x75316420]
        %2365 = vrot.lane.b32.xlu0 %v2324, 1
        %v2366 = vpop.permute.xlu0 %2365
        %2367 = vrot.lane.b32.xlu0 %v2325, 1
        %v2368 = vpop.permute.xlu0 %2367
        %2369 = vrot.lane.b32.xlu0 %v2326, 1
        %v2370 = vpop.permute.xlu0 %2369
        %2371 = vrot.lane.b32.xlu0 %v2327, 1
        %v2372 = vpop.permute.xlu0 %2371
        %2373 = vrot.lane.b32.xlu0 %v2328, 1
        %v2374 = vpop.permute.xlu0 %2373
        %2375 = vrot.lane.b32.xlu0 %v2329, 1
        %v2376 = vpop.permute.xlu0 %2375
        %2377 = vrot.lane.b32.xlu0 %v2330, 1
        %v2378 = vpop.permute.xlu0 %2377
        %2379 = vrot.lane.b32.xlu0 %v2331, 1
        %v2380 = vpop.permute.xlu0 %2379
        %2381 = vrot.lane.b32.xlu0 %v2336, 1
        %v2382 = vpop.permute.xlu0 %2381
        %2383 = vrot.lane.b32.xlu0 %v2337, 1
        %v2384 = vpop.permute.xlu0 %2383
        %2385 = vrot.lane.b32.xlu0 %v2338, 1
        %v2386 = vpop.permute.xlu0 %2385
        %2387 = vrot.lane.b32.xlu0 %v2339, 1
        %v2388 = vpop.permute.xlu0 %2387
        %2389 = vrot.lane.b32.xlu0 %v2340, 1
        %v2390 = vpop.permute.xlu0 %2389
        %2391 = vrot.lane.b32.xlu0 %v2341, 1
        %v2392 = vpop.permute.xlu0 %2391
        %2393 = vrot.lane.b32.xlu0 %v2342, 1
        %v2394 = vpop.permute.xlu0 %2393
        %2395 = vrot.lane.b32.xlu0 %v2343, 1
        %v2396 = vpop.permute.xlu0 %2395
        %2397 = vrot.lane.b32.xlu0 %v2345, 1
        %v2398 = vpop.permute.xlu0 %2397
        %2399 = vrot.lane.b32.xlu0 %v2346, 1
        %v2400 = vpop.permute.xlu0 %2399
        %vm2401 = vcmp.lt.s32.totalorder %v327, 1
        %v2402 = vsel %vm2401, %v2398, %v2400
        %v2403 = vsel %vm2401, %v2396, %v2398
        %v2404 = vsel %vm2401, %v2394, %v2396
        %v2405 = vsel %vm2401, %v2392, %v2394
        %v2406 = vsel %vm2401, %v2390, %v2392
        %v2407 = vsel %vm2401, %v2388, %v2390
        %v2408 = vsel %vm2401, %v2386, %v2388
        %v2409 = vsel %vm2401, %v2384, %v2386
        %v2410 = vsel %vm2401, %v2382, %v2384
        %v2411 = vsel %vm2401, %v2380, %v2382
        %v2412 = vsel %vm2401, %v2378, %v2380
        %v2413 = vsel %vm2401, %v2376, %v2378
        %v2414 = vsel %vm2401, %v2374, %v2376
        %v2415 = vsel %vm2401, %v2372, %v2374
        %v2416 = vsel %vm2401, %v2370, %v2372
        %v2417 = vsel %vm2401, %v2368, %v2370
        %v2418 = vsel %vm2401, %v2366, %v2368
        %v2419 = vsel %vm2401, %v2400, %v2366
        %vm2420 = vcmp.eq.s32.totalorder %v487, 1
        %vm2421 = vcmp.eq.s32.totalorder %v488, 1
        %vm2422 = vcmp.eq.s32.totalorder %v489, 1
        %vm2423 = vcmp.eq.s32.totalorder %v490, 1
        %vm2424 = vcmp.eq.s32.totalorder %v491, 1
        %vm2425 = vcmp.eq.s32.totalorder %v492, 1
        %vm2426 = vcmp.eq.s32.totalorder %v493, 1
        %vm2427 = vcmp.eq.s32.totalorder %v494, 1
        %vm2428 = vcmp.eq.s32.totalorder %v495, 1
        %vm2429 = vcmp.eq.s32.totalorder %v496, 1
        %vm2430 = vcmp.eq.s32.totalorder %v497, 1
        %vm2431 = vcmp.eq.s32.totalorder %v498, 1
        %vm2432 = vcmp.eq.s32.totalorder %v499, 1
        %vm2433 = vcmp.eq.s32.totalorder %v500, 1
        %vm2434 = vcmp.eq.s32.totalorder %v501, 1
        %vm2435 = vcmp.eq.s32.totalorder %v502, 1
        %vm2436 = vcmp.eq.s32.totalorder %v503, 1
        %vm2437 = vcmp.eq.s32.totalorder %v504, 1
        %v2438 = vsel %vm2420, %v2419, 0.0
        %v2439 = vsel %vm2421, %v2418, 0.0
        %v2440 = vsel %vm2422, %v2417, 0.0
        %v2441 = vsel %vm2423, %v2416, 0.0
        %v2442 = vsel %vm2424, %v2415, 0.0
        %v2443 = vsel %vm2425, %v2414, 0.0
        %v2444 = vsel %vm2426, %v2413, 0.0
        %v2445 = vsel %vm2427, %v2412, 0.0
        %v2446 = vsel %vm2428, %v2411, 0.0
        %v2447 = vsel %vm2429, %v2410, 0.0
        %v2448 = vsel %vm2430, %v2409, 0.0
        %v2449 = vsel %vm2431, %v2408, 0.0
        %v2450 = vsel %vm2432, %v2407, 0.0
        %v2451 = vsel %vm2433, %v2406, 0.0
        %v2452 = vsel %vm2434, %v2405, 0.0
        %v2453 = vsel %vm2435, %v2404, 0.0
        %v2454 = vsel %vm2436, %v2403, 0.0
        %v2455 = vsel %vm2437, %v2402, 0.0
        %s2456 = scalar_lea.vmem %s273, 24 [#allocation2]
        %v2457 = vld [vmem:[%s2456] sm:$0xff]
        %v2459 = vsel %vm614, %v2457, 0
        %v2462 = vsel %vm618, %v2438, 0
        %v2465 = vsel %vm618, %v2439, 0
        %v2468 = vsel %vm618, %v2440, 0
        %v2471 = vsel %vm618, %v2441, 0
        %v2474 = vsel %vm618, %v2442, 0
        %v2477 = vsel %vm618, %v2443, 0
        %v2480 = vsel %vm618, %v2444, 0
        %v2483 = vsel %vm618, %v2445, 0
        %v2486 = vsel %vm618, %v2446, 0
        %v2489 = vsel %vm618, %v2447, 0
        %v2492 = vsel %vm618, %v2448, 0
        %v2495 = vsel %vm618, %v2449, 0
        %v2498 = vsel %vm618, %v2450, 0
        %v2501 = vsel %vm618, %v2451, 0
        %v2504 = vsel %vm618, %v2452, 0
        %v2507 = vsel %vm618, %v2453, 0
        %v2510 = vsel %vm618, %v2454, 0
        %v2513 = vsel %vm618, %v2455, 0
        %2515 = vmatpush.msra.mxu0 0.0
        %2516 = vmatpush.msra.mxu0 0.0
        %2517 = vmatpush.msra.mxu0 0.0
        %2518 = vmatpush.msra.mxu0 0.0
        %2519 = vmatpush.msra.mxu0 0.0
        %2520 = vmatpush.msra.mxu0 0.0
        %2521 = vmatpush.msra.mxu0 0.0
        %2522 = vmatpush.msra.mxu0 0.0
        %2523 = vmatpush.msra.mxu0 0.0
        %2524 = vmatpush.msra.mxu0 0.0
        %2525 = vmatpush.msra.mxu0 0.0
        %2526 = vmatpush.msra.mxu0 0.0
        %2527 = vmatpush.msra.mxu0 0.0
        %2528 = vmatpush.msra.mxu0 0.0
        %2529 = vmatpush.msra.mxu0 0.0
        %2530 = vmatpush.msra.mxu0 %v2462
        %2531 = vmatmul.f32.gmra.mxu0 %v2459
        %v2532 = vpop.f32.mrf.mxu0
        %v2533 = vadd.f32 0.0, %v2532
        %2534 = vdwg.mxu0
        %2535 = vmatpush.msra.mxu0 0.0
        %2536 = vmatpush.msra.mxu0 0.0
        %2537 = vmatpush.msra.mxu0 0.0
        %2538 = vmatpush.msra.mxu0 0.0
        %2539 = vmatpush.msra.mxu0 0.0
        %2540 = vmatpush.msra.mxu0 0.0
        %2541 = vmatpush.msra.mxu0 0.0
        %2542 = vmatpush.msra.mxu0 0.0
        %2543 = vmatpush.msra.mxu0 0.0
        %2544 = vmatpush.msra.mxu0 0.0
        %2545 = vmatpush.msra.mxu0 0.0
        %2546 = vmatpush.msra.mxu0 0.0
        %2547 = vmatpush.msra.mxu0 0.0
        %2548 = vmatpush.msra.mxu0 0.0
        %2549 = vmatpush.msra.mxu0 0.0
        %2550 = vmatpush.msra.mxu0 %v2465
        %2551 = vmatmul.f32.gmra.mxu0 %v2459
        %v2552 = vpop.f32.mrf.mxu0
        %v2553 = vadd.f32 0.0, %v2552
        %2554 = vdwg.mxu0
        %2555 = vmatpush.msra.mxu0 0.0
        %2556 = vmatpush.msra.mxu0 0.0
        %2557 = vmatpush.msra.mxu0 0.0
        %2558 = vmatpush.msra.mxu0 0.0
        %2559 = vmatpush.msra.mxu0 0.0
        %2560 = vmatpush.msra.mxu0 0.0
        %2561 = vmatpush.msra.mxu0 0.0
        %2562 = vmatpush.msra.mxu0 0.0
        %2563 = vmatpush.msra.mxu0 0.0
        %2564 = vmatpush.msra.mxu0 0.0
        %2565 = vmatpush.msra.mxu0 0.0
        %2566 = vmatpush.msra.mxu0 0.0
        %2567 = vmatpush.msra.mxu0 0.0
        %2568 = vmatpush.msra.mxu0 0.0
        %2569 = vmatpush.msra.mxu0 0.0
        %2570 = vmatpush.msra.mxu0 %v2468
        %2571 = vmatmul.f32.gmra.mxu0 %v2459
        %v2572 = vpop.f32.mrf.mxu0
        %v2573 = vadd.f32 0.0, %v2572
        %2574 = vdwg.mxu0
        %2575 = vmatpush.msra.mxu0 0.0
        %2576 = vmatpush.msra.mxu0 0.0
        %2577 = vmatpush.msra.mxu0 0.0
        %2578 = vmatpush.msra.mxu0 0.0
        %2579 = vmatpush.msra.mxu0 0.0
        %2580 = vmatpush.msra.mxu0 0.0
        %2581 = vmatpush.msra.mxu0 0.0
        %2582 = vmatpush.msra.mxu0 0.0
        %2583 = vmatpush.msra.mxu0 0.0
        %2584 = vmatpush.msra.mxu0 0.0
        %2585 = vmatpush.msra.mxu0 0.0
        %2586 = vmatpush.msra.mxu0 0.0
        %2587 = vmatpush.msra.mxu0 0.0
        %2588 = vmatpush.msra.mxu0 0.0
        %2589 = vmatpush.msra.mxu0 0.0
        %2590 = vmatpush.msra.mxu0 %v2471
        %2591 = vmatmul.f32.gmra.mxu0 %v2459
        %v2592 = vpop.f32.mrf.mxu0
        %v2593 = vadd.f32 0.0, %v2592
        %2594 = vdwg.mxu0
        %2595 = vmatpush.msra.mxu0 0.0
        %2596 = vmatpush.msra.mxu0 0.0
        %2597 = vmatpush.msra.mxu0 0.0
        %2598 = vmatpush.msra.mxu0 0.0
        %2599 = vmatpush.msra.mxu0 0.0
        %2600 = vmatpush.msra.mxu0 0.0
        %2601 = vmatpush.msra.mxu0 0.0
        %2602 = vmatpush.msra.mxu0 0.0
        %2603 = vmatpush.msra.mxu0 0.0
        %2604 = vmatpush.msra.mxu0 0.0
        %2605 = vmatpush.msra.mxu0 0.0
        %2606 = vmatpush.msra.mxu0 0.0
        %2607 = vmatpush.msra.mxu0 0.0
        %2608 = vmatpush.msra.mxu0 0.0
        %2609 = vmatpush.msra.mxu0 0.0
        %2610 = vmatpush.msra.mxu0 %v2474
        %2611 = vmatmul.f32.gmra.mxu0 %v2459
        %v2612 = vpop.f32.mrf.mxu0
        %v2613 = vadd.f32 0.0, %v2612
        %2614 = vdwg.mxu0
        %2615 = vmatpush.msra.mxu0 0.0
        %2616 = vmatpush.msra.mxu0 0.0
        %2617 = vmatpush.msra.mxu0 0.0
        %2618 = vmatpush.msra.mxu0 0.0
        %2619 = vmatpush.msra.mxu0 0.0
        %2620 = vmatpush.msra.mxu0 0.0
        %2621 = vmatpush.msra.mxu0 0.0
        %2622 = vmatpush.msra.mxu0 0.0
        %2623 = vmatpush.msra.mxu0 0.0
        %2624 = vmatpush.msra.mxu0 0.0
        %2625 = vmatpush.msra.mxu0 0.0
        %2626 = vmatpush.msra.mxu0 0.0
        %2627 = vmatpush.msra.mxu0 0.0
        %2628 = vmatpush.msra.mxu0 0.0
        %2629 = vmatpush.msra.mxu0 0.0
        %2630 = vmatpush.msra.mxu0 %v2477
        %2631 = vmatmul.f32.gmra.mxu0 %v2459
        %v2632 = vpop.f32.mrf.mxu0
        %v2633 = vadd.f32 0.0, %v2632
        %2634 = vdwg.mxu0
        %2635 = vmatpush.msra.mxu0 0.0
        %2636 = vmatpush.msra.mxu0 0.0
        %2637 = vmatpush.msra.mxu0 0.0
        %2638 = vmatpush.msra.mxu0 0.0
        %2639 = vmatpush.msra.mxu0 0.0
        %2640 = vmatpush.msra.mxu0 0.0
        %2641 = vmatpush.msra.mxu0 0.0
        %2642 = vmatpush.msra.mxu0 0.0
        %2643 = vmatpush.msra.mxu0 0.0
        %2644 = vmatpush.msra.mxu0 0.0
        %2645 = vmatpush.msra.mxu0 0.0
        %2646 = vmatpush.msra.mxu0 0.0
        %2647 = vmatpush.msra.mxu0 0.0
        %2648 = vmatpush.msra.mxu0 0.0
        %2649 = vmatpush.msra.mxu0 0.0
        %2650 = vmatpush.msra.mxu0 %v2480
        %2651 = vmatmul.f32.gmra.mxu0 %v2459
        %v2652 = vpop.f32.mrf.mxu0
        %v2653 = vadd.f32 0.0, %v2652
        %2654 = vdwg.mxu0
        %2655 = vmatpush.msra.mxu0 0.0
        %2656 = vmatpush.msra.mxu0 0.0
        %2657 = vmatpush.msra.mxu0 0.0
        %2658 = vmatpush.msra.mxu0 0.0
        %2659 = vmatpush.msra.mxu0 0.0
        %2660 = vmatpush.msra.mxu0 0.0
        %2661 = vmatpush.msra.mxu0 0.0
        %2662 = vmatpush.msra.mxu0 0.0
        %2663 = vmatpush.msra.mxu0 0.0
        %2664 = vmatpush.msra.mxu0 0.0
        %2665 = vmatpush.msra.mxu0 0.0
        %2666 = vmatpush.msra.mxu0 0.0
        %2667 = vmatpush.msra.mxu0 0.0
        %2668 = vmatpush.msra.mxu0 0.0
        %2669 = vmatpush.msra.mxu0 0.0
        %2670 = vmatpush.msra.mxu0 %v2483
        %2671 = vmatmul.f32.gmra.mxu0 %v2459
        %v2672 = vpop.f32.mrf.mxu0
        %v2673 = vadd.f32 0.0, %v2672
        %2674 = vdwg.mxu0
        %2675 = vmatpush.msra.mxu0 0.0
        %2676 = vmatpush.msra.mxu0 0.0
        %2677 = vmatpush.msra.mxu0 0.0
        %2678 = vmatpush.msra.mxu0 0.0
        %2679 = vmatpush.msra.mxu0 0.0
        %2680 = vmatpush.msra.mxu0 0.0
        %2681 = vmatpush.msra.mxu0 0.0
        %2682 = vmatpush.msra.mxu0 0.0
        %2683 = vmatpush.msra.mxu0 0.0
        %2684 = vmatpush.msra.mxu0 0.0
        %2685 = vmatpush.msra.mxu0 0.0
        %2686 = vmatpush.msra.mxu0 0.0
        %2687 = vmatpush.msra.mxu0 0.0
        %2688 = vmatpush.msra.mxu0 0.0
        %2689 = vmatpush.msra.mxu0 0.0
        %2690 = vmatpush.msra.mxu0 %v2486
        %2691 = vmatmul.f32.gmra.mxu0 %v2459
        %v2692 = vpop.f32.mrf.mxu0
        %v2693 = vadd.f32 0.0, %v2692
        %2694 = vdwg.mxu0
        %2695 = vmatpush.msra.mxu0 0.0
        %2696 = vmatpush.msra.mxu0 0.0
        %2697 = vmatpush.msra.mxu0 0.0
        %2698 = vmatpush.msra.mxu0 0.0
        %2699 = vmatpush.msra.mxu0 0.0
        %2700 = vmatpush.msra.mxu0 0.0
        %2701 = vmatpush.msra.mxu0 0.0
        %2702 = vmatpush.msra.mxu0 0.0
        %2703 = vmatpush.msra.mxu0 0.0
        %2704 = vmatpush.msra.mxu0 0.0
        %2705 = vmatpush.msra.mxu0 0.0
        %2706 = vmatpush.msra.mxu0 0.0
        %2707 = vmatpush.msra.mxu0 0.0
        %2708 = vmatpush.msra.mxu0 0.0
        %2709 = vmatpush.msra.mxu0 0.0
        %2710 = vmatpush.msra.mxu0 %v2489
        %2711 = vmatmul.f32.gmra.mxu0 %v2459
        %v2712 = vpop.f32.mrf.mxu0
        %v2713 = vadd.f32 0.0, %v2712
        %2714 = vdwg.mxu0
        %2715 = vmatpush.msra.mxu0 0.0
        %2716 = vmatpush.msra.mxu0 0.0
        %2717 = vmatpush.msra.mxu0 0.0
        %2718 = vmatpush.msra.mxu0 0.0
        %2719 = vmatpush.msra.mxu0 0.0
        %2720 = vmatpush.msra.mxu0 0.0
        %2721 = vmatpush.msra.mxu0 0.0
        %2722 = vmatpush.msra.mxu0 0.0
        %2723 = vmatpush.msra.mxu0 0.0
        %2724 = vmatpush.msra.mxu0 0.0
        %2725 = vmatpush.msra.mxu0 0.0
        %2726 = vmatpush.msra.mxu0 0.0
        %2727 = vmatpush.msra.mxu0 0.0
        %2728 = vmatpush.msra.mxu0 0.0
        %2729 = vmatpush.msra.mxu0 0.0
        %2730 = vmatpush.msra.mxu0 %v2492
        %2731 = vmatmul.f32.gmra.mxu0 %v2459
        %v2732 = vpop.f32.mrf.mxu0
        %v2733 = vadd.f32 0.0, %v2732
        %2734 = vdwg.mxu0
        %2735 = vmatpush.msra.mxu0 0.0
        %2736 = vmatpush.msra.mxu0 0.0
        %2737 = vmatpush.msra.mxu0 0.0
        %2738 = vmatpush.msra.mxu0 0.0
        %2739 = vmatpush.msra.mxu0 0.0
        %2740 = vmatpush.msra.mxu0 0.0
        %2741 = vmatpush.msra.mxu0 0.0
        %2742 = vmatpush.msra.mxu0 0.0
        %2743 = vmatpush.msra.mxu0 0.0
        %2744 = vmatpush.msra.mxu0 0.0
        %2745 = vmatpush.msra.mxu0 0.0
        %2746 = vmatpush.msra.mxu0 0.0
        %2747 = vmatpush.msra.mxu0 0.0
        %2748 = vmatpush.msra.mxu0 0.0
        %2749 = vmatpush.msra.mxu0 0.0
        %2750 = vmatpush.msra.mxu0 %v2495
        %2751 = vmatmul.f32.gmra.mxu0 %v2459
        %v2752 = vpop.f32.mrf.mxu0
        %v2753 = vadd.f32 0.0, %v2752
        %2754 = vdwg.mxu0
        %2755 = vmatpush.msra.mxu0 0.0
        %2756 = vmatpush.msra.mxu0 0.0
        %2757 = vmatpush.msra.mxu0 0.0
        %2758 = vmatpush.msra.mxu0 0.0
        %2759 = vmatpush.msra.mxu0 0.0
        %2760 = vmatpush.msra.mxu0 0.0
        %2761 = vmatpush.msra.mxu0 0.0
        %2762 = vmatpush.msra.mxu0 0.0
        %2763 = vmatpush.msra.mxu0 0.0
        %2764 = vmatpush.msra.mxu0 0.0
        %2765 = vmatpush.msra.mxu0 0.0
        %2766 = vmatpush.msra.mxu0 0.0
        %2767 = vmatpush.msra.mxu0 0.0
        %2768 = vmatpush.msra.mxu0 0.0
        %2769 = vmatpush.msra.mxu0 0.0
        %2770 = vmatpush.msra.mxu0 %v2498
        %2771 = vmatmul.f32.gmra.mxu0 %v2459
        %v2772 = vpop.f32.mrf.mxu0
        %v2773 = vadd.f32 0.0, %v2772
        %2774 = vdwg.mxu0
        %2775 = vmatpush.msra.mxu0 0.0
        %2776 = vmatpush.msra.mxu0 0.0
        %2777 = vmatpush.msra.mxu0 0.0
        %2778 = vmatpush.msra.mxu0 0.0
        %2779 = vmatpush.msra.mxu0 0.0
        %2780 = vmatpush.msra.mxu0 0.0
        %2781 = vmatpush.msra.mxu0 0.0
        %2782 = vmatpush.msra.mxu0 0.0
        %2783 = vmatpush.msra.mxu0 0.0
        %2784 = vmatpush.msra.mxu0 0.0
        %2785 = vmatpush.msra.mxu0 0.0
        %2786 = vmatpush.msra.mxu0 0.0
        %2787 = vmatpush.msra.mxu0 0.0
        %2788 = vmatpush.msra.mxu0 0.0
        %2789 = vmatpush.msra.mxu0 0.0
        %2790 = vmatpush.msra.mxu0 %v2501
        %2791 = vmatmul.f32.gmra.mxu0 %v2459
        %v2792 = vpop.f32.mrf.mxu0
        %v2793 = vadd.f32 0.0, %v2792
        %2794 = vdwg.mxu0
        %2795 = vmatpush.msra.mxu0 0.0
        %2796 = vmatpush.msra.mxu0 0.0
        %2797 = vmatpush.msra.mxu0 0.0
        %2798 = vmatpush.msra.mxu0 0.0
        %2799 = vmatpush.msra.mxu0 0.0
        %2800 = vmatpush.msra.mxu0 0.0
        %2801 = vmatpush.msra.mxu0 0.0
        %2802 = vmatpush.msra.mxu0 0.0
        %2803 = vmatpush.msra.mxu0 0.0
        %2804 = vmatpush.msra.mxu0 0.0
        %2805 = vmatpush.msra.mxu0 0.0
        %2806 = vmatpush.msra.mxu0 0.0
        %2807 = vmatpush.msra.mxu0 0.0
        %2808 = vmatpush.msra.mxu0 0.0
        %2809 = vmatpush.msra.mxu0 0.0
        %2810 = vmatpush.msra.mxu0 %v2504
        %2811 = vmatmul.f32.gmra.mxu0 %v2459
        %v2812 = vpop.f32.mrf.mxu0
        %v2813 = vadd.f32 0.0, %v2812
        %2814 = vdwg.mxu0
        %2815 = vmatpush.msra.mxu0 0.0
        %2816 = vmatpush.msra.mxu0 0.0
        %2817 = vmatpush.msra.mxu0 0.0
        %2818 = vmatpush.msra.mxu0 0.0
        %2819 = vmatpush.msra.mxu0 0.0
        %2820 = vmatpush.msra.mxu0 0.0
        %2821 = vmatpush.msra.mxu0 0.0
        %2822 = vmatpush.msra.mxu0 0.0
        %2823 = vmatpush.msra.mxu0 0.0
        %2824 = vmatpush.msra.mxu0 0.0
        %2825 = vmatpush.msra.mxu0 0.0
        %2826 = vmatpush.msra.mxu0 0.0
        %2827 = vmatpush.msra.mxu0 0.0
        %2828 = vmatpush.msra.mxu0 0.0
        %2829 = vmatpush.msra.mxu0 0.0
        %2830 = vmatpush.msra.mxu0 %v2507
        %2831 = vmatmul.f32.gmra.mxu0 %v2459
        %v2832 = vpop.f32.mrf.mxu0
        %v2833 = vadd.f32 0.0, %v2832
        %2834 = vdwg.mxu0
        %2835 = vmatpush.msra.mxu0 0.0
        %2836 = vmatpush.msra.mxu0 0.0
        %2837 = vmatpush.msra.mxu0 0.0
        %2838 = vmatpush.msra.mxu0 0.0
        %2839 = vmatpush.msra.mxu0 0.0
        %2840 = vmatpush.msra.mxu0 0.0
        %2841 = vmatpush.msra.mxu0 0.0
        %2842 = vmatpush.msra.mxu0 0.0
        %2843 = vmatpush.msra.mxu0 0.0
        %2844 = vmatpush.msra.mxu0 0.0
        %2845 = vmatpush.msra.mxu0 0.0
        %2846 = vmatpush.msra.mxu0 0.0
        %2847 = vmatpush.msra.mxu0 0.0
        %2848 = vmatpush.msra.mxu0 0.0
        %2849 = vmatpush.msra.mxu0 0.0
        %2850 = vmatpush.msra.mxu0 %v2510
        %2851 = vmatmul.f32.gmra.mxu0 %v2459
        %v2852 = vpop.f32.mrf.mxu0
        %v2853 = vadd.f32 0.0, %v2852
        %2854 = vdwg.mxu0
        %2855 = vmatpush.msra.mxu0 0.0
        %2856 = vmatpush.msra.mxu0 0.0
        %2857 = vmatpush.msra.mxu0 0.0
        %2858 = vmatpush.msra.mxu0 0.0
        %2859 = vmatpush.msra.mxu0 0.0
        %2860 = vmatpush.msra.mxu0 0.0
        %2861 = vmatpush.msra.mxu0 0.0
        %2862 = vmatpush.msra.mxu0 0.0
        %2863 = vmatpush.msra.mxu0 0.0
        %2864 = vmatpush.msra.mxu0 0.0
        %2865 = vmatpush.msra.mxu0 0.0
        %2866 = vmatpush.msra.mxu0 0.0
        %2867 = vmatpush.msra.mxu0 0.0
        %2868 = vmatpush.msra.mxu0 0.0
        %2869 = vmatpush.msra.mxu0 0.0
        %2870 = vmatpush.msra.mxu0 %v2513
        %2871 = vmatmul.f32.gmra.mxu0 %v2459
        %v2872 = vpop.f32.mrf.mxu0
        %v2873 = vadd.f32 0.0, %v2872
        %2874 = vdwg.mxu0
        %v2875 = vadd.f32 %v2299, %v2533
        %v2876 = vadd.f32 %v2300, %v2553
        %v2877 = vadd.f32 %v2301, %v2573
        %v2878 = vadd.f32 %v2302, %v2593
        %v2879 = vadd.f32 %v2303, %v2613
        %v2880 = vadd.f32 %v2304, %v2633
        %v2881 = vadd.f32 %v2305, %v2653
        %v2882 = vadd.f32 %v2306, %v2673
        %v2883 = vadd.f32 %v2307, %v2693
        %v2884 = vadd.f32 %v2308, %v2713
        %v2885 = vadd.f32 %v2309, %v2733
        %v2886 = vadd.f32 %v2310, %v2753
        %v2887 = vadd.f32 %v2311, %v2773
        %v2888 = vadd.f32 %v2312, %v2793
        %v2889 = vadd.f32 %v2313, %v2813
        %v2890 = vadd.f32 %v2314, %v2833
        %v2891 = vadd.f32 %v2315, %v2853
        %v2892 = vadd.f32 %v2316, %v2873
        %s2893 = scalar_lea.vmem %s273, 32 [#allocation2]
        %v2894 = vld [vmem:[%s2893] sm:$0xff]
        %2895 = vst [vmem:[#allocation1] ss:$2 sm:$0xff] %v314
        %s2896 = scalar_lea.vmem [#allocation1], 16
        %2897 = vst [vmem:[%s2896] ss:$2 sm:$0xff] %v315
        %s2898 = scalar_lea.vmem [#allocation1], 32
        %2899 = vst [vmem:[%s2898] ss:$2 sm:$0xff] %v316
        %s2900 = scalar_lea.vmem [#allocation1], 48
        %2901 = vst [vmem:[%s2900] ss:$2 sm:$0xff] %v317
        %v2902 = vld.sshfl [vmem:[#allocation1] sm:$0xff pattern:$0x75316420]
        %v2903 = vld.sshfl [vmem:[#allocation1 + $0x8] sm:$0xff pattern:$0x75316420]
        %v2904 = vld.sshfl [vmem:[#allocation1 + $0x10] sm:$0xff pattern:$0x75316420]
        %v2905 = vld.sshfl [vmem:[#allocation1 + $0x18] sm:$0xff pattern:$0x75316420]
        %v2906 = vld.sshfl [vmem:[#allocation1 + $0x20] sm:$0xff pattern:$0x75316420]
        %v2907 = vld.sshfl [vmem:[#allocation1 + $0x28] sm:$0xff pattern:$0x75316420]
        %v2908 = vld.sshfl [vmem:[#allocation1 + $0x30] sm:$0xff pattern:$0x75316420]
        %v2909 = vld.sshfl [vmem:[#allocation1 + $0x38] sm:$0xff pattern:$0x75316420]
        %2910 = vst [vmem:[#allocation1] ss:$2 sm:$0xff] %v318
        %2911 = vst [vmem:[%s2896] ss:$2 sm:$0xff] %v319
        %2912 = vst [vmem:[%s2898] ss:$2 sm:$0xff] %v320
        %2913 = vst [vmem:[%s2900] ss:$2 sm:$0xff] %v321
        %v2914 = vld.sshfl [vmem:[#allocation1] sm:$0xff pattern:$0x75316420]
        %v2915 = vld.sshfl [vmem:[#allocation1 + $0x8] sm:$0xff pattern:$0x75316420]
        %v2916 = vld.sshfl [vmem:[#allocation1 + $0x10] sm:$0xff pattern:$0x75316420]
        %v2917 = vld.sshfl [vmem:[#allocation1 + $0x18] sm:$0xff pattern:$0x75316420]
        %v2918 = vld.sshfl [vmem:[#allocation1 + $0x20] sm:$0xff pattern:$0x75316420]
        %v2919 = vld.sshfl [vmem:[#allocation1 + $0x28] sm:$0xff pattern:$0x75316420]
        %v2920 = vld.sshfl [vmem:[#allocation1 + $0x30] sm:$0xff pattern:$0x75316420]
        %v2921 = vld.sshfl [vmem:[#allocation1 + $0x38] sm:$0xff pattern:$0x75316420]
        %2922 = vst [vmem:[#allocation1] ss:$2 sm:$0xff] %v322
        %v2923 = vld.sshfl [vmem:[#allocation1] sm:$0xff pattern:$0x75316420]
        %v2924 = vld.sshfl [vmem:[#allocation1 + $0x8] sm:$0xff pattern:$0x75316420]
        %v2926 = vsel %vm614, %v2894, 0
        %v2928 = vsel %vm618, %v2902, 0
        %v2930 = vsel %vm618, %v2903, 0
        %v2932 = vsel %vm618, %v2904, 0
        %v2934 = vsel %vm618, %v2905, 0
        %v2936 = vsel %vm618, %v2906, 0
        %v2938 = vsel %vm618, %v2907, 0
        %v2940 = vsel %vm618, %v2908, 0
        %v2942 = vsel %vm618, %v2909, 0
        %v2944 = vsel %vm618, %v2914, 0
        %v2946 = vsel %vm618, %v2915, 0
        %v2948 = vsel %vm618, %v2916, 0
        %v2950 = vsel %vm618, %v2917, 0
        %v2952 = vsel %vm618, %v2918, 0
        %v2954 = vsel %vm618, %v2919, 0
        %v2956 = vsel %vm618, %v2920, 0
        %v2958 = vsel %vm618, %v2921, 0
        %v2960 = vsel %vm618, %v2923, 0
        %v2962 = vsel %vm618, %v2924, 0
        %2964 = vmatpush.msra.mxu0 0.0
        %2965 = vmatpush.msra.mxu0 0.0
        %2966 = vmatpush.msra.mxu0 0.0
        %2967 = vmatpush.msra.mxu0 0.0
        %2968 = vmatpush.msra.mxu0 0.0
        %2969 = vmatpush.msra.mxu0 0.0
        %2970 = vmatpush.msra.mxu0 0.0
        %2971 = vmatpush.msra.mxu0 0.0
        %2972 = vmatpush.msra.mxu0 0.0
        %2973 = vmatpush.msra.mxu0 0.0
        %2974 = vmatpush.msra.mxu0 0.0
        %2975 = vmatpush.msra.mxu0 0.0
        %2976 = vmatpush.msra.mxu0 0.0
        %2977 = vmatpush.msra.mxu0 0.0
        %2978 = vmatpush.msra.mxu0 0.0
        %2979 = vmatpush.msra.mxu0 %v2928
        %2980 = vmatmul.f32.gmra.mxu0 %v2926
        %v2981 = vpop.f32.mrf.mxu0
        %v2982 = vadd.f32 0.0, %v2981
        %2983 = vdwg.mxu0
        %2984 = vmatpush.msra.mxu0 0.0
        %2985 = vmatpush.msra.mxu0 0.0
        %2986 = vmatpush.msra.mxu0 0.0
        %2987 = vmatpush.msra.mxu0 0.0
        %2988 = vmatpush.msra.mxu0 0.0
        %2989 = vmatpush.msra.mxu0 0.0
        %2990 = vmatpush.msra.mxu0 0.0
        %2991 = vmatpush.msra.mxu0 0.0
        %2992 = vmatpush.msra.mxu0 0.0
        %2993 = vmatpush.msra.mxu0 0.0
        %2994 = vmatpush.msra.mxu0 0.0
        %2995 = vmatpush.msra.mxu0 0.0
        %2996 = vmatpush.msra.mxu0 0.0
        %2997 = vmatpush.msra.mxu0 0.0
        %2998 = vmatpush.msra.mxu0 0.0
        %2999 = vmatpush.msra.mxu0 %v2930
        %3000 = vmatmul.f32.gmra.mxu0 %v2926
        %v3001 = vpop.f32.mrf.mxu0
        %v3002 = vadd.f32 0.0, %v3001
        %3003 = vdwg.mxu0
        %3004 = vmatpush.msra.mxu0 0.0
        %3005 = vmatpush.msra.mxu0 0.0
        %3006 = vmatpush.msra.mxu0 0.0
        %3007 = vmatpush.msra.mxu0 0.0
        %3008 = vmatpush.msra.mxu0 0.0
        %3009 = vmatpush.msra.mxu0 0.0
        %3010 = vmatpush.msra.mxu0 0.0
        %3011 = vmatpush.msra.mxu0 0.0
        %3012 = vmatpush.msra.mxu0 0.0
        %3013 = vmatpush.msra.mxu0 0.0
        %3014 = vmatpush.msra.mxu0 0.0
        %3015 = vmatpush.msra.mxu0 0.0
        %3016 = vmatpush.msra.mxu0 0.0
        %3017 = vmatpush.msra.mxu0 0.0
        %3018 = vmatpush.msra.mxu0 0.0
        %3019 = vmatpush.msra.mxu0 %v2932
        %3020 = vmatmul.f32.gmra.mxu0 %v2926
        %v3021 = vpop.f32.mrf.mxu0
        %v3022 = vadd.f32 0.0, %v3021
        %3023 = vdwg.mxu0
        %3024 = vmatpush.msra.mxu0 0.0
        %3025 = vmatpush.msra.mxu0 0.0
        %3026 = vmatpush.msra.mxu0 0.0
        %3027 = vmatpush.msra.mxu0 0.0
        %3028 = vmatpush.msra.mxu0 0.0
        %3029 = vmatpush.msra.mxu0 0.0
        %3030 = vmatpush.msra.mxu0 0.0
        %3031 = vmatpush.msra.mxu0 0.0
        %3032 = vmatpush.msra.mxu0 0.0
        %3033 = vmatpush.msra.mxu0 0.0
        %3034 = vmatpush.msra.mxu0 0.0
        %3035 = vmatpush.msra.mxu0 0.0
        %3036 = vmatpush.msra.mxu0 0.0
        %3037 = vmatpush.msra.mxu0 0.0
        %3038 = vmatpush.msra.mxu0 0.0
        %3039 = vmatpush.msra.mxu0 %v2934
        %3040 = vmatmul.f32.gmra.mxu0 %v2926
        %v3041 = vpop.f32.mrf.mxu0
        %v3042 = vadd.f32 0.0, %v3041
        %3043 = vdwg.mxu0
        %3044 = vmatpush.msra.mxu0 0.0
        %3045 = vmatpush.msra.mxu0 0.0
        %3046 = vmatpush.msra.mxu0 0.0
        %3047 = vmatpush.msra.mxu0 0.0
        %3048 = vmatpush.msra.mxu0 0.0
        %3049 = vmatpush.msra.mxu0 0.0
        %3050 = vmatpush.msra.mxu0 0.0
        %3051 = vmatpush.msra.mxu0 0.0
        %3052 = vmatpush.msra.mxu0 0.0
        %3053 = vmatpush.msra.mxu0 0.0
        %3054 = vmatpush.msra.mxu0 0.0
        %3055 = vmatpush.msra.mxu0 0.0
        %3056 = vmatpush.msra.mxu0 0.0
        %3057 = vmatpush.msra.mxu0 0.0
        %3058 = vmatpush.msra.mxu0 0.0
        %3059 = vmatpush.msra.mxu0 %v2936
        %3060 = vmatmul.f32.gmra.mxu0 %v2926
        %v3061 = vpop.f32.mrf.mxu0
        %v3062 = vadd.f32 0.0, %v3061
        %3063 = vdwg.mxu0
        %3064 = vmatpush.msra.mxu0 0.0
        %3065 = vmatpush.msra.mxu0 0.0
        %3066 = vmatpush.msra.mxu0 0.0
        %3067 = vmatpush.msra.mxu0 0.0
        %3068 = vmatpush.msra.mxu0 0.0
        %3069 = vmatpush.msra.mxu0 0.0
        %3070 = vmatpush.msra.mxu0 0.0
        %3071 = vmatpush.msra.mxu0 0.0
        %3072 = vmatpush.msra.mxu0 0.0
        %3073 = vmatpush.msra.mxu0 0.0
        %3074 = vmatpush.msra.mxu0 0.0
        %3075 = vmatpush.msra.mxu0 0.0
        %3076 = vmatpush.msra.mxu0 0.0
        %3077 = vmatpush.msra.mxu0 0.0
        %3078 = vmatpush.msra.mxu0 0.0
        %3079 = vmatpush.msra.mxu0 %v2938
        %3080 = vmatmul.f32.gmra.mxu0 %v2926
        %v3081 = vpop.f32.mrf.mxu0
        %v3082 = vadd.f32 0.0, %v3081
        %3083 = vdwg.mxu0
        %3084 = vmatpush.msra.mxu0 0.0
        %3085 = vmatpush.msra.mxu0 0.0
        %3086 = vmatpush.msra.mxu0 0.0
        %3087 = vmatpush.msra.mxu0 0.0
        %3088 = vmatpush.msra.mxu0 0.0
        %3089 = vmatpush.msra.mxu0 0.0
        %3090 = vmatpush.msra.mxu0 0.0
        %3091 = vmatpush.msra.mxu0 0.0
        %3092 = vmatpush.msra.mxu0 0.0
        %3093 = vmatpush.msra.mxu0 0.0
        %3094 = vmatpush.msra.mxu0 0.0
        %3095 = vmatpush.msra.mxu0 0.0
        %3096 = vmatpush.msra.mxu0 0.0
        %3097 = vmatpush.msra.mxu0 0.0
        %3098 = vmatpush.msra.mxu0 0.0
        %3099 = vmatpush.msra.mxu0 %v2940
        %3100 = vmatmul.f32.gmra.mxu0 %v2926
        %v3101 = vpop.f32.mrf.mxu0
        %v3102 = vadd.f32 0.0, %v3101
        %3103 = vdwg.mxu0
        %3104 = vmatpush.msra.mxu0 0.0
        %3105 = vmatpush.msra.mxu0 0.0
        %3106 = vmatpush.msra.mxu0 0.0
        %3107 = vmatpush.msra.mxu0 0.0
        %3108 = vmatpush.msra.mxu0 0.0
        %3109 = vmatpush.msra.mxu0 0.0
        %3110 = vmatpush.msra.mxu0 0.0
        %3111 = vmatpush.msra.mxu0 0.0
        %3112 = vmatpush.msra.mxu0 0.0
        %3113 = vmatpush.msra.mxu0 0.0
        %3114 = vmatpush.msra.mxu0 0.0
        %3115 = vmatpush.msra.mxu0 0.0
        %3116 = vmatpush.msra.mxu0 0.0
        %3117 = vmatpush.msra.mxu0 0.0
        %3118 = vmatpush.msra.mxu0 0.0
        %3119 = vmatpush.msra.mxu0 %v2942
        %3120 = vmatmul.f32.gmra.mxu0 %v2926
        %v3121 = vpop.f32.mrf.mxu0
        %v3122 = vadd.f32 0.0, %v3121
        %3123 = vdwg.mxu0
        %3124 = vmatpush.msra.mxu0 0.0
        %3125 = vmatpush.msra.mxu0 0.0
        %3126 = vmatpush.msra.mxu0 0.0
        %3127 = vmatpush.msra.mxu0 0.0
        %3128 = vmatpush.msra.mxu0 0.0
        %3129 = vmatpush.msra.mxu0 0.0
        %3130 = vmatpush.msra.mxu0 0.0
        %3131 = vmatpush.msra.mxu0 0.0
        %3132 = vmatpush.msra.mxu0 0.0
        %3133 = vmatpush.msra.mxu0 0.0
        %3134 = vmatpush.msra.mxu0 0.0
        %3135 = vmatpush.msra.mxu0 0.0
        %3136 = vmatpush.msra.mxu0 0.0
        %3137 = vmatpush.msra.mxu0 0.0
        %3138 = vmatpush.msra.mxu0 0.0
        %3139 = vmatpush.msra.mxu0 %v2944
        %3140 = vmatmul.f32.gmra.mxu0 %v2926
        %v3141 = vpop.f32.mrf.mxu0
        %v3142 = vadd.f32 0.0, %v3141
        %3143 = vdwg.mxu0
        %3144 = vmatpush.msra.mxu0 0.0
        %3145 = vmatpush.msra.mxu0 0.0
        %3146 = vmatpush.msra.mxu0 0.0
        %3147 = vmatpush.msra.mxu0 0.0
        %3148 = vmatpush.msra.mxu0 0.0
        %3149 = vmatpush.msra.mxu0 0.0
        %3150 = vmatpush.msra.mxu0 0.0
        %3151 = vmatpush.msra.mxu0 0.0
        %3152 = vmatpush.msra.mxu0 0.0
        %3153 = vmatpush.msra.mxu0 0.0
        %3154 = vmatpush.msra.mxu0 0.0
        %3155 = vmatpush.msra.mxu0 0.0
        %3156 = vmatpush.msra.mxu0 0.0
        %3157 = vmatpush.msra.mxu0 0.0
        %3158 = vmatpush.msra.mxu0 0.0
        %3159 = vmatpush.msra.mxu0 %v2946
        %3160 = vmatmul.f32.gmra.mxu0 %v2926
        %v3161 = vpop.f32.mrf.mxu0
        %v3162 = vadd.f32 0.0, %v3161
        %3163 = vdwg.mxu0
        %3164 = vmatpush.msra.mxu0 0.0
        %3165 = vmatpush.msra.mxu0 0.0
        %3166 = vmatpush.msra.mxu0 0.0
        %3167 = vmatpush.msra.mxu0 0.0
        %3168 = vmatpush.msra.mxu0 0.0
        %3169 = vmatpush.msra.mxu0 0.0
        %3170 = vmatpush.msra.mxu0 0.0
        %3171 = vmatpush.msra.mxu0 0.0
        %3172 = vmatpush.msra.mxu0 0.0
        %3173 = vmatpush.msra.mxu0 0.0
        %3174 = vmatpush.msra.mxu0 0.0
        %3175 = vmatpush.msra.mxu0 0.0
        %3176 = vmatpush.msra.mxu0 0.0
        %3177 = vmatpush.msra.mxu0 0.0
        %3178 = vmatpush.msra.mxu0 0.0
        %3179 = vmatpush.msra.mxu0 %v2948
        %3180 = vmatmul.f32.gmra.mxu0 %v2926
        %v3181 = vpop.f32.mrf.mxu0
        %v3182 = vadd.f32 0.0, %v3181
        %3183 = vdwg.mxu0
        %3184 = vmatpush.msra.mxu0 0.0
        %3185 = vmatpush.msra.mxu0 0.0
        %3186 = vmatpush.msra.mxu0 0.0
        %3187 = vmatpush.msra.mxu0 0.0
        %3188 = vmatpush.msra.mxu0 0.0
        %3189 = vmatpush.msra.mxu0 0.0
        %3190 = vmatpush.msra.mxu0 0.0
        %3191 = vmatpush.msra.mxu0 0.0
        %3192 = vmatpush.msra.mxu0 0.0
        %3193 = vmatpush.msra.mxu0 0.0
        %3194 = vmatpush.msra.mxu0 0.0
        %3195 = vmatpush.msra.mxu0 0.0
        %3196 = vmatpush.msra.mxu0 0.0
        %3197 = vmatpush.msra.mxu0 0.0
        %3198 = vmatpush.msra.mxu0 0.0
        %3199 = vmatpush.msra.mxu0 %v2950
        %3200 = vmatmul.f32.gmra.mxu0 %v2926
        %v3201 = vpop.f32.mrf.mxu0
        %v3202 = vadd.f32 0.0, %v3201
        %3203 = vdwg.mxu0
        %3204 = vmatpush.msra.mxu0 0.0
        %3205 = vmatpush.msra.mxu0 0.0
        %3206 = vmatpush.msra.mxu0 0.0
        %3207 = vmatpush.msra.mxu0 0.0
        %3208 = vmatpush.msra.mxu0 0.0
        %3209 = vmatpush.msra.mxu0 0.0
        %3210 = vmatpush.msra.mxu0 0.0
        %3211 = vmatpush.msra.mxu0 0.0
        %3212 = vmatpush.msra.mxu0 0.0
        %3213 = vmatpush.msra.mxu0 0.0
        %3214 = vmatpush.msra.mxu0 0.0
        %3215 = vmatpush.msra.mxu0 0.0
        %3216 = vmatpush.msra.mxu0 0.0
        %3217 = vmatpush.msra.mxu0 0.0
        %3218 = vmatpush.msra.mxu0 0.0
        %3219 = vmatpush.msra.mxu0 %v2952
        %3220 = vmatmul.f32.gmra.mxu0 %v2926
        %v3221 = vpop.f32.mrf.mxu0
        %v3222 = vadd.f32 0.0, %v3221
        %3223 = vdwg.mxu0
        %3224 = vmatpush.msra.mxu0 0.0
        %3225 = vmatpush.msra.mxu0 0.0
        %3226 = vmatpush.msra.mxu0 0.0
        %3227 = vmatpush.msra.mxu0 0.0
        %3228 = vmatpush.msra.mxu0 0.0
        %3229 = vmatpush.msra.mxu0 0.0
        %3230 = vmatpush.msra.mxu0 0.0
        %3231 = vmatpush.msra.mxu0 0.0
        %3232 = vmatpush.msra.mxu0 0.0
        %3233 = vmatpush.msra.mxu0 0.0
        %3234 = vmatpush.msra.mxu0 0.0
        %3235 = vmatpush.msra.mxu0 0.0
        %3236 = vmatpush.msra.mxu0 0.0
        %3237 = vmatpush.msra.mxu0 0.0
        %3238 = vmatpush.msra.mxu0 0.0
        %3239 = vmatpush.msra.mxu0 %v2954
        %3240 = vmatmul.f32.gmra.mxu0 %v2926
        %v3241 = vpop.f32.mrf.mxu0
        %v3242 = vadd.f32 0.0, %v3241
        %3243 = vdwg.mxu0
        %3244 = vmatpush.msra.mxu0 0.0
        %3245 = vmatpush.msra.mxu0 0.0
        %3246 = vmatpush.msra.mxu0 0.0
        %3247 = vmatpush.msra.mxu0 0.0
        %3248 = vmatpush.msra.mxu0 0.0
        %3249 = vmatpush.msra.mxu0 0.0
        %3250 = vmatpush.msra.mxu0 0.0
        %3251 = vmatpush.msra.mxu0 0.0
        %3252 = vmatpush.msra.mxu0 0.0
        %3253 = vmatpush.msra.mxu0 0.0
        %3254 = vmatpush.msra.mxu0 0.0
        %3255 = vmatpush.msra.mxu0 0.0
        %3256 = vmatpush.msra.mxu0 0.0
        %3257 = vmatpush.msra.mxu0 0.0
        %3258 = vmatpush.msra.mxu0 0.0
        %3259 = vmatpush.msra.mxu0 %v2956
        %3260 = vmatmul.f32.gmra.mxu0 %v2926
        %v3261 = vpop.f32.mrf.mxu0
        %v3262 = vadd.f32 0.0, %v3261
        %3263 = vdwg.mxu0
        %3264 = vmatpush.msra.mxu0 0.0
        %3265 = vmatpush.msra.mxu0 0.0
        %3266 = vmatpush.msra.mxu0 0.0
        %3267 = vmatpush.msra.mxu0 0.0
        %3268 = vmatpush.msra.mxu0 0.0
        %3269 = vmatpush.msra.mxu0 0.0
        %3270 = vmatpush.msra.mxu0 0.0
        %3271 = vmatpush.msra.mxu0 0.0
        %3272 = vmatpush.msra.mxu0 0.0
        %3273 = vmatpush.msra.mxu0 0.0
        %3274 = vmatpush.msra.mxu0 0.0
        %3275 = vmatpush.msra.mxu0 0.0
        %3276 = vmatpush.msra.mxu0 0.0
        %3277 = vmatpush.msra.mxu0 0.0
        %3278 = vmatpush.msra.mxu0 0.0
        %3279 = vmatpush.msra.mxu0 %v2958
        %3280 = vmatmul.f32.gmra.mxu0 %v2926
        %v3281 = vpop.f32.mrf.mxu0
        %v3282 = vadd.f32 0.0, %v3281
        %3283 = vdwg.mxu0
        %3284 = vmatpush.msra.mxu0 0.0
        %3285 = vmatpush.msra.mxu0 0.0
        %3286 = vmatpush.msra.mxu0 0.0
        %3287 = vmatpush.msra.mxu0 0.0
        %3288 = vmatpush.msra.mxu0 0.0
        %3289 = vmatpush.msra.mxu0 0.0
        %3290 = vmatpush.msra.mxu0 0.0
        %3291 = vmatpush.msra.mxu0 0.0
        %3292 = vmatpush.msra.mxu0 0.0
        %3293 = vmatpush.msra.mxu0 0.0
        %3294 = vmatpush.msra.mxu0 0.0
        %3295 = vmatpush.msra.mxu0 0.0
        %3296 = vmatpush.msra.mxu0 0.0
        %3297 = vmatpush.msra.mxu0 0.0
        %3298 = vmatpush.msra.mxu0 0.0
        %3299 = vmatpush.msra.mxu0 %v2960
        %3300 = vmatmul.f32.gmra.mxu0 %v2926
        %v3301 = vpop.f32.mrf.mxu0
        %v3302 = vadd.f32 0.0, %v3301
        %3303 = vdwg.mxu0
        %3304 = vmatpush.msra.mxu0 0.0
        %3305 = vmatpush.msra.mxu0 0.0
        %3306 = vmatpush.msra.mxu0 0.0
        %3307 = vmatpush.msra.mxu0 0.0
        %3308 = vmatpush.msra.mxu0 0.0
        %3309 = vmatpush.msra.mxu0 0.0
        %3310 = vmatpush.msra.mxu0 0.0
        %3311 = vmatpush.msra.mxu0 0.0
        %3312 = vmatpush.msra.mxu0 0.0
        %3313 = vmatpush.msra.mxu0 0.0
        %3314 = vmatpush.msra.mxu0 0.0
        %3315 = vmatpush.msra.mxu0 0.0
        %3316 = vmatpush.msra.mxu0 0.0
        %3317 = vmatpush.msra.mxu0 0.0
        %3318 = vmatpush.msra.mxu0 0.0
        %3319 = vmatpush.msra.mxu0 %v2962
        %3320 = vmatmul.f32.gmra.mxu0 %v2926
        %v3321 = vpop.f32.mrf.mxu0
        %v3322 = vadd.f32 0.0, %v3321
        %3323 = vdwg.mxu0
        %v3324 = vadd.f32 %v2875, %v2982
        %v3325 = vadd.f32 %v2876, %v3002
        %v3326 = vadd.f32 %v2877, %v3022
        %v3327 = vadd.f32 %v2878, %v3042
        %v3328 = vadd.f32 %v2879, %v3062
        %v3329 = vadd.f32 %v2880, %v3082
        %v3330 = vadd.f32 %v2881, %v3102
        %v3331 = vadd.f32 %v2882, %v3122
        %v3332 = vadd.f32 %v2883, %v3142
        %v3333 = vadd.f32 %v2884, %v3162
        %v3334 = vadd.f32 %v2885, %v3182
        %v3335 = vadd.f32 %v2886, %v3202
        %v3336 = vadd.f32 %v2887, %v3222
        %v3337 = vadd.f32 %v2888, %v3242
        %v3338 = vadd.f32 %v2889, %v3262
        %v3339 = vadd.f32 %v2890, %v3282
        %v3340 = vadd.f32 %v2891, %v3302
        %v3341 = vadd.f32 %v2892, %v3322
        %3342 = vst [vmem:[#allocation1] ss:$2 sm:$0xff] %v314
        %s3343 = scalar_lea.vmem [#allocation1], 16
        %3344 = vst [vmem:[%s3343] ss:$2 sm:$0xff] %v315
        %s3345 = scalar_lea.vmem [#allocation1], 32
        %3346 = vst [vmem:[%s3345] ss:$2 sm:$0xff] %v316
        %s3347 = scalar_lea.vmem [#allocation1], 48
        %3348 = vst [vmem:[%s3347] ss:$2 sm:$0xff] %v317
        %v3349 = vld.sshfl [vmem:[#allocation1] sm:$0xff pattern:$0x75316420]
        %v3350 = vld.sshfl [vmem:[#allocation1 + $0x8] sm:$0xff pattern:$0x75316420]
        %v3351 = vld.sshfl [vmem:[#allocation1 + $0x10] sm:$0xff pattern:$0x75316420]
        %v3352 = vld.sshfl [vmem:[#allocation1 + $0x18] sm:$0xff pattern:$0x75316420]
        %v3353 = vld.sshfl [vmem:[#allocation1 + $0x20] sm:$0xff pattern:$0x75316420]
        %v3354 = vld.sshfl [vmem:[#allocation1 + $0x28] sm:$0xff pattern:$0x75316420]
        %v3355 = vld.sshfl [vmem:[#allocation1 + $0x30] sm:$0xff pattern:$0x75316420]
        %v3356 = vld.sshfl [vmem:[#allocation1 + $0x38] sm:$0xff pattern:$0x75316420]
        %3357 = vst [vmem:[#allocation1] ss:$2 sm:$0xff] %v318
        %3358 = vst [vmem:[%s3343] ss:$2 sm:$0xff] %v319
        %3359 = vst [vmem:[%s3345] ss:$2 sm:$0xff] %v320
        %3360 = vst [vmem:[%s3347] ss:$2 sm:$0xff] %v321
        %v3361 = vld.sshfl [vmem:[#allocation1] sm:$0xff pattern:$0x75316420]
        %v3362 = vld.sshfl [vmem:[#allocation1 + $0x8] sm:$0xff pattern:$0x75316420]
        %v3363 = vld.sshfl [vmem:[#allocation1 + $0x10] sm:$0xff pattern:$0x75316420]
        %v3364 = vld.sshfl [vmem:[#allocation1 + $0x18] sm:$0xff pattern:$0x75316420]
        %v3365 = vld.sshfl [vmem:[#allocation1 + $0x20] sm:$0xff pattern:$0x75316420]
        %v3366 = vld.sshfl [vmem:[#allocation1 + $0x28] sm:$0xff pattern:$0x75316420]
        %v3367 = vld.sshfl [vmem:[#allocation1 + $0x30] sm:$0xff pattern:$0x75316420]
        %v3368 = vld.sshfl [vmem:[#allocation1 + $0x38] sm:$0xff pattern:$0x75316420]
        %3369 = vst [vmem:[#allocation1] ss:$2 sm:$0xff] %v322
        %v3370 = vld.sshfl [vmem:[#allocation1] sm:$0xff pattern:$0x75316420]
        %v3371 = vld.sshfl [vmem:[#allocation1 + $0x8] sm:$0xff pattern:$0x75316420]
        %3390 = vrot.lane.b32.xlu0 %v3349, 127
        %v3391 = vpop.permute.xlu0 %3390
        %3392 = vrot.lane.b32.xlu0 %v3350, 127
        %v3393 = vpop.permute.xlu0 %3392
        %3394 = vrot.lane.b32.xlu0 %v3351, 127
        %v3395 = vpop.permute.xlu0 %3394
        %3396 = vrot.lane.b32.xlu0 %v3352, 127
        %v3397 = vpop.permute.xlu0 %3396
        %3398 = vrot.lane.b32.xlu0 %v3353, 127
        %v3399 = vpop.permute.xlu0 %3398
        %3400 = vrot.lane.b32.xlu0 %v3354, 127
        %v3401 = vpop.permute.xlu0 %3400
        %3402 = vrot.lane.b32.xlu0 %v3355, 127
        %v3403 = vpop.permute.xlu0 %3402
        %3404 = vrot.lane.b32.xlu0 %v3356, 127
        %v3405 = vpop.permute.xlu0 %3404
        %3406 = vrot.lane.b32.xlu0 %v3361, 127
        %v3407 = vpop.permute.xlu0 %3406
        %3408 = vrot.lane.b32.xlu0 %v3362, 127
        %v3409 = vpop.permute.xlu0 %3408
        %3410 = vrot.lane.b32.xlu0 %v3363, 127
        %v3411 = vpop.permute.xlu0 %3410
        %3412 = vrot.lane.b32.xlu0 %v3364, 127
        %v3413 = vpop.permute.xlu0 %3412
        %3414 = vrot.lane.b32.xlu0 %v3365, 127
        %v3415 = vpop.permute.xlu0 %3414
        %3416 = vrot.lane.b32.xlu0 %v3366, 127
        %v3417 = vpop.permute.xlu0 %3416
        %3418 = vrot.lane.b32.xlu0 %v3367, 127
        %v3419 = vpop.permute.xlu0 %3418
        %3420 = vrot.lane.b32.xlu0 %v3368, 127
        %v3421 = vpop.permute.xlu0 %3420
        %3422 = vrot.lane.b32.xlu0 %v3370, 127
        %v3423 = vpop.permute.xlu0 %3422
        %3424 = vrot.lane.b32.xlu0 %v3371, 127
        %v3425 = vpop.permute.xlu0 %3424
        %vm3426 = vcmp.lt.s32.totalorder %v327, 127
        %v3427 = vsel %vm3426, %v3423, %v3425
        %v3428 = vsel %vm3426, %v3421, %v3423
        %v3429 = vsel %vm3426, %v3419, %v3421
        %v3430 = vsel %vm3426, %v3417, %v3419
        %v3431 = vsel %vm3426, %v3415, %v3417
        %v3432 = vsel %vm3426, %v3413, %v3415
        %v3433 = vsel %vm3426, %v3411, %v3413
        %v3434 = vsel %vm3426, %v3409, %v3411
        %v3435 = vsel %vm3426, %v3407, %v3409
        %v3436 = vsel %vm3426, %v3405, %v3407
        %v3437 = vsel %vm3426, %v3403, %v3405
        %v3438 = vsel %vm3426, %v3401, %v3403
        %v3439 = vsel %vm3426, %v3399, %v3401
        %v3440 = vsel %vm3426, %v3397, %v3399
        %v3441 = vsel %vm3426, %v3395, %v3397
        %v3442 = vsel %vm3426, %v3393, %v3395
        %v3443 = vsel %vm3426, %v3391, %v3393
        %v3444 = vsel %vm3426, %v3425, %v3391
        %vm3445 = vcmp.eq.s32.totalorder %v1754, 1
        %vm3446 = vcmp.eq.s32.totalorder %v1755, 1
        %vm3447 = vcmp.eq.s32.totalorder %v1756, 1
        %vm3448 = vcmp.eq.s32.totalorder %v1757, 1
        %vm3449 = vcmp.eq.s32.totalorder %v1758, 1
        %vm3450 = vcmp.eq.s32.totalorder %v1759, 1
        %vm3451 = vcmp.eq.s32.totalorder %v1760, 1
        %vm3452 = vcmp.eq.s32.totalorder %v1761, 1
        %vm3453 = vcmp.eq.s32.totalorder %v1762, 1
        %vm3454 = vcmp.eq.s32.totalorder %v1763, 1
        %vm3455 = vcmp.eq.s32.totalorder %v1764, 1
        %vm3456 = vcmp.eq.s32.totalorder %v1765, 1
        %vm3457 = vcmp.eq.s32.totalorder %v1766, 1
        %vm3458 = vcmp.eq.s32.totalorder %v1767, 1
        %vm3459 = vcmp.eq.s32.totalorder %v1768, 1
        %vm3460 = vcmp.eq.s32.totalorder %v1769, 1
        %vm3461 = vcmp.eq.s32.totalorder %v1770, 1
        %vm3462 = vcmp.eq.s32.totalorder %v1771, 1
        %v3463 = vsel %vm3445, %v3443, 0.0
        %v3464 = vsel %vm3446, %v3442, 0.0
        %v3465 = vsel %vm3447, %v3441, 0.0
        %v3466 = vsel %vm3448, %v3440, 0.0
        %v3467 = vsel %vm3449, %v3439, 0.0
        %v3468 = vsel %vm3450, %v3438, 0.0
        %v3469 = vsel %vm3451, %v3437, 0.0
        %v3470 = vsel %vm3452, %v3436, 0.0
        %v3471 = vsel %vm3453, %v3435, 0.0
        %v3472 = vsel %vm3454, %v3434, 0.0
        %v3473 = vsel %vm3455, %v3433, 0.0
        %v3474 = vsel %vm3456, %v3432, 0.0
        %v3475 = vsel %vm3457, %v3431, 0.0
        %v3476 = vsel %vm3458, %v3430, 0.0
        %v3477 = vsel %vm3459, %v3429, 0.0
        %v3478 = vsel %vm3460, %v3428, 0.0
        %v3479 = vsel %vm3461, %v3427, 0.0
        %v3480 = vsel %vm3462, %v3444, 0.0
        %s3481 = scalar_lea.vmem %s273, 40 [#allocation2]
        %v3482 = vld [vmem:[%s3481] sm:$0xff]
        %v3484 = vsel %vm614, %v3482, 0
        %v3487 = vsel %vm618, %v3463, 0
        %v3490 = vsel %vm618, %v3464, 0
        %v3493 = vsel %vm618, %v3465, 0
        %v3496 = vsel %vm618, %v3466, 0
        %v3499 = vsel %vm618, %v3467, 0
        %v3502 = vsel %vm618, %v3468, 0
        %v3505 = vsel %vm618, %v3469, 0
        %v3508 = vsel %vm618, %v3470, 0
        %v3511 = vsel %vm618, %v3471, 0
        %v3514 = vsel %vm618, %v3472, 0
        %v3517 = vsel %vm618, %v3473, 0
        %v3520 = vsel %vm618, %v3474, 0
        %v3523 = vsel %vm618, %v3475, 0
        %v3526 = vsel %vm618, %v3476, 0
        %v3529 = vsel %vm618, %v3477, 0
        %v3532 = vsel %vm618, %v3478, 0
        %v3535 = vsel %vm618, %v3479, 0
        %v3538 = vsel %vm618, %v3480, 0
        %3540 = vmatpush.msra.mxu0 0.0
        %3541 = vmatpush.msra.mxu0 0.0
        %3542 = vmatpush.msra.mxu0 0.0
        %3543 = vmatpush.msra.mxu0 0.0
        %3544 = vmatpush.msra.mxu0 0.0
        %3545 = vmatpush.msra.mxu0 0.0
        %3546 = vmatpush.msra.mxu0 0.0
        %3547 = vmatpush.msra.mxu0 0.0
        %3548 = vmatpush.msra.mxu0 0.0
        %3549 = vmatpush.msra.mxu0 0.0
        %3550 = vmatpush.msra.mxu0 0.0
        %3551 = vmatpush.msra.mxu0 0.0
        %3552 = vmatpush.msra.mxu0 0.0
        %3553 = vmatpush.msra.mxu0 0.0
        %3554 = vmatpush.msra.mxu0 0.0
        %3555 = vmatpush.msra.mxu0 %v3487
        %3556 = vmatmul.f32.gmra.mxu0 %v3484
        %v3557 = vpop.f32.mrf.mxu0
        %v3558 = vadd.f32 0.0, %v3557
        %3559 = vdwg.mxu0
        %3560 = vmatpush.msra.mxu0 0.0
        %3561 = vmatpush.msra.mxu0 0.0
        %3562 = vmatpush.msra.mxu0 0.0
        %3563 = vmatpush.msra.mxu0 0.0
        %3564 = vmatpush.msra.mxu0 0.0
        %3565 = vmatpush.msra.mxu0 0.0
        %3566 = vmatpush.msra.mxu0 0.0
        %3567 = vmatpush.msra.mxu0 0.0
        %3568 = vmatpush.msra.mxu0 0.0
        %3569 = vmatpush.msra.mxu0 0.0
        %3570 = vmatpush.msra.mxu0 0.0
        %3571 = vmatpush.msra.mxu0 0.0
        %3572 = vmatpush.msra.mxu0 0.0
        %3573 = vmatpush.msra.mxu0 0.0
        %3574 = vmatpush.msra.mxu0 0.0
        %3575 = vmatpush.msra.mxu0 %v3490
        %3576 = vmatmul.f32.gmra.mxu0 %v3484
        %v3577 = vpop.f32.mrf.mxu0
        %v3578 = vadd.f32 0.0, %v3577
        %3579 = vdwg.mxu0
        %3580 = vmatpush.msra.mxu0 0.0
        %3581 = vmatpush.msra.mxu0 0.0
        %3582 = vmatpush.msra.mxu0 0.0
        %3583 = vmatpush.msra.mxu0 0.0
        %3584 = vmatpush.msra.mxu0 0.0
        %3585 = vmatpush.msra.mxu0 0.0
        %3586 = vmatpush.msra.mxu0 0.0
        %3587 = vmatpush.msra.mxu0 0.0
        %3588 = vmatpush.msra.mxu0 0.0
        %3589 = vmatpush.msra.mxu0 0.0
        %3590 = vmatpush.msra.mxu0 0.0
        %3591 = vmatpush.msra.mxu0 0.0
        %3592 = vmatpush.msra.mxu0 0.0
        %3593 = vmatpush.msra.mxu0 0.0
        %3594 = vmatpush.msra.mxu0 0.0
        %3595 = vmatpush.msra.mxu0 %v3493
        %3596 = vmatmul.f32.gmra.mxu0 %v3484
        %v3597 = vpop.f32.mrf.mxu0
        %v3598 = vadd.f32 0.0, %v3597
        %3599 = vdwg.mxu0
        %3600 = vmatpush.msra.mxu0 0.0
        %3601 = vmatpush.msra.mxu0 0.0
        %3602 = vmatpush.msra.mxu0 0.0
        %3603 = vmatpush.msra.mxu0 0.0
        %3604 = vmatpush.msra.mxu0 0.0
        %3605 = vmatpush.msra.mxu0 0.0
        %3606 = vmatpush.msra.mxu0 0.0
        %3607 = vmatpush.msra.mxu0 0.0
        %3608 = vmatpush.msra.mxu0 0.0
        %3609 = vmatpush.msra.mxu0 0.0
        %3610 = vmatpush.msra.mxu0 0.0
        %3611 = vmatpush.msra.mxu0 0.0
        %3612 = vmatpush.msra.mxu0 0.0
        %3613 = vmatpush.msra.mxu0 0.0
        %3614 = vmatpush.msra.mxu0 0.0
        %3615 = vmatpush.msra.mxu0 %v3496
        %3616 = vmatmul.f32.gmra.mxu0 %v3484
        %v3617 = vpop.f32.mrf.mxu0
        %v3618 = vadd.f32 0.0, %v3617
        %3619 = vdwg.mxu0
        %3620 = vmatpush.msra.mxu0 0.0
        %3621 = vmatpush.msra.mxu0 0.0
        %3622 = vmatpush.msra.mxu0 0.0
        %3623 = vmatpush.msra.mxu0 0.0
        %3624 = vmatpush.msra.mxu0 0.0
        %3625 = vmatpush.msra.mxu0 0.0
        %3626 = vmatpush.msra.mxu0 0.0
        %3627 = vmatpush.msra.mxu0 0.0
        %3628 = vmatpush.msra.mxu0 0.0
        %3629 = vmatpush.msra.mxu0 0.0
        %3630 = vmatpush.msra.mxu0 0.0
        %3631 = vmatpush.msra.mxu0 0.0
        %3632 = vmatpush.msra.mxu0 0.0
        %3633 = vmatpush.msra.mxu0 0.0
        %3634 = vmatpush.msra.mxu0 0.0
        %3635 = vmatpush.msra.mxu0 %v3499
        %3636 = vmatmul.f32.gmra.mxu0 %v3484
        %v3637 = vpop.f32.mrf.mxu0
        %v3638 = vadd.f32 0.0, %v3637
        %3639 = vdwg.mxu0
        %3640 = vmatpush.msra.mxu0 0.0
        %3641 = vmatpush.msra.mxu0 0.0
        %3642 = vmatpush.msra.mxu0 0.0
        %3643 = vmatpush.msra.mxu0 0.0
        %3644 = vmatpush.msra.mxu0 0.0
        %3645 = vmatpush.msra.mxu0 0.0
        %3646 = vmatpush.msra.mxu0 0.0
        %3647 = vmatpush.msra.mxu0 0.0
        %3648 = vmatpush.msra.mxu0 0.0
        %3649 = vmatpush.msra.mxu0 0.0
        %3650 = vmatpush.msra.mxu0 0.0
        %3651 = vmatpush.msra.mxu0 0.0
        %3652 = vmatpush.msra.mxu0 0.0
        %3653 = vmatpush.msra.mxu0 0.0
        %3654 = vmatpush.msra.mxu0 0.0
        %3655 = vmatpush.msra.mxu0 %v3502
        %3656 = vmatmul.f32.gmra.mxu0 %v3484
        %v3657 = vpop.f32.mrf.mxu0
        %v3658 = vadd.f32 0.0, %v3657
        %3659 = vdwg.mxu0
        %3660 = vmatpush.msra.mxu0 0.0
        %3661 = vmatpush.msra.mxu0 0.0
        %3662 = vmatpush.msra.mxu0 0.0
        %3663 = vmatpush.msra.mxu0 0.0
        %3664 = vmatpush.msra.mxu0 0.0
        %3665 = vmatpush.msra.mxu0 0.0
        %3666 = vmatpush.msra.mxu0 0.0
        %3667 = vmatpush.msra.mxu0 0.0
        %3668 = vmatpush.msra.mxu0 0.0
        %3669 = vmatpush.msra.mxu0 0.0
        %3670 = vmatpush.msra.mxu0 0.0
        %3671 = vmatpush.msra.mxu0 0.0
        %3672 = vmatpush.msra.mxu0 0.0
        %3673 = vmatpush.msra.mxu0 0.0
        %3674 = vmatpush.msra.mxu0 0.0
        %3675 = vmatpush.msra.mxu0 %v3505
        %3676 = vmatmul.f32.gmra.mxu0 %v3484
        %v3677 = vpop.f32.mrf.mxu0
        %v3678 = vadd.f32 0.0, %v3677
        %3679 = vdwg.mxu0
        %3680 = vmatpush.msra.mxu0 0.0
        %3681 = vmatpush.msra.mxu0 0.0
        %3682 = vmatpush.msra.mxu0 0.0
        %3683 = vmatpush.msra.mxu0 0.0
        %3684 = vmatpush.msra.mxu0 0.0
        %3685 = vmatpush.msra.mxu0 0.0
        %3686 = vmatpush.msra.mxu0 0.0
        %3687 = vmatpush.msra.mxu0 0.0
        %3688 = vmatpush.msra.mxu0 0.0
        %3689 = vmatpush.msra.mxu0 0.0
        %3690 = vmatpush.msra.mxu0 0.0
        %3691 = vmatpush.msra.mxu0 0.0
        %3692 = vmatpush.msra.mxu0 0.0
        %3693 = vmatpush.msra.mxu0 0.0
        %3694 = vmatpush.msra.mxu0 0.0
        %3695 = vmatpush.msra.mxu0 %v3508
        %3696 = vmatmul.f32.gmra.mxu0 %v3484
        %v3697 = vpop.f32.mrf.mxu0
        %v3698 = vadd.f32 0.0, %v3697
        %3699 = vdwg.mxu0
        %3700 = vmatpush.msra.mxu0 0.0
        %3701 = vmatpush.msra.mxu0 0.0
        %3702 = vmatpush.msra.mxu0 0.0
        %3703 = vmatpush.msra.mxu0 0.0
        %3704 = vmatpush.msra.mxu0 0.0
        %3705 = vmatpush.msra.mxu0 0.0
        %3706 = vmatpush.msra.mxu0 0.0
        %3707 = vmatpush.msra.mxu0 0.0
        %3708 = vmatpush.msra.mxu0 0.0
        %3709 = vmatpush.msra.mxu0 0.0
        %3710 = vmatpush.msra.mxu0 0.0
        %3711 = vmatpush.msra.mxu0 0.0
        %3712 = vmatpush.msra.mxu0 0.0
        %3713 = vmatpush.msra.mxu0 0.0
        %3714 = vmatpush.msra.mxu0 0.0
        %3715 = vmatpush.msra.mxu0 %v3511
        %3716 = vmatmul.f32.gmra.mxu0 %v3484
        %v3717 = vpop.f32.mrf.mxu0
        %v3718 = vadd.f32 0.0, %v3717
        %3719 = vdwg.mxu0
        %3720 = vmatpush.msra.mxu0 0.0
        %3721 = vmatpush.msra.mxu0 0.0
        %3722 = vmatpush.msra.mxu0 0.0
        %3723 = vmatpush.msra.mxu0 0.0
        %3724 = vmatpush.msra.mxu0 0.0
        %3725 = vmatpush.msra.mxu0 0.0
        %3726 = vmatpush.msra.mxu0 0.0
        %3727 = vmatpush.msra.mxu0 0.0
        %3728 = vmatpush.msra.mxu0 0.0
        %3729 = vmatpush.msra.mxu0 0.0
        %3730 = vmatpush.msra.mxu0 0.0
        %3731 = vmatpush.msra.mxu0 0.0
        %3732 = vmatpush.msra.mxu0 0.0
        %3733 = vmatpush.msra.mxu0 0.0
        %3734 = vmatpush.msra.mxu0 0.0
        %3735 = vmatpush.msra.mxu0 %v3514
        %3736 = vmatmul.f32.gmra.mxu0 %v3484
        %v3737 = vpop.f32.mrf.mxu0
        %v3738 = vadd.f32 0.0, %v3737
        %3739 = vdwg.mxu0
        %3740 = vmatpush.msra.mxu0 0.0
        %3741 = vmatpush.msra.mxu0 0.0
        %3742 = vmatpush.msra.mxu0 0.0
        %3743 = vmatpush.msra.mxu0 0.0
        %3744 = vmatpush.msra.mxu0 0.0
        %3745 = vmatpush.msra.mxu0 0.0
        %3746 = vmatpush.msra.mxu0 0.0
        %3747 = vmatpush.msra.mxu0 0.0
        %3748 = vmatpush.msra.mxu0 0.0
        %3749 = vmatpush.msra.mxu0 0.0
        %3750 = vmatpush.msra.mxu0 0.0
        %3751 = vmatpush.msra.mxu0 0.0
        %3752 = vmatpush.msra.mxu0 0.0
        %3753 = vmatpush.msra.mxu0 0.0
        %3754 = vmatpush.msra.mxu0 0.0
        %3755 = vmatpush.msra.mxu0 %v3517
        %3756 = vmatmul.f32.gmra.mxu0 %v3484
        %v3757 = vpop.f32.mrf.mxu0
        %v3758 = vadd.f32 0.0, %v3757
        %3759 = vdwg.mxu0
        %3760 = vmatpush.msra.mxu0 0.0
        %3761 = vmatpush.msra.mxu0 0.0
        %3762 = vmatpush.msra.mxu0 0.0
        %3763 = vmatpush.msra.mxu0 0.0
        %3764 = vmatpush.msra.mxu0 0.0
        %3765 = vmatpush.msra.mxu0 0.0
        %3766 = vmatpush.msra.mxu0 0.0
        %3767 = vmatpush.msra.mxu0 0.0
        %3768 = vmatpush.msra.mxu0 0.0
        %3769 = vmatpush.msra.mxu0 0.0
        %3770 = vmatpush.msra.mxu0 0.0
        %3771 = vmatpush.msra.mxu0 0.0
        %3772 = vmatpush.msra.mxu0 0.0
        %3773 = vmatpush.msra.mxu0 0.0
        %3774 = vmatpush.msra.mxu0 0.0
        %3775 = vmatpush.msra.mxu0 %v3520
        %3776 = vmatmul.f32.gmra.mxu0 %v3484
        %v3777 = vpop.f32.mrf.mxu0
        %v3778 = vadd.f32 0.0, %v3777
        %3779 = vdwg.mxu0
        %3780 = vmatpush.msra.mxu0 0.0
        %3781 = vmatpush.msra.mxu0 0.0
        %3782 = vmatpush.msra.mxu0 0.0
        %3783 = vmatpush.msra.mxu0 0.0
        %3784 = vmatpush.msra.mxu0 0.0
        %3785 = vmatpush.msra.mxu0 0.0
        %3786 = vmatpush.msra.mxu0 0.0
        %3787 = vmatpush.msra.mxu0 0.0
        %3788 = vmatpush.msra.mxu0 0.0
        %3789 = vmatpush.msra.mxu0 0.0
        %3790 = vmatpush.msra.mxu0 0.0
        %3791 = vmatpush.msra.mxu0 0.0
        %3792 = vmatpush.msra.mxu0 0.0
        %3793 = vmatpush.msra.mxu0 0.0
        %3794 = vmatpush.msra.mxu0 0.0
        %3795 = vmatpush.msra.mxu0 %v3523
        %3796 = vmatmul.f32.gmra.mxu0 %v3484
        %v3797 = vpop.f32.mrf.mxu0
        %v3798 = vadd.f32 0.0, %v3797
        %3799 = vdwg.mxu0
        %3800 = vmatpush.msra.mxu0 0.0
        %3801 = vmatpush.msra.mxu0 0.0
        %3802 = vmatpush.msra.mxu0 0.0
        %3803 = vmatpush.msra.mxu0 0.0
        %3804 = vmatpush.msra.mxu0 0.0
        %3805 = vmatpush.msra.mxu0 0.0
        %3806 = vmatpush.msra.mxu0 0.0
        %3807 = vmatpush.msra.mxu0 0.0
        %3808 = vmatpush.msra.mxu0 0.0
        %3809 = vmatpush.msra.mxu0 0.0
        %3810 = vmatpush.msra.mxu0 0.0
        %3811 = vmatpush.msra.mxu0 0.0
        %3812 = vmatpush.msra.mxu0 0.0
        %3813 = vmatpush.msra.mxu0 0.0
        %3814 = vmatpush.msra.mxu0 0.0
        %3815 = vmatpush.msra.mxu0 %v3526
        %3816 = vmatmul.f32.gmra.mxu0 %v3484
        %v3817 = vpop.f32.mrf.mxu0
        %v3818 = vadd.f32 0.0, %v3817
        %3819 = vdwg.mxu0
        %3820 = vmatpush.msra.mxu0 0.0
        %3821 = vmatpush.msra.mxu0 0.0
        %3822 = vmatpush.msra.mxu0 0.0
        %3823 = vmatpush.msra.mxu0 0.0
        %3824 = vmatpush.msra.mxu0 0.0
        %3825 = vmatpush.msra.mxu0 0.0
        %3826 = vmatpush.msra.mxu0 0.0
        %3827 = vmatpush.msra.mxu0 0.0
        %3828 = vmatpush.msra.mxu0 0.0
        %3829 = vmatpush.msra.mxu0 0.0
        %3830 = vmatpush.msra.mxu0 0.0
        %3831 = vmatpush.msra.mxu0 0.0
        %3832 = vmatpush.msra.mxu0 0.0
        %3833 = vmatpush.msra.mxu0 0.0
        %3834 = vmatpush.msra.mxu0 0.0
        %3835 = vmatpush.msra.mxu0 %v3529
        %3836 = vmatmul.f32.gmra.mxu0 %v3484
        %v3837 = vpop.f32.mrf.mxu0
        %v3838 = vadd.f32 0.0, %v3837
        %3839 = vdwg.mxu0
        %3840 = vmatpush.msra.mxu0 0.0
        %3841 = vmatpush.msra.mxu0 0.0
        %3842 = vmatpush.msra.mxu0 0.0
        %3843 = vmatpush.msra.mxu0 0.0
        %3844 = vmatpush.msra.mxu0 0.0
        %3845 = vmatpush.msra.mxu0 0.0
        %3846 = vmatpush.msra.mxu0 0.0
        %3847 = vmatpush.msra.mxu0 0.0
        %3848 = vmatpush.msra.mxu0 0.0
        %3849 = vmatpush.msra.mxu0 0.0
        %3850 = vmatpush.msra.mxu0 0.0
        %3851 = vmatpush.msra.mxu0 0.0
        %3852 = vmatpush.msra.mxu0 0.0
        %3853 = vmatpush.msra.mxu0 0.0
        %3854 = vmatpush.msra.mxu0 0.0
        %3855 = vmatpush.msra.mxu0 %v3532
        %3856 = vmatmul.f32.gmra.mxu0 %v3484
        %v3857 = vpop.f32.mrf.mxu0
        %v3858 = vadd.f32 0.0, %v3857
        %3859 = vdwg.mxu0
        %3860 = vmatpush.msra.mxu0 0.0
        %3861 = vmatpush.msra.mxu0 0.0
        %3862 = vmatpush.msra.mxu0 0.0
        %3863 = vmatpush.msra.mxu0 0.0
        %3864 = vmatpush.msra.mxu0 0.0
        %3865 = vmatpush.msra.mxu0 0.0
        %3866 = vmatpush.msra.mxu0 0.0
        %3867 = vmatpush.msra.mxu0 0.0
        %3868 = vmatpush.msra.mxu0 0.0
        %3869 = vmatpush.msra.mxu0 0.0
        %3870 = vmatpush.msra.mxu0 0.0
        %3871 = vmatpush.msra.mxu0 0.0
        %3872 = vmatpush.msra.mxu0 0.0
        %3873 = vmatpush.msra.mxu0 0.0
        %3874 = vmatpush.msra.mxu0 0.0
        %3875 = vmatpush.msra.mxu0 %v3535
        %3876 = vmatmul.f32.gmra.mxu0 %v3484
        %v3877 = vpop.f32.mrf.mxu0
        %v3878 = vadd.f32 0.0, %v3877
        %3879 = vdwg.mxu0
        %3880 = vmatpush.msra.mxu0 0.0
        %3881 = vmatpush.msra.mxu0 0.0
        %3882 = vmatpush.msra.mxu0 0.0
        %3883 = vmatpush.msra.mxu0 0.0
        %3884 = vmatpush.msra.mxu0 0.0
        %3885 = vmatpush.msra.mxu0 0.0
        %3886 = vmatpush.msra.mxu0 0.0
        %3887 = vmatpush.msra.mxu0 0.0
        %3888 = vmatpush.msra.mxu0 0.0
        %3889 = vmatpush.msra.mxu0 0.0
        %3890 = vmatpush.msra.mxu0 0.0
        %3891 = vmatpush.msra.mxu0 0.0
        %3892 = vmatpush.msra.mxu0 0.0
        %3893 = vmatpush.msra.mxu0 0.0
        %3894 = vmatpush.msra.mxu0 0.0
        %3895 = vmatpush.msra.mxu0 %v3538
        %3896 = vmatmul.f32.gmra.mxu0 %v3484
        %v3897 = vpop.f32.mrf.mxu0
        %v3898 = vadd.f32 0.0, %v3897
        %3899 = vdwg.mxu0
        %v3900 = vadd.f32 %v3324, %v3558
        %v3901 = vadd.f32 %v3325, %v3578
        %v3902 = vadd.f32 %v3326, %v3598
        %v3903 = vadd.f32 %v3327, %v3618
        %v3904 = vadd.f32 %v3328, %v3638
        %v3905 = vadd.f32 %v3329, %v3658
        %v3906 = vadd.f32 %v3330, %v3678
        %v3907 = vadd.f32 %v3331, %v3698
        %v3908 = vadd.f32 %v3332, %v3718
        %v3909 = vadd.f32 %v3333, %v3738
        %v3910 = vadd.f32 %v3334, %v3758
        %v3911 = vadd.f32 %v3335, %v3778
        %v3912 = vadd.f32 %v3336, %v3798
        %v3913 = vadd.f32 %v3337, %v3818
        %v3914 = vadd.f32 %v3338, %v3838
        %v3915 = vadd.f32 %v3339, %v3858
        %v3916 = vadd.f32 %v3340, %v3878
        %v3917 = vadd.f32 %v3341, %v3898
        %3918 = vst [vmem:[#allocation1] ss:$2 sm:$0xff] %v314
        %s3919 = scalar_lea.vmem [#allocation1], 16
        %3920 = vst [vmem:[%s3919] ss:$2 sm:$0xff] %v315
        %s3921 = scalar_lea.vmem [#allocation1], 32
        %3922 = vst [vmem:[%s3921] ss:$2 sm:$0xff] %v316
        %s3923 = scalar_lea.vmem [#allocation1], 48
        %3924 = vst [vmem:[%s3923] ss:$2 sm:$0xff] %v317
        %v3925 = vld.sshfl [vmem:[#allocation1] sm:$0xff pattern:$0x75316420]
        %v3926 = vld.sshfl [vmem:[#allocation1 + $0x8] sm:$0xff pattern:$0x75316420]
        %v3927 = vld.sshfl [vmem:[#allocation1 + $0x10] sm:$0xff pattern:$0x75316420]
        %v3928 = vld.sshfl [vmem:[#allocation1 + $0x18] sm:$0xff pattern:$0x75316420]
        %v3929 = vld.sshfl [vmem:[#allocation1 + $0x20] sm:$0xff pattern:$0x75316420]
        %v3930 = vld.sshfl [vmem:[#allocation1 + $0x28] sm:$0xff pattern:$0x75316420]
        %v3931 = vld.sshfl [vmem:[#allocation1 + $0x30] sm:$0xff pattern:$0x75316420]
        %v3932 = vld.sshfl [vmem:[#allocation1 + $0x38] sm:$0xff pattern:$0x75316420]
        %3933 = vst [vmem:[#allocation1] ss:$2 sm:$0xff] %v318
        %3934 = vst [vmem:[%s3919] ss:$2 sm:$0xff] %v319
        %3935 = vst [vmem:[%s3921] ss:$2 sm:$0xff] %v320
        %3936 = vst [vmem:[%s3923] ss:$2 sm:$0xff] %v321
        %v3937 = vld.sshfl [vmem:[#allocation1] sm:$0xff pattern:$0x75316420]
        %v3938 = vld.sshfl [vmem:[#allocation1 + $0x8] sm:$0xff pattern:$0x75316420]
        %v3939 = vld.sshfl [vmem:[#allocation1 + $0x10] sm:$0xff pattern:$0x75316420]
        %v3940 = vld.sshfl [vmem:[#allocation1 + $0x18] sm:$0xff pattern:$0x75316420]
        %v3941 = vld.sshfl [vmem:[#allocation1 + $0x20] sm:$0xff pattern:$0x75316420]
        %v3942 = vld.sshfl [vmem:[#allocation1 + $0x28] sm:$0xff pattern:$0x75316420]
        %v3943 = vld.sshfl [vmem:[#allocation1 + $0x30] sm:$0xff pattern:$0x75316420]
        %v3944 = vld.sshfl [vmem:[#allocation1 + $0x38] sm:$0xff pattern:$0x75316420]
        %3945 = vst [vmem:[#allocation1] ss:$2 sm:$0xff] %v322
        %v3946 = vld.sshfl [vmem:[#allocation1] sm:$0xff pattern:$0x75316420]
        %v3947 = vld.sshfl [vmem:[#allocation1 + $0x8] sm:$0xff pattern:$0x75316420]
        %3966 = vrot.lane.b32.xlu0 %v3925, 81
        %v3967 = vpop.permute.xlu0 %3966
        %3968 = vrot.lane.b32.xlu0 %v3926, 81
        %v3969 = vpop.permute.xlu0 %3968
        %3970 = vrot.lane.b32.xlu0 %v3927, 81
        %v3971 = vpop.permute.xlu0 %3970
        %3972 = vrot.lane.b32.xlu0 %v3928, 81
        %v3973 = vpop.permute.xlu0 %3972
        %3974 = vrot.lane.b32.xlu0 %v3929, 81
        %v3975 = vpop.permute.xlu0 %3974
        %3976 = vrot.lane.b32.xlu0 %v3930, 81
        %v3977 = vpop.permute.xlu0 %3976
        %3978 = vrot.lane.b32.xlu0 %v3931, 81
        %v3979 = vpop.permute.xlu0 %3978
        %3980 = vrot.lane.b32.xlu0 %v3932, 81
        %v3981 = vpop.permute.xlu0 %3980
        %3982 = vrot.lane.b32.xlu0 %v3937, 81
        %v3983 = vpop.permute.xlu0 %3982
        %3984 = vrot.lane.b32.xlu0 %v3938, 81
        %v3985 = vpop.permute.xlu0 %3984
        %3986 = vrot.lane.b32.xlu0 %v3939, 81
        %v3987 = vpop.permute.xlu0 %3986
        %3988 = vrot.lane.b32.xlu0 %v3940, 81
        %v3989 = vpop.permute.xlu0 %3988
        %3990 = vrot.lane.b32.xlu0 %v3941, 81
        %v3991 = vpop.permute.xlu0 %3990
        %3992 = vrot.lane.b32.xlu0 %v3942, 81
        %v3993 = vpop.permute.xlu0 %3992
        %3994 = vrot.lane.b32.xlu0 %v3943, 81
        %v3995 = vpop.permute.xlu0 %3994
        %3996 = vrot.lane.b32.xlu0 %v3944, 81
        %v3997 = vpop.permute.xlu0 %3996
        %3998 = vrot.lane.b32.xlu0 %v3946, 81
        %v3999 = vpop.permute.xlu0 %3998
        %4000 = vrot.lane.b32.xlu0 %v3947, 81
        %v4001 = vpop.permute.xlu0 %4000
        %vm4002 = vcmp.lt.s32.totalorder %v327, 81
        %v4003 = vsel %vm4002, %v3999, %v4001
        %v4004 = vsel %vm4002, %v3997, %v3999
        %v4005 = vsel %vm4002, %v3995, %v3997
        %v4006 = vsel %vm4002, %v3993, %v3995
        %v4007 = vsel %vm4002, %v3991, %v3993
        %v4008 = vsel %vm4002, %v3989, %v3991
        %v4009 = vsel %vm4002, %v3987, %v3989
        %v4010 = vsel %vm4002, %v3985, %v3987
        %v4011 = vsel %vm4002, %v3983, %v3985
        %v4012 = vsel %vm4002, %v3981, %v3983
        %v4013 = vsel %vm4002, %v3979, %v3981
        %v4014 = vsel %vm4002, %v3977, %v3979
        %v4015 = vsel %vm4002, %v3975, %v3977
        %v4016 = vsel %vm4002, %v3973, %v3975
        %v4017 = vsel %vm4002, %v3971, %v3973
        %v4018 = vsel %vm4002, %v3969, %v3971
        %v4019 = vsel %vm4002, %v3967, %v3969
        %v4020 = vsel %vm4002, %v4001, %v3967
        %vm4021 = vcmp.lt.s32.totalorder %v327, 2256
        %vm4022 = vcmp.lt.s32.totalorder %v328, 2256
        %vm4023 = vcmp.lt.s32.totalorder %v329, 2256
        %vm4024 = vcmp.lt.s32.totalorder %v330, 2256
        %vm4025 = vcmp.lt.s32.totalorder %v331, 2256
        %vm4026 = vcmp.lt.s32.totalorder %v332, 2256
        %vm4027 = vcmp.lt.s32.totalorder %v333, 2256
        %vm4028 = vcmp.lt.s32.totalorder %v334, 2256
        %vm4029 = vcmp.lt.s32.totalorder %v335, 2256
        %vm4030 = vcmp.lt.s32.totalorder %v336, 2256
        %vm4031 = vcmp.lt.s32.totalorder %v337, 2256
        %vm4032 = vcmp.lt.s32.totalorder %v338, 2256
        %vm4033 = vcmp.lt.s32.totalorder %v339, 2256
        %vm4034 = vcmp.lt.s32.totalorder %v340, 2256
        %vm4035 = vcmp.lt.s32.totalorder %v341, 2256
        %vm4036 = vcmp.lt.s32.totalorder %v342, 2256
        %vm4037 = vcmp.lt.s32.totalorder %v343, 2256
        %vm4038 = vcmp.lt.s32.totalorder %v344, 2256
        %vm4039 = vmand %vm4021, %vm505
        %vm4040 = vmand %vm4022, %vm506
        %vm4041 = vmand %vm4023, %vm507
        %vm4042 = vmand %vm4024, %vm508
        %vm4043 = vmand %vm4025, %vm509
        %vm4044 = vmand %vm4026, %vm510
        %vm4045 = vmand %vm4027, %vm511
        %vm4046 = vmand %vm4028, %vm512
        %vm4047 = vmand %vm4029, %vm513
        %vm4048 = vmand %vm4030, %vm514
        %vm4049 = vmand %vm4031, %vm515
        %vm4050 = vmand %vm4032, %vm516
        %vm4051 = vmand %vm4033, %vm517
        %vm4052 = vmand %vm4034, %vm518
        %vm4053 = vmand %vm4035, %vm519
        %vm4054 = vmand %vm4036, %vm520
        %vm4055 = vmand %vm4037, %vm521
        %vm4056 = vmand %vm4038, %vm522
        %v4057 = vsel %vm4039, 1, 0
        %v4058 = vsel %vm4040, 1, 0
        %v4059 = vsel %vm4041, 1, 0
        %v4060 = vsel %vm4042, 1, 0
        %v4061 = vsel %vm4043, 1, 0
        %v4062 = vsel %vm4044, 1, 0
        %v4063 = vsel %vm4045, 1, 0
        %v4064 = vsel %vm4046, 1, 0
        %v4065 = vsel %vm4047, 1, 0
        %v4066 = vsel %vm4048, 1, 0
        %v4067 = vsel %vm4049, 1, 0
        %v4068 = vsel %vm4050, 1, 0
        %v4069 = vsel %vm4051, 1, 0
        %v4070 = vsel %vm4052, 1, 0
        %v4071 = vsel %vm4053, 1, 0
        %v4072 = vsel %vm4054, 1, 0
        %v4073 = vsel %vm4055, 1, 0
        %v4074 = vsel %vm4056, 1, 0
        %v4075 = vperm.slane %v4057, 0
        %v4076 = vperm.slane %v4058, 0
        %v4077 = vperm.slane %v4059, 0
        %v4078 = vperm.slane %v4060, 0
        %v4079 = vperm.slane %v4061, 0
        %v4080 = vperm.slane %v4062, 0
        %v4081 = vperm.slane %v4063, 0
        %v4082 = vperm.slane %v4064, 0
        %v4083 = vperm.slane %v4065, 0
        %v4084 = vperm.slane %v4066, 0
        %v4085 = vperm.slane %v4067, 0
        %v4086 = vperm.slane %v4068, 0
        %v4087 = vperm.slane %v4069, 0
        %v4088 = vperm.slane %v4070, 0
        %v4089 = vperm.slane %v4071, 0
        %v4090 = vperm.slane %v4072, 0
        %v4091 = vperm.slane %v4073, 0
        %v4092 = vperm.slane %v4074, 0
        %vm4093 = vcmp.eq.s32.totalorder %v4075, 1
        %vm4094 = vcmp.eq.s32.totalorder %v4076, 1
        %vm4095 = vcmp.eq.s32.totalorder %v4077, 1
        %vm4096 = vcmp.eq.s32.totalorder %v4078, 1
        %vm4097 = vcmp.eq.s32.totalorder %v4079, 1
        %vm4098 = vcmp.eq.s32.totalorder %v4080, 1
        %vm4099 = vcmp.eq.s32.totalorder %v4081, 1
        %vm4100 = vcmp.eq.s32.totalorder %v4082, 1
        %vm4101 = vcmp.eq.s32.totalorder %v4083, 1
        %vm4102 = vcmp.eq.s32.totalorder %v4084, 1
        %vm4103 = vcmp.eq.s32.totalorder %v4085, 1
        %vm4104 = vcmp.eq.s32.totalorder %v4086, 1
        %vm4105 = vcmp.eq.s32.totalorder %v4087, 1
        %vm4106 = vcmp.eq.s32.totalorder %v4088, 1
        %vm4107 = vcmp.eq.s32.totalorder %v4089, 1
        %vm4108 = vcmp.eq.s32.totalorder %v4090, 1
        %vm4109 = vcmp.eq.s32.totalorder %v4091, 1
        %vm4110 = vcmp.eq.s32.totalorder %v4092, 1
        %v4111 = vsel %vm4093, %v4019, 0.0
        %v4112 = vsel %vm4094, %v4018, 0.0
        %v4113 = vsel %vm4095, %v4017, 0.0
        %v4114 = vsel %vm4096, %v4016, 0.0
        %v4115 = vsel %vm4097, %v4015, 0.0
        %v4116 = vsel %vm4098, %v4014, 0.0
        %v4117 = vsel %vm4099, %v4013, 0.0
        %v4118 = vsel %vm4100, %v4012, 0.0
        %v4119 = vsel %vm4101, %v4011, 0.0
        %v4120 = vsel %vm4102, %v4010, 0.0
        %v4121 = vsel %vm4103, %v4009, 0.0
        %v4122 = vsel %vm4104, %v4008, 0.0
        %v4123 = vsel %vm4105, %v4007, 0.0
        %v4124 = vsel %vm4106, %v4006, 0.0
        %v4125 = vsel %vm4107, %v4005, 0.0
        %v4126 = vsel %vm4108, %v4004, 0.0
        %v4127 = vsel %vm4109, %v4003, 0.0
        %v4128 = vsel %vm4110, %v4020, 0.0
        %s4129 = scalar_lea.vmem %s273, 48 [#allocation2]
        %v4130 = vld [vmem:[%s4129] sm:$0xff]
        %v4132 = vsel %vm614, %v4130, 0
        %v4135 = vsel %vm618, %v4111, 0
        %v4138 = vsel %vm618, %v4112, 0
        %v4141 = vsel %vm618, %v4113, 0
        %v4144 = vsel %vm618, %v4114, 0
        %v4147 = vsel %vm618, %v4115, 0
        %v4150 = vsel %vm618, %v4116, 0
        %v4153 = vsel %vm618, %v4117, 0
        %v4156 = vsel %vm618, %v4118, 0
        %v4159 = vsel %vm618, %v4119, 0
        %v4162 = vsel %vm618, %v4120, 0
        %v4165 = vsel %vm618, %v4121, 0
        %v4168 = vsel %vm618, %v4122, 0
        %v4171 = vsel %vm618, %v4123, 0
        %v4174 = vsel %vm618, %v4124, 0
        %v4177 = vsel %vm618, %v4125, 0
        %v4180 = vsel %vm618, %v4126, 0
        %v4183 = vsel %vm618, %v4127, 0
        %v4186 = vsel %vm618, %v4128, 0
        %4188 = vmatpush.msra.mxu0 0.0
        %4189 = vmatpush.msra.mxu0 0.0
        %4190 = vmatpush.msra.mxu0 0.0
        %4191 = vmatpush.msra.mxu0 0.0
        %4192 = vmatpush.msra.mxu0 0.0
        %4193 = vmatpush.msra.mxu0 0.0
        %4194 = vmatpush.msra.mxu0 0.0
        %4195 = vmatpush.msra.mxu0 0.0
        %4196 = vmatpush.msra.mxu0 0.0
        %4197 = vmatpush.msra.mxu0 0.0
        %4198 = vmatpush.msra.mxu0 0.0
        %4199 = vmatpush.msra.mxu0 0.0
        %4200 = vmatpush.msra.mxu0 0.0
        %4201 = vmatpush.msra.mxu0 0.0
        %4202 = vmatpush.msra.mxu0 0.0
        %4203 = vmatpush.msra.mxu0 %v4135
        %4204 = vmatmul.f32.gmra.mxu0 %v4132
        %v4205 = vpop.f32.mrf.mxu0
        %v4206 = vadd.f32 0.0, %v4205
        %4207 = vdwg.mxu0
        %4208 = vmatpush.msra.mxu0 0.0
        %4209 = vmatpush.msra.mxu0 0.0
        %4210 = vmatpush.msra.mxu0 0.0
        %4211 = vmatpush.msra.mxu0 0.0
        %4212 = vmatpush.msra.mxu0 0.0
        %4213 = vmatpush.msra.mxu0 0.0
        %4214 = vmatpush.msra.mxu0 0.0
        %4215 = vmatpush.msra.mxu0 0.0
        %4216 = vmatpush.msra.mxu0 0.0
        %4217 = vmatpush.msra.mxu0 0.0
        %4218 = vmatpush.msra.mxu0 0.0
        %4219 = vmatpush.msra.mxu0 0.0
        %4220 = vmatpush.msra.mxu0 0.0
        %4221 = vmatpush.msra.mxu0 0.0
        %4222 = vmatpush.msra.mxu0 0.0
        %4223 = vmatpush.msra.mxu0 %v4138
        %4224 = vmatmul.f32.gmra.mxu0 %v4132
        %v4225 = vpop.f32.mrf.mxu0
        %v4226 = vadd.f32 0.0, %v4225
        %4227 = vdwg.mxu0
        %4228 = vmatpush.msra.mxu0 0.0
        %4229 = vmatpush.msra.mxu0 0.0
        %4230 = vmatpush.msra.mxu0 0.0
        %4231 = vmatpush.msra.mxu0 0.0
        %4232 = vmatpush.msra.mxu0 0.0
        %4233 = vmatpush.msra.mxu0 0.0
        %4234 = vmatpush.msra.mxu0 0.0
        %4235 = vmatpush.msra.mxu0 0.0
        %4236 = vmatpush.msra.mxu0 0.0
        %4237 = vmatpush.msra.mxu0 0.0
        %4238 = vmatpush.msra.mxu0 0.0
        %4239 = vmatpush.msra.mxu0 0.0
        %4240 = vmatpush.msra.mxu0 0.0
        %4241 = vmatpush.msra.mxu0 0.0
        %4242 = vmatpush.msra.mxu0 0.0
        %4243 = vmatpush.msra.mxu0 %v4141
        %4244 = vmatmul.f32.gmra.mxu0 %v4132
        %v4245 = vpop.f32.mrf.mxu0
        %v4246 = vadd.f32 0.0, %v4245
        %4247 = vdwg.mxu0
        %4248 = vmatpush.msra.mxu0 0.0
        %4249 = vmatpush.msra.mxu0 0.0
        %4250 = vmatpush.msra.mxu0 0.0
        %4251 = vmatpush.msra.mxu0 0.0
        %4252 = vmatpush.msra.mxu0 0.0
        %4253 = vmatpush.msra.mxu0 0.0
        %4254 = vmatpush.msra.mxu0 0.0
        %4255 = vmatpush.msra.mxu0 0.0
        %4256 = vmatpush.msra.mxu0 0.0
        %4257 = vmatpush.msra.mxu0 0.0
        %4258 = vmatpush.msra.mxu0 0.0
        %4259 = vmatpush.msra.mxu0 0.0
        %4260 = vmatpush.msra.mxu0 0.0
        %4261 = vmatpush.msra.mxu0 0.0
        %4262 = vmatpush.msra.mxu0 0.0
        %4263 = vmatpush.msra.mxu0 %v4144
        %4264 = vmatmul.f32.gmra.mxu0 %v4132
        %v4265 = vpop.f32.mrf.mxu0
        %v4266 = vadd.f32 0.0, %v4265
        %4267 = vdwg.mxu0
        %4268 = vmatpush.msra.mxu0 0.0
        %4269 = vmatpush.msra.mxu0 0.0
        %4270 = vmatpush.msra.mxu0 0.0
        %4271 = vmatpush.msra.mxu0 0.0
        %4272 = vmatpush.msra.mxu0 0.0
        %4273 = vmatpush.msra.mxu0 0.0
        %4274 = vmatpush.msra.mxu0 0.0
        %4275 = vmatpush.msra.mxu0 0.0
        %4276 = vmatpush.msra.mxu0 0.0
        %4277 = vmatpush.msra.mxu0 0.0
        %4278 = vmatpush.msra.mxu0 0.0
        %4279 = vmatpush.msra.mxu0 0.0
        %4280 = vmatpush.msra.mxu0 0.0
        %4281 = vmatpush.msra.mxu0 0.0
        %4282 = vmatpush.msra.mxu0 0.0
        %4283 = vmatpush.msra.mxu0 %v4147
        %4284 = vmatmul.f32.gmra.mxu0 %v4132
        %v4285 = vpop.f32.mrf.mxu0
        %v4286 = vadd.f32 0.0, %v4285
        %4287 = vdwg.mxu0
        %4288 = vmatpush.msra.mxu0 0.0
        %4289 = vmatpush.msra.mxu0 0.0
        %4290 = vmatpush.msra.mxu0 0.0
        %4291 = vmatpush.msra.mxu0 0.0
        %4292 = vmatpush.msra.mxu0 0.0
        %4293 = vmatpush.msra.mxu0 0.0
        %4294 = vmatpush.msra.mxu0 0.0
        %4295 = vmatpush.msra.mxu0 0.0
        %4296 = vmatpush.msra.mxu0 0.0
        %4297 = vmatpush.msra.mxu0 0.0
        %4298 = vmatpush.msra.mxu0 0.0
        %4299 = vmatpush.msra.mxu0 0.0
        %4300 = vmatpush.msra.mxu0 0.0
        %4301 = vmatpush.msra.mxu0 0.0
        %4302 = vmatpush.msra.mxu0 0.0
        %4303 = vmatpush.msra.mxu0 %v4150
        %4304 = vmatmul.f32.gmra.mxu0 %v4132
        %v4305 = vpop.f32.mrf.mxu0
        %v4306 = vadd.f32 0.0, %v4305
        %4307 = vdwg.mxu0
        %4308 = vmatpush.msra.mxu0 0.0
        %4309 = vmatpush.msra.mxu0 0.0
        %4310 = vmatpush.msra.mxu0 0.0
        %4311 = vmatpush.msra.mxu0 0.0
        %4312 = vmatpush.msra.mxu0 0.0
        %4313 = vmatpush.msra.mxu0 0.0
        %4314 = vmatpush.msra.mxu0 0.0
        %4315 = vmatpush.msra.mxu0 0.0
        %4316 = vmatpush.msra.mxu0 0.0
        %4317 = vmatpush.msra.mxu0 0.0
        %4318 = vmatpush.msra.mxu0 0.0
        %4319 = vmatpush.msra.mxu0 0.0
        %4320 = vmatpush.msra.mxu0 0.0
        %4321 = vmatpush.msra.mxu0 0.0
        %4322 = vmatpush.msra.mxu0 0.0
        %4323 = vmatpush.msra.mxu0 %v4153
        %4324 = vmatmul.f32.gmra.mxu0 %v4132
        %v4325 = vpop.f32.mrf.mxu0
        %v4326 = vadd.f32 0.0, %v4325
        %4327 = vdwg.mxu0
        %4328 = vmatpush.msra.mxu0 0.0
        %4329 = vmatpush.msra.mxu0 0.0
        %4330 = vmatpush.msra.mxu0 0.0
        %4331 = vmatpush.msra.mxu0 0.0
        %4332 = vmatpush.msra.mxu0 0.0
        %4333 = vmatpush.msra.mxu0 0.0
        %4334 = vmatpush.msra.mxu0 0.0
        %4335 = vmatpush.msra.mxu0 0.0
        %4336 = vmatpush.msra.mxu0 0.0
        %4337 = vmatpush.msra.mxu0 0.0
        %4338 = vmatpush.msra.mxu0 0.0
        %4339 = vmatpush.msra.mxu0 0.0
        %4340 = vmatpush.msra.mxu0 0.0
        %4341 = vmatpush.msra.mxu0 0.0
        %4342 = vmatpush.msra.mxu0 0.0
        %4343 = vmatpush.msra.mxu0 %v4156
        %4344 = vmatmul.f32.gmra.mxu0 %v4132
        %v4345 = vpop.f32.mrf.mxu0
        %v4346 = vadd.f32 0.0, %v4345
        %4347 = vdwg.mxu0
        %4348 = vmatpush.msra.mxu0 0.0
        %4349 = vmatpush.msra.mxu0 0.0
        %4350 = vmatpush.msra.mxu0 0.0
        %4351 = vmatpush.msra.mxu0 0.0
        %4352 = vmatpush.msra.mxu0 0.0
        %4353 = vmatpush.msra.mxu0 0.0
        %4354 = vmatpush.msra.mxu0 0.0
        %4355 = vmatpush.msra.mxu0 0.0
        %4356 = vmatpush.msra.mxu0 0.0
        %4357 = vmatpush.msra.mxu0 0.0
        %4358 = vmatpush.msra.mxu0 0.0
        %4359 = vmatpush.msra.mxu0 0.0
        %4360 = vmatpush.msra.mxu0 0.0
        %4361 = vmatpush.msra.mxu0 0.0
        %4362 = vmatpush.msra.mxu0 0.0
        %4363 = vmatpush.msra.mxu0 %v4159
        %4364 = vmatmul.f32.gmra.mxu0 %v4132
        %v4365 = vpop.f32.mrf.mxu0
        %v4366 = vadd.f32 0.0, %v4365
        %4367 = vdwg.mxu0
        %4368 = vmatpush.msra.mxu0 0.0
        %4369 = vmatpush.msra.mxu0 0.0
        %4370 = vmatpush.msra.mxu0 0.0
        %4371 = vmatpush.msra.mxu0 0.0
        %4372 = vmatpush.msra.mxu0 0.0
        %4373 = vmatpush.msra.mxu0 0.0
        %4374 = vmatpush.msra.mxu0 0.0
        %4375 = vmatpush.msra.mxu0 0.0
        %4376 = vmatpush.msra.mxu0 0.0
        %4377 = vmatpush.msra.mxu0 0.0
        %4378 = vmatpush.msra.mxu0 0.0
        %4379 = vmatpush.msra.mxu0 0.0
        %4380 = vmatpush.msra.mxu0 0.0
        %4381 = vmatpush.msra.mxu0 0.0
        %4382 = vmatpush.msra.mxu0 0.0
        %4383 = vmatpush.msra.mxu0 %v4162
        %4384 = vmatmul.f32.gmra.mxu0 %v4132
        %v4385 = vpop.f32.mrf.mxu0
        %v4386 = vadd.f32 0.0, %v4385
        %4387 = vdwg.mxu0
        %4388 = vmatpush.msra.mxu0 0.0
        %4389 = vmatpush.msra.mxu0 0.0
        %4390 = vmatpush.msra.mxu0 0.0
        %4391 = vmatpush.msra.mxu0 0.0
        %4392 = vmatpush.msra.mxu0 0.0
        %4393 = vmatpush.msra.mxu0 0.0
        %4394 = vmatpush.msra.mxu0 0.0
        %4395 = vmatpush.msra.mxu0 0.0
        %4396 = vmatpush.msra.mxu0 0.0
        %4397 = vmatpush.msra.mxu0 0.0
        %4398 = vmatpush.msra.mxu0 0.0
        %4399 = vmatpush.msra.mxu0 0.0
        %4400 = vmatpush.msra.mxu0 0.0
        %4401 = vmatpush.msra.mxu0 0.0
        %4402 = vmatpush.msra.mxu0 0.0
        %4403 = vmatpush.msra.mxu0 %v4165
        %4404 = vmatmul.f32.gmra.mxu0 %v4132
        %v4405 = vpop.f32.mrf.mxu0
        %v4406 = vadd.f32 0.0, %v4405
        %4407 = vdwg.mxu0
        %4408 = vmatpush.msra.mxu0 0.0
        %4409 = vmatpush.msra.mxu0 0.0
        %4410 = vmatpush.msra.mxu0 0.0
        %4411 = vmatpush.msra.mxu0 0.0
        %4412 = vmatpush.msra.mxu0 0.0
        %4413 = vmatpush.msra.mxu0 0.0
        %4414 = vmatpush.msra.mxu0 0.0
        %4415 = vmatpush.msra.mxu0 0.0
        %4416 = vmatpush.msra.mxu0 0.0
        %4417 = vmatpush.msra.mxu0 0.0
        %4418 = vmatpush.msra.mxu0 0.0
        %4419 = vmatpush.msra.mxu0 0.0
        %4420 = vmatpush.msra.mxu0 0.0
        %4421 = vmatpush.msra.mxu0 0.0
        %4422 = vmatpush.msra.mxu0 0.0
        %4423 = vmatpush.msra.mxu0 %v4168
        %4424 = vmatmul.f32.gmra.mxu0 %v4132
        %v4425 = vpop.f32.mrf.mxu0
        %v4426 = vadd.f32 0.0, %v4425
        %4427 = vdwg.mxu0
        %4428 = vmatpush.msra.mxu0 0.0
        %4429 = vmatpush.msra.mxu0 0.0
        %4430 = vmatpush.msra.mxu0 0.0
        %4431 = vmatpush.msra.mxu0 0.0
        %4432 = vmatpush.msra.mxu0 0.0
        %4433 = vmatpush.msra.mxu0 0.0
        %4434 = vmatpush.msra.mxu0 0.0
        %4435 = vmatpush.msra.mxu0 0.0
        %4436 = vmatpush.msra.mxu0 0.0
        %4437 = vmatpush.msra.mxu0 0.0
        %4438 = vmatpush.msra.mxu0 0.0
        %4439 = vmatpush.msra.mxu0 0.0
        %4440 = vmatpush.msra.mxu0 0.0
        %4441 = vmatpush.msra.mxu0 0.0
        %4442 = vmatpush.msra.mxu0 0.0
        %4443 = vmatpush.msra.mxu0 %v4171
        %4444 = vmatmul.f32.gmra.mxu0 %v4132
        %v4445 = vpop.f32.mrf.mxu0
        %v4446 = vadd.f32 0.0, %v4445
        %4447 = vdwg.mxu0
        %4448 = vmatpush.msra.mxu0 0.0
        %4449 = vmatpush.msra.mxu0 0.0
        %4450 = vmatpush.msra.mxu0 0.0
        %4451 = vmatpush.msra.mxu0 0.0
        %4452 = vmatpush.msra.mxu0 0.0
        %4453 = vmatpush.msra.mxu0 0.0
        %4454 = vmatpush.msra.mxu0 0.0
        %4455 = vmatpush.msra.mxu0 0.0
        %4456 = vmatpush.msra.mxu0 0.0
        %4457 = vmatpush.msra.mxu0 0.0
        %4458 = vmatpush.msra.mxu0 0.0
        %4459 = vmatpush.msra.mxu0 0.0
        %4460 = vmatpush.msra.mxu0 0.0
        %4461 = vmatpush.msra.mxu0 0.0
        %4462 = vmatpush.msra.mxu0 0.0
        %4463 = vmatpush.msra.mxu0 %v4174
        %4464 = vmatmul.f32.gmra.mxu0 %v4132
        %v4465 = vpop.f32.mrf.mxu0
        %v4466 = vadd.f32 0.0, %v4465
        %4467 = vdwg.mxu0
        %4468 = vmatpush.msra.mxu0 0.0
        %4469 = vmatpush.msra.mxu0 0.0
        %4470 = vmatpush.msra.mxu0 0.0
        %4471 = vmatpush.msra.mxu0 0.0
        %4472 = vmatpush.msra.mxu0 0.0
        %4473 = vmatpush.msra.mxu0 0.0
        %4474 = vmatpush.msra.mxu0 0.0
        %4475 = vmatpush.msra.mxu0 0.0
        %4476 = vmatpush.msra.mxu0 0.0
        %4477 = vmatpush.msra.mxu0 0.0
        %4478 = vmatpush.msra.mxu0 0.0
        %4479 = vmatpush.msra.mxu0 0.0
        %4480 = vmatpush.msra.mxu0 0.0
        %4481 = vmatpush.msra.mxu0 0.0
        %4482 = vmatpush.msra.mxu0 0.0
        %4483 = vmatpush.msra.mxu0 %v4177
        %4484 = vmatmul.f32.gmra.mxu0 %v4132
        %v4485 = vpop.f32.mrf.mxu0
        %v4486 = vadd.f32 0.0, %v4485
        %4487 = vdwg.mxu0
        %4488 = vmatpush.msra.mxu0 0.0
        %4489 = vmatpush.msra.mxu0 0.0
        %4490 = vmatpush.msra.mxu0 0.0
        %4491 = vmatpush.msra.mxu0 0.0
        %4492 = vmatpush.msra.mxu0 0.0
        %4493 = vmatpush.msra.mxu0 0.0
        %4494 = vmatpush.msra.mxu0 0.0
        %4495 = vmatpush.msra.mxu0 0.0
        %4496 = vmatpush.msra.mxu0 0.0
        %4497 = vmatpush.msra.mxu0 0.0
        %4498 = vmatpush.msra.mxu0 0.0
        %4499 = vmatpush.msra.mxu0 0.0
        %4500 = vmatpush.msra.mxu0 0.0
        %4501 = vmatpush.msra.mxu0 0.0
        %4502 = vmatpush.msra.mxu0 0.0
        %4503 = vmatpush.msra.mxu0 %v4180
        %4504 = vmatmul.f32.gmra.mxu0 %v4132
        %v4505 = vpop.f32.mrf.mxu0
        %v4506 = vadd.f32 0.0, %v4505
        %4507 = vdwg.mxu0
        %4508 = vmatpush.msra.mxu0 0.0
        %4509 = vmatpush.msra.mxu0 0.0
        %4510 = vmatpush.msra.mxu0 0.0
        %4511 = vmatpush.msra.mxu0 0.0
        %4512 = vmatpush.msra.mxu0 0.0
        %4513 = vmatpush.msra.mxu0 0.0
        %4514 = vmatpush.msra.mxu0 0.0
        %4515 = vmatpush.msra.mxu0 0.0
        %4516 = vmatpush.msra.mxu0 0.0
        %4517 = vmatpush.msra.mxu0 0.0
        %4518 = vmatpush.msra.mxu0 0.0
        %4519 = vmatpush.msra.mxu0 0.0
        %4520 = vmatpush.msra.mxu0 0.0
        %4521 = vmatpush.msra.mxu0 0.0
        %4522 = vmatpush.msra.mxu0 0.0
        %4523 = vmatpush.msra.mxu0 %v4183
        %4524 = vmatmul.f32.gmra.mxu0 %v4132
        %v4525 = vpop.f32.mrf.mxu0
        %v4526 = vadd.f32 0.0, %v4525
        %4527 = vdwg.mxu0
        %4528 = vmatpush.msra.mxu0 0.0
        %4529 = vmatpush.msra.mxu0 0.0
        %4530 = vmatpush.msra.mxu0 0.0
        %4531 = vmatpush.msra.mxu0 0.0
        %4532 = vmatpush.msra.mxu0 0.0
        %4533 = vmatpush.msra.mxu0 0.0
        %4534 = vmatpush.msra.mxu0 0.0
        %4535 = vmatpush.msra.mxu0 0.0
        %4536 = vmatpush.msra.mxu0 0.0
        %4537 = vmatpush.msra.mxu0 0.0
        %4538 = vmatpush.msra.mxu0 0.0
        %4539 = vmatpush.msra.mxu0 0.0
        %4540 = vmatpush.msra.mxu0 0.0
        %4541 = vmatpush.msra.mxu0 0.0
        %4542 = vmatpush.msra.mxu0 0.0
        %4543 = vmatpush.msra.mxu0 %v4186
        %4544 = vmatmul.f32.gmra.mxu0 %v4132
        %v4545 = vpop.f32.mrf.mxu0
        %v4546 = vadd.f32 0.0, %v4545
        %4547 = vdwg.mxu0
        %v4548 = vadd.f32 %v3900, %v4206
        %v4549 = vadd.f32 %v3901, %v4226
        %v4550 = vadd.f32 %v3902, %v4246
        %v4551 = vadd.f32 %v3903, %v4266
        %v4552 = vadd.f32 %v3904, %v4286
        %v4553 = vadd.f32 %v3905, %v4306
        %v4554 = vadd.f32 %v3906, %v4326
        %v4555 = vadd.f32 %v3907, %v4346
        %v4556 = vadd.f32 %v3908, %v4366
        %v4557 = vadd.f32 %v3909, %v4386
        %v4558 = vadd.f32 %v3910, %v4406
        %v4559 = vadd.f32 %v3911, %v4426
        %v4560 = vadd.f32 %v3912, %v4446
        %v4561 = vadd.f32 %v3913, %v4466
        %v4562 = vadd.f32 %v3914, %v4486
        %v4563 = vadd.f32 %v3915, %v4506
        %v4564 = vadd.f32 %v3916, %v4526
        %v4565 = vadd.f32 %v3917, %v4546
        %4566 = vst [vmem:[#allocation1] ss:$2 sm:$0xff] %v314
        %s4567 = scalar_lea.vmem [#allocation1], 16
        %4568 = vst [vmem:[%s4567] ss:$2 sm:$0xff] %v315
        %s4569 = scalar_lea.vmem [#allocation1], 32
        %4570 = vst [vmem:[%s4569] ss:$2 sm:$0xff] %v316
        %s4571 = scalar_lea.vmem [#allocation1], 48
        %4572 = vst [vmem:[%s4571] ss:$2 sm:$0xff] %v317
        %v4573 = vld.sshfl [vmem:[#allocation1] sm:$0xff pattern:$0x75316420]
        %v4574 = vld.sshfl [vmem:[#allocation1 + $0x8] sm:$0xff pattern:$0x75316420]
        %v4575 = vld.sshfl [vmem:[#allocation1 + $0x10] sm:$0xff pattern:$0x75316420]
        %v4576 = vld.sshfl [vmem:[#allocation1 + $0x18] sm:$0xff pattern:$0x75316420]
        %v4577 = vld.sshfl [vmem:[#allocation1 + $0x20] sm:$0xff pattern:$0x75316420]
        %v4578 = vld.sshfl [vmem:[#allocation1 + $0x28] sm:$0xff pattern:$0x75316420]
        %v4579 = vld.sshfl [vmem:[#allocation1 + $0x30] sm:$0xff pattern:$0x75316420]
        %v4580 = vld.sshfl [vmem:[#allocation1 + $0x38] sm:$0xff pattern:$0x75316420]
        %4581 = vst [vmem:[#allocation1] ss:$2 sm:$0xff] %v318
        %4582 = vst [vmem:[%s4567] ss:$2 sm:$0xff] %v319
        %4583 = vst [vmem:[%s4569] ss:$2 sm:$0xff] %v320
        %4584 = vst [vmem:[%s4571] ss:$2 sm:$0xff] %v321
        %v4585 = vld.sshfl [vmem:[#allocation1] sm:$0xff pattern:$0x75316420]
        %v4586 = vld.sshfl [vmem:[#allocation1 + $0x8] sm:$0xff pattern:$0x75316420]
        %v4587 = vld.sshfl [vmem:[#allocation1 + $0x10] sm:$0xff pattern:$0x75316420]
        %v4588 = vld.sshfl [vmem:[#allocation1 + $0x18] sm:$0xff pattern:$0x75316420]
        %v4589 = vld.sshfl [vmem:[#allocation1 + $0x20] sm:$0xff pattern:$0x75316420]
        %v4590 = vld.sshfl [vmem:[#allocation1 + $0x28] sm:$0xff pattern:$0x75316420]
        %v4591 = vld.sshfl [vmem:[#allocation1 + $0x30] sm:$0xff pattern:$0x75316420]
        %v4592 = vld.sshfl [vmem:[#allocation1 + $0x38] sm:$0xff pattern:$0x75316420]
        %4593 = vst [vmem:[#allocation1] ss:$2 sm:$0xff] %v322
        %v4594 = vld.sshfl [vmem:[#allocation1] sm:$0xff pattern:$0x75316420]
        %v4595 = vld.sshfl [vmem:[#allocation1 + $0x8] sm:$0xff pattern:$0x75316420]
        %4614 = vrot.lane.b32.xlu0 %v4573, 80
        %v4615 = vpop.permute.xlu0 %4614
        %4616 = vrot.lane.b32.xlu0 %v4574, 80
        %v4617 = vpop.permute.xlu0 %4616
        %4618 = vrot.lane.b32.xlu0 %v4575, 80
        %v4619 = vpop.permute.xlu0 %4618
        %4620 = vrot.lane.b32.xlu0 %v4576, 80
        %v4621 = vpop.permute.xlu0 %4620
        %4622 = vrot.lane.b32.xlu0 %v4577, 80
        %v4623 = vpop.permute.xlu0 %4622
        %4624 = vrot.lane.b32.xlu0 %v4578, 80
        %v4625 = vpop.permute.xlu0 %4624
        %4626 = vrot.lane.b32.xlu0 %v4579, 80
        %v4627 = vpop.permute.xlu0 %4626
        %4628 = vrot.lane.b32.xlu0 %v4580, 80
        %v4629 = vpop.permute.xlu0 %4628
        %4630 = vrot.lane.b32.xlu0 %v4585, 80
        %v4631 = vpop.permute.xlu0 %4630
        %4632 = vrot.lane.b32.xlu0 %v4586, 80
        %v4633 = vpop.permute.xlu0 %4632
        %4634 = vrot.lane.b32.xlu0 %v4587, 80
        %v4635 = vpop.permute.xlu0 %4634
        %4636 = vrot.lane.b32.xlu0 %v4588, 80
        %v4637 = vpop.permute.xlu0 %4636
        %4638 = vrot.lane.b32.xlu0 %v4589, 80
        %v4639 = vpop.permute.xlu0 %4638
        %4640 = vrot.lane.b32.xlu0 %v4590, 80
        %v4641 = vpop.permute.xlu0 %4640
        %4642 = vrot.lane.b32.xlu0 %v4591, 80
        %v4643 = vpop.permute.xlu0 %4642
        %4644 = vrot.lane.b32.xlu0 %v4592, 80
        %v4645 = vpop.permute.xlu0 %4644
        %4646 = vrot.lane.b32.xlu0 %v4594, 80
        %v4647 = vpop.permute.xlu0 %4646
        %4648 = vrot.lane.b32.xlu0 %v4595, 80
        %v4649 = vpop.permute.xlu0 %4648
        %vm4650 = vcmp.lt.s32.totalorder %v327, 80
        %v4651 = vsel %vm4650, %v4647, %v4649
        %v4652 = vsel %vm4650, %v4645, %v4647
        %v4653 = vsel %vm4650, %v4643, %v4645
        %v4654 = vsel %vm4650, %v4641, %v4643
        %v4655 = vsel %vm4650, %v4639, %v4641
        %v4656 = vsel %vm4650, %v4637, %v4639
        %v4657 = vsel %vm4650, %v4635, %v4637
        %v4658 = vsel %vm4650, %v4633, %v4635
        %v4659 = vsel %vm4650, %v4631, %v4633
        %v4660 = vsel %vm4650, %v4629, %v4631
        %v4661 = vsel %vm4650, %v4627, %v4629
        %v4662 = vsel %vm4650, %v4625, %v4627
        %v4663 = vsel %vm4650, %v4623, %v4625
        %v4664 = vsel %vm4650, %v4621, %v4623
        %v4665 = vsel %vm4650, %v4619, %v4621
        %v4666 = vsel %vm4650, %v4617, %v4619
        %v4667 = vsel %vm4650, %v4615, %v4617
        %v4668 = vsel %vm4650, %v4649, %v4615
        %v4669 = vsel %vm4021, 1, 0
        %v4670 = vsel %vm4022, 1, 0
        %v4671 = vsel %vm4023, 1, 0
        %v4672 = vsel %vm4024, 1, 0
        %v4673 = vsel %vm4025, 1, 0
        %v4674 = vsel %vm4026, 1, 0
        %v4675 = vsel %vm4027, 1, 0
        %v4676 = vsel %vm4028, 1, 0
        %v4677 = vsel %vm4029, 1, 0
        %v4678 = vsel %vm4030, 1, 0
        %v4679 = vsel %vm4031, 1, 0
        %v4680 = vsel %vm4032, 1, 0
        %v4681 = vsel %vm4033, 1, 0
        %v4682 = vsel %vm4034, 1, 0
        %v4683 = vsel %vm4035, 1, 0
        %v4684 = vsel %vm4036, 1, 0
        %v4685 = vsel %vm4037, 1, 0
        %v4686 = vsel %vm4038, 1, 0
        %vm4687 = vcmp.eq.s32.totalorder %v4669, 1
        %vm4688 = vcmp.eq.s32.totalorder %v4670, 1
        %vm4689 = vcmp.eq.s32.totalorder %v4671, 1
        %vm4690 = vcmp.eq.s32.totalorder %v4672, 1
        %vm4691 = vcmp.eq.s32.totalorder %v4673, 1
        %vm4692 = vcmp.eq.s32.totalorder %v4674, 1
        %vm4693 = vcmp.eq.s32.totalorder %v4675, 1
        %vm4694 = vcmp.eq.s32.totalorder %v4676, 1
        %vm4695 = vcmp.eq.s32.totalorder %v4677, 1
        %vm4696 = vcmp.eq.s32.totalorder %v4678, 1
        %vm4697 = vcmp.eq.s32.totalorder %v4679, 1
        %vm4698 = vcmp.eq.s32.totalorder %v4680, 1
        %vm4699 = vcmp.eq.s32.totalorder %v4681, 1
        %vm4700 = vcmp.eq.s32.totalorder %v4682, 1
        %vm4701 = vcmp.eq.s32.totalorder %v4683, 1
        %vm4702 = vcmp.eq.s32.totalorder %v4684, 1
        %vm4703 = vcmp.eq.s32.totalorder %v4685, 1
        %vm4704 = vcmp.eq.s32.totalorder %v4686, 1
        %v4705 = vsel %vm4687, %v4667, 0.0
        %v4706 = vsel %vm4688, %v4666, 0.0
        %v4707 = vsel %vm4689, %v4665, 0.0
        %v4708 = vsel %vm4690, %v4664, 0.0
        %v4709 = vsel %vm4691, %v4663, 0.0
        %v4710 = vsel %vm4692, %v4662, 0.0
        %v4711 = vsel %vm4693, %v4661, 0.0
        %v4712 = vsel %vm4694, %v4660, 0.0
        %v4713 = vsel %vm4695, %v4659, 0.0
        %v4714 = vsel %vm4696, %v4658, 0.0
        %v4715 = vsel %vm4697, %v4657, 0.0
        %v4716 = vsel %vm4698, %v4656, 0.0
        %v4717 = vsel %vm4699, %v4655, 0.0
        %v4718 = vsel %vm4700, %v4654, 0.0
        %v4719 = vsel %vm4701, %v4653, 0.0
        %v4720 = vsel %vm4702, %v4652, 0.0
        %v4721 = vsel %vm4703, %v4651, 0.0
        %v4722 = vsel %vm4704, %v4668, 0.0
        %s4723 = scalar_lea.vmem %s273, 56 [#allocation2]
        %v4724 = vld [vmem:[%s4723] sm:$0xff]
        %v4726 = vsel %vm614, %v4724, 0
        %v4729 = vsel %vm618, %v4705, 0
        %v4732 = vsel %vm618, %v4706, 0
        %v4735 = vsel %vm618, %v4707, 0
        %v4738 = vsel %vm618, %v4708, 0
        %v4741 = vsel %vm618, %v4709, 0
        %v4744 = vsel %vm618, %v4710, 0
        %v4747 = vsel %vm618, %v4711, 0
        %v4750 = vsel %vm618, %v4712, 0
        %v4753 = vsel %vm618, %v4713, 0
        %v4756 = vsel %vm618, %v4714, 0
        %v4759 = vsel %vm618, %v4715, 0
        %v4762 = vsel %vm618, %v4716, 0
        %v4765 = vsel %vm618, %v4717, 0
        %v4768 = vsel %vm618, %v4718, 0
        %v4771 = vsel %vm618, %v4719, 0
        %v4774 = vsel %vm618, %v4720, 0
        %v4777 = vsel %vm618, %v4721, 0
        %v4780 = vsel %vm618, %v4722, 0
        %4782 = vmatpush.msra.mxu0 0.0
        %4783 = vmatpush.msra.mxu0 0.0
        %4784 = vmatpush.msra.mxu0 0.0
        %4785 = vmatpush.msra.mxu0 0.0
        %4786 = vmatpush.msra.mxu0 0.0
        %4787 = vmatpush.msra.mxu0 0.0
        %4788 = vmatpush.msra.mxu0 0.0
        %4789 = vmatpush.msra.mxu0 0.0
        %4790 = vmatpush.msra.mxu0 0.0
        %4791 = vmatpush.msra.mxu0 0.0
        %4792 = vmatpush.msra.mxu0 0.0
        %4793 = vmatpush.msra.mxu0 0.0
        %4794 = vmatpush.msra.mxu0 0.0
        %4795 = vmatpush.msra.mxu0 0.0
        %4796 = vmatpush.msra.mxu0 0.0
        %4797 = vmatpush.msra.mxu0 %v4729
        %4798 = vmatmul.f32.gmra.mxu0 %v4726
        %v4799 = vpop.f32.mrf.mxu0
        %v4800 = vadd.f32 0.0, %v4799
        %4801 = vdwg.mxu0
        %4802 = vmatpush.msra.mxu0 0.0
        %4803 = vmatpush.msra.mxu0 0.0
        %4804 = vmatpush.msra.mxu0 0.0
        %4805 = vmatpush.msra.mxu0 0.0
        %4806 = vmatpush.msra.mxu0 0.0
        %4807 = vmatpush.msra.mxu0 0.0
        %4808 = vmatpush.msra.mxu0 0.0
        %4809 = vmatpush.msra.mxu0 0.0
        %4810 = vmatpush.msra.mxu0 0.0
        %4811 = vmatpush.msra.mxu0 0.0
        %4812 = vmatpush.msra.mxu0 0.0
        %4813 = vmatpush.msra.mxu0 0.0
        %4814 = vmatpush.msra.mxu0 0.0
        %4815 = vmatpush.msra.mxu0 0.0
        %4816 = vmatpush.msra.mxu0 0.0
        %4817 = vmatpush.msra.mxu0 %v4732
        %4818 = vmatmul.f32.gmra.mxu0 %v4726
        %v4819 = vpop.f32.mrf.mxu0
        %v4820 = vadd.f32 0.0, %v4819
        %4821 = vdwg.mxu0
        %4822 = vmatpush.msra.mxu0 0.0
        %4823 = vmatpush.msra.mxu0 0.0
        %4824 = vmatpush.msra.mxu0 0.0
        %4825 = vmatpush.msra.mxu0 0.0
        %4826 = vmatpush.msra.mxu0 0.0
        %4827 = vmatpush.msra.mxu0 0.0
        %4828 = vmatpush.msra.mxu0 0.0
        %4829 = vmatpush.msra.mxu0 0.0
        %4830 = vmatpush.msra.mxu0 0.0
        %4831 = vmatpush.msra.mxu0 0.0
        %4832 = vmatpush.msra.mxu0 0.0
        %4833 = vmatpush.msra.mxu0 0.0
        %4834 = vmatpush.msra.mxu0 0.0
        %4835 = vmatpush.msra.mxu0 0.0
        %4836 = vmatpush.msra.mxu0 0.0
        %4837 = vmatpush.msra.mxu0 %v4735
        %4838 = vmatmul.f32.gmra.mxu0 %v4726
        %v4839 = vpop.f32.mrf.mxu0
        %v4840 = vadd.f32 0.0, %v4839
        %4841 = vdwg.mxu0
        %4842 = vmatpush.msra.mxu0 0.0
        %4843 = vmatpush.msra.mxu0 0.0
        %4844 = vmatpush.msra.mxu0 0.0
        %4845 = vmatpush.msra.mxu0 0.0
        %4846 = vmatpush.msra.mxu0 0.0
        %4847 = vmatpush.msra.mxu0 0.0
        %4848 = vmatpush.msra.mxu0 0.0
        %4849 = vmatpush.msra.mxu0 0.0
        %4850 = vmatpush.msra.mxu0 0.0
        %4851 = vmatpush.msra.mxu0 0.0
        %4852 = vmatpush.msra.mxu0 0.0
        %4853 = vmatpush.msra.mxu0 0.0
        %4854 = vmatpush.msra.mxu0 0.0
        %4855 = vmatpush.msra.mxu0 0.0
        %4856 = vmatpush.msra.mxu0 0.0
        %4857 = vmatpush.msra.mxu0 %v4738
        %4858 = vmatmul.f32.gmra.mxu0 %v4726
        %v4859 = vpop.f32.mrf.mxu0
        %v4860 = vadd.f32 0.0, %v4859
        %4861 = vdwg.mxu0
        %4862 = vmatpush.msra.mxu0 0.0
        %4863 = vmatpush.msra.mxu0 0.0
        %4864 = vmatpush.msra.mxu0 0.0
        %4865 = vmatpush.msra.mxu0 0.0
        %4866 = vmatpush.msra.mxu0 0.0
        %4867 = vmatpush.msra.mxu0 0.0
        %4868 = vmatpush.msra.mxu0 0.0
        %4869 = vmatpush.msra.mxu0 0.0
        %4870 = vmatpush.msra.mxu0 0.0
        %4871 = vmatpush.msra.mxu0 0.0
        %4872 = vmatpush.msra.mxu0 0.0
        %4873 = vmatpush.msra.mxu0 0.0
        %4874 = vmatpush.msra.mxu0 0.0
        %4875 = vmatpush.msra.mxu0 0.0
        %4876 = vmatpush.msra.mxu0 0.0
        %4877 = vmatpush.msra.mxu0 %v4741
        %4878 = vmatmul.f32.gmra.mxu0 %v4726
        %v4879 = vpop.f32.mrf.mxu0
        %v4880 = vadd.f32 0.0, %v4879
        %4881 = vdwg.mxu0
        %4882 = vmatpush.msra.mxu0 0.0
        %4883 = vmatpush.msra.mxu0 0.0
        %4884 = vmatpush.msra.mxu0 0.0
        %4885 = vmatpush.msra.mxu0 0.0
        %4886 = vmatpush.msra.mxu0 0.0
        %4887 = vmatpush.msra.mxu0 0.0
        %4888 = vmatpush.msra.mxu0 0.0
        %4889 = vmatpush.msra.mxu0 0.0
        %4890 = vmatpush.msra.mxu0 0.0
        %4891 = vmatpush.msra.mxu0 0.0
        %4892 = vmatpush.msra.mxu0 0.0
        %4893 = vmatpush.msra.mxu0 0.0
        %4894 = vmatpush.msra.mxu0 0.0
        %4895 = vmatpush.msra.mxu0 0.0
        %4896 = vmatpush.msra.mxu0 0.0
        %4897 = vmatpush.msra.mxu0 %v4744
        %4898 = vmatmul.f32.gmra.mxu0 %v4726
        %v4899 = vpop.f32.mrf.mxu0
        %v4900 = vadd.f32 0.0, %v4899
        %4901 = vdwg.mxu0
        %4902 = vmatpush.msra.mxu0 0.0
        %4903 = vmatpush.msra.mxu0 0.0
        %4904 = vmatpush.msra.mxu0 0.0
        %4905 = vmatpush.msra.mxu0 0.0
        %4906 = vmatpush.msra.mxu0 0.0
        %4907 = vmatpush.msra.mxu0 0.0
        %4908 = vmatpush.msra.mxu0 0.0
        %4909 = vmatpush.msra.mxu0 0.0
        %4910 = vmatpush.msra.mxu0 0.0
        %4911 = vmatpush.msra.mxu0 0.0
        %4912 = vmatpush.msra.mxu0 0.0
        %4913 = vmatpush.msra.mxu0 0.0
        %4914 = vmatpush.msra.mxu0 0.0
        %4915 = vmatpush.msra.mxu0 0.0
        %4916 = vmatpush.msra.mxu0 0.0
        %4917 = vmatpush.msra.mxu0 %v4747
        %4918 = vmatmul.f32.gmra.mxu0 %v4726
        %v4919 = vpop.f32.mrf.mxu0
        %v4920 = vadd.f32 0.0, %v4919
        %4921 = vdwg.mxu0
        %4922 = vmatpush.msra.mxu0 0.0
        %4923 = vmatpush.msra.mxu0 0.0
        %4924 = vmatpush.msra.mxu0 0.0
        %4925 = vmatpush.msra.mxu0 0.0
        %4926 = vmatpush.msra.mxu0 0.0
        %4927 = vmatpush.msra.mxu0 0.0
        %4928 = vmatpush.msra.mxu0 0.0
        %4929 = vmatpush.msra.mxu0 0.0
        %4930 = vmatpush.msra.mxu0 0.0
        %4931 = vmatpush.msra.mxu0 0.0
        %4932 = vmatpush.msra.mxu0 0.0
        %4933 = vmatpush.msra.mxu0 0.0
        %4934 = vmatpush.msra.mxu0 0.0
        %4935 = vmatpush.msra.mxu0 0.0
        %4936 = vmatpush.msra.mxu0 0.0
        %4937 = vmatpush.msra.mxu0 %v4750
        %4938 = vmatmul.f32.gmra.mxu0 %v4726
        %v4939 = vpop.f32.mrf.mxu0
        %v4940 = vadd.f32 0.0, %v4939
        %4941 = vdwg.mxu0
        %4942 = vmatpush.msra.mxu0 0.0
        %4943 = vmatpush.msra.mxu0 0.0
        %4944 = vmatpush.msra.mxu0 0.0
        %4945 = vmatpush.msra.mxu0 0.0
        %4946 = vmatpush.msra.mxu0 0.0
        %4947 = vmatpush.msra.mxu0 0.0
        %4948 = vmatpush.msra.mxu0 0.0
        %4949 = vmatpush.msra.mxu0 0.0
        %4950 = vmatpush.msra.mxu0 0.0
        %4951 = vmatpush.msra.mxu0 0.0
        %4952 = vmatpush.msra.mxu0 0.0
        %4953 = vmatpush.msra.mxu0 0.0
        %4954 = vmatpush.msra.mxu0 0.0
        %4955 = vmatpush.msra.mxu0 0.0
        %4956 = vmatpush.msra.mxu0 0.0
        %4957 = vmatpush.msra.mxu0 %v4753
        %4958 = vmatmul.f32.gmra.mxu0 %v4726
        %v4959 = vpop.f32.mrf.mxu0
        %v4960 = vadd.f32 0.0, %v4959
        %4961 = vdwg.mxu0
        %4962 = vmatpush.msra.mxu0 0.0
        %4963 = vmatpush.msra.mxu0 0.0
        %4964 = vmatpush.msra.mxu0 0.0
        %4965 = vmatpush.msra.mxu0 0.0
        %4966 = vmatpush.msra.mxu0 0.0
        %4967 = vmatpush.msra.mxu0 0.0
        %4968 = vmatpush.msra.mxu0 0.0
        %4969 = vmatpush.msra.mxu0 0.0
        %4970 = vmatpush.msra.mxu0 0.0
        %4971 = vmatpush.msra.mxu0 0.0
        %4972 = vmatpush.msra.mxu0 0.0
        %4973 = vmatpush.msra.mxu0 0.0
        %4974 = vmatpush.msra.mxu0 0.0
        %4975 = vmatpush.msra.mxu0 0.0
        %4976 = vmatpush.msra.mxu0 0.0
        %4977 = vmatpush.msra.mxu0 %v4756
        %4978 = vmatmul.f32.gmra.mxu0 %v4726
        %v4979 = vpop.f32.mrf.mxu0
        %v4980 = vadd.f32 0.0, %v4979
        %4981 = vdwg.mxu0
        %4982 = vmatpush.msra.mxu0 0.0
        %4983 = vmatpush.msra.mxu0 0.0
        %4984 = vmatpush.msra.mxu0 0.0
        %4985 = vmatpush.msra.mxu0 0.0
        %4986 = vmatpush.msra.mxu0 0.0
        %4987 = vmatpush.msra.mxu0 0.0
        %4988 = vmatpush.msra.mxu0 0.0
        %4989 = vmatpush.msra.mxu0 0.0
        %4990 = vmatpush.msra.mxu0 0.0
        %4991 = vmatpush.msra.mxu0 0.0
        %4992 = vmatpush.msra.mxu0 0.0
        %4993 = vmatpush.msra.mxu0 0.0
        %4994 = vmatpush.msra.mxu0 0.0
        %4995 = vmatpush.msra.mxu0 0.0
        %4996 = vmatpush.msra.mxu0 0.0
        %4997 = vmatpush.msra.mxu0 %v4759
        %4998 = vmatmul.f32.gmra.mxu0 %v4726
        %v4999 = vpop.f32.mrf.mxu0
        %v5000 = vadd.f32 0.0, %v4999
        %5001 = vdwg.mxu0
        %5002 = vmatpush.msra.mxu0 0.0
        %5003 = vmatpush.msra.mxu0 0.0
        %5004 = vmatpush.msra.mxu0 0.0
        %5005 = vmatpush.msra.mxu0 0.0
        %5006 = vmatpush.msra.mxu0 0.0
        %5007 = vmatpush.msra.mxu0 0.0
        %5008 = vmatpush.msra.mxu0 0.0
        %5009 = vmatpush.msra.mxu0 0.0
        %5010 = vmatpush.msra.mxu0 0.0
        %5011 = vmatpush.msra.mxu0 0.0
        %5012 = vmatpush.msra.mxu0 0.0
        %5013 = vmatpush.msra.mxu0 0.0
        %5014 = vmatpush.msra.mxu0 0.0
        %5015 = vmatpush.msra.mxu0 0.0
        %5016 = vmatpush.msra.mxu0 0.0
        %5017 = vmatpush.msra.mxu0 %v4762
        %5018 = vmatmul.f32.gmra.mxu0 %v4726
        %v5019 = vpop.f32.mrf.mxu0
        %v5020 = vadd.f32 0.0, %v5019
        %5021 = vdwg.mxu0
        %5022 = vmatpush.msra.mxu0 0.0
        %5023 = vmatpush.msra.mxu0 0.0
        %5024 = vmatpush.msra.mxu0 0.0
        %5025 = vmatpush.msra.mxu0 0.0
        %5026 = vmatpush.msra.mxu0 0.0
        %5027 = vmatpush.msra.mxu0 0.0
        %5028 = vmatpush.msra.mxu0 0.0
        %5029 = vmatpush.msra.mxu0 0.0
        %5030 = vmatpush.msra.mxu0 0.0
        %5031 = vmatpush.msra.mxu0 0.0
        %5032 = vmatpush.msra.mxu0 0.0
        %5033 = vmatpush.msra.mxu0 0.0
        %5034 = vmatpush.msra.mxu0 0.0
        %5035 = vmatpush.msra.mxu0 0.0
        %5036 = vmatpush.msra.mxu0 0.0
        %5037 = vmatpush.msra.mxu0 %v4765
        %5038 = vmatmul.f32.gmra.mxu0 %v4726
        %v5039 = vpop.f32.mrf.mxu0
        %v5040 = vadd.f32 0.0, %v5039
        %5041 = vdwg.mxu0
        %5042 = vmatpush.msra.mxu0 0.0
        %5043 = vmatpush.msra.mxu0 0.0
        %5044 = vmatpush.msra.mxu0 0.0
        %5045 = vmatpush.msra.mxu0 0.0
        %5046 = vmatpush.msra.mxu0 0.0
        %5047 = vmatpush.msra.mxu0 0.0
        %5048 = vmatpush.msra.mxu0 0.0
        %5049 = vmatpush.msra.mxu0 0.0
        %5050 = vmatpush.msra.mxu0 0.0
        %5051 = vmatpush.msra.mxu0 0.0
        %5052 = vmatpush.msra.mxu0 0.0
        %5053 = vmatpush.msra.mxu0 0.0
        %5054 = vmatpush.msra.mxu0 0.0
        %5055 = vmatpush.msra.mxu0 0.0
        %5056 = vmatpush.msra.mxu0 0.0
        %5057 = vmatpush.msra.mxu0 %v4768
        %5058 = vmatmul.f32.gmra.mxu0 %v4726
        %v5059 = vpop.f32.mrf.mxu0
        %v5060 = vadd.f32 0.0, %v5059
        %5061 = vdwg.mxu0
        %5062 = vmatpush.msra.mxu0 0.0
        %5063 = vmatpush.msra.mxu0 0.0
        %5064 = vmatpush.msra.mxu0 0.0
        %5065 = vmatpush.msra.mxu0 0.0
        %5066 = vmatpush.msra.mxu0 0.0
        %5067 = vmatpush.msra.mxu0 0.0
        %5068 = vmatpush.msra.mxu0 0.0
        %5069 = vmatpush.msra.mxu0 0.0
        %5070 = vmatpush.msra.mxu0 0.0
        %5071 = vmatpush.msra.mxu0 0.0
        %5072 = vmatpush.msra.mxu0 0.0
        %5073 = vmatpush.msra.mxu0 0.0
        %5074 = vmatpush.msra.mxu0 0.0
        %5075 = vmatpush.msra.mxu0 0.0
        %5076 = vmatpush.msra.mxu0 0.0
        %5077 = vmatpush.msra.mxu0 %v4771
        %5078 = vmatmul.f32.gmra.mxu0 %v4726
        %v5079 = vpop.f32.mrf.mxu0
        %v5080 = vadd.f32 0.0, %v5079
        %5081 = vdwg.mxu0
        %5082 = vmatpush.msra.mxu0 0.0
        %5083 = vmatpush.msra.mxu0 0.0
        %5084 = vmatpush.msra.mxu0 0.0
        %5085 = vmatpush.msra.mxu0 0.0
        %5086 = vmatpush.msra.mxu0 0.0
        %5087 = vmatpush.msra.mxu0 0.0
        %5088 = vmatpush.msra.mxu0 0.0
        %5089 = vmatpush.msra.mxu0 0.0
        %5090 = vmatpush.msra.mxu0 0.0
        %5091 = vmatpush.msra.mxu0 0.0
        %5092 = vmatpush.msra.mxu0 0.0
        %5093 = vmatpush.msra.mxu0 0.0
        %5094 = vmatpush.msra.mxu0 0.0
        %5095 = vmatpush.msra.mxu0 0.0
        %5096 = vmatpush.msra.mxu0 0.0
        %5097 = vmatpush.msra.mxu0 %v4774
        %5098 = vmatmul.f32.gmra.mxu0 %v4726
        %v5099 = vpop.f32.mrf.mxu0
        %v5100 = vadd.f32 0.0, %v5099
        %5101 = vdwg.mxu0
        %5102 = vmatpush.msra.mxu0 0.0
        %5103 = vmatpush.msra.mxu0 0.0
        %5104 = vmatpush.msra.mxu0 0.0
        %5105 = vmatpush.msra.mxu0 0.0
        %5106 = vmatpush.msra.mxu0 0.0
        %5107 = vmatpush.msra.mxu0 0.0
        %5108 = vmatpush.msra.mxu0 0.0
        %5109 = vmatpush.msra.mxu0 0.0
        %5110 = vmatpush.msra.mxu0 0.0
        %5111 = vmatpush.msra.mxu0 0.0
        %5112 = vmatpush.msra.mxu0 0.0
        %5113 = vmatpush.msra.mxu0 0.0
        %5114 = vmatpush.msra.mxu0 0.0
        %5115 = vmatpush.msra.mxu0 0.0
        %5116 = vmatpush.msra.mxu0 0.0
        %5117 = vmatpush.msra.mxu0 %v4777
        %5118 = vmatmul.f32.gmra.mxu0 %v4726
        %v5119 = vpop.f32.mrf.mxu0
        %v5120 = vadd.f32 0.0, %v5119
        %5121 = vdwg.mxu0
        %5122 = vmatpush.msra.mxu0 0.0
        %5123 = vmatpush.msra.mxu0 0.0
        %5124 = vmatpush.msra.mxu0 0.0
        %5125 = vmatpush.msra.mxu0 0.0
        %5126 = vmatpush.msra.mxu0 0.0
        %5127 = vmatpush.msra.mxu0 0.0
        %5128 = vmatpush.msra.mxu0 0.0
        %5129 = vmatpush.msra.mxu0 0.0
        %5130 = vmatpush.msra.mxu0 0.0
        %5131 = vmatpush.msra.mxu0 0.0
        %5132 = vmatpush.msra.mxu0 0.0
        %5133 = vmatpush.msra.mxu0 0.0
        %5134 = vmatpush.msra.mxu0 0.0
        %5135 = vmatpush.msra.mxu0 0.0
        %5136 = vmatpush.msra.mxu0 0.0
        %5137 = vmatpush.msra.mxu0 %v4780
        %5138 = vmatmul.f32.gmra.mxu0 %v4726
        %v5139 = vpop.f32.mrf.mxu0
        %v5140 = vadd.f32 0.0, %v5139
        %5141 = vdwg.mxu0
        %v5142 = vadd.f32 %v4548, %v4800
        %v5143 = vadd.f32 %v4549, %v4820
        %v5144 = vadd.f32 %v4550, %v4840
        %v5145 = vadd.f32 %v4551, %v4860
        %v5146 = vadd.f32 %v4552, %v4880
        %v5147 = vadd.f32 %v4553, %v4900
        %v5148 = vadd.f32 %v4554, %v4920
        %v5149 = vadd.f32 %v4555, %v4940
        %v5150 = vadd.f32 %v4556, %v4960
        %v5151 = vadd.f32 %v4557, %v4980
        %v5152 = vadd.f32 %v4558, %v5000
        %v5153 = vadd.f32 %v4559, %v5020
        %v5154 = vadd.f32 %v4560, %v5040
        %v5155 = vadd.f32 %v4561, %v5060
        %v5156 = vadd.f32 %v4562, %v5080
        %v5157 = vadd.f32 %v4563, %v5100
        %v5158 = vadd.f32 %v4564, %v5120
        %v5159 = vadd.f32 %v4565, %v5140
        %5160 = vst [vmem:[#allocation1] ss:$2 sm:$0xff] %v314
        %s5161 = scalar_lea.vmem [#allocation1], 16
        %5162 = vst [vmem:[%s5161] ss:$2 sm:$0xff] %v315
        %s5163 = scalar_lea.vmem [#allocation1], 32
        %5164 = vst [vmem:[%s5163] ss:$2 sm:$0xff] %v316
        %s5165 = scalar_lea.vmem [#allocation1], 48
        %5166 = vst [vmem:[%s5165] ss:$2 sm:$0xff] %v317
        %v5167 = vld.sshfl [vmem:[#allocation1] sm:$0xff pattern:$0x75316420]
        %v5168 = vld.sshfl [vmem:[#allocation1 + $0x8] sm:$0xff pattern:$0x75316420]
        %v5169 = vld.sshfl [vmem:[#allocation1 + $0x10] sm:$0xff pattern:$0x75316420]
        %v5170 = vld.sshfl [vmem:[#allocation1 + $0x18] sm:$0xff pattern:$0x75316420]
        %v5171 = vld.sshfl [vmem:[#allocation1 + $0x20] sm:$0xff pattern:$0x75316420]
        %v5172 = vld.sshfl [vmem:[#allocation1 + $0x28] sm:$0xff pattern:$0x75316420]
        %v5173 = vld.sshfl [vmem:[#allocation1 + $0x30] sm:$0xff pattern:$0x75316420]
        %v5174 = vld.sshfl [vmem:[#allocation1 + $0x38] sm:$0xff pattern:$0x75316420]
        %5175 = vst [vmem:[#allocation1] ss:$2 sm:$0xff] %v318
        %5176 = vst [vmem:[%s5161] ss:$2 sm:$0xff] %v319
        %5177 = vst [vmem:[%s5163] ss:$2 sm:$0xff] %v320
        %5178 = vst [vmem:[%s5165] ss:$2 sm:$0xff] %v321
        %v5179 = vld.sshfl [vmem:[#allocation1] sm:$0xff pattern:$0x75316420]
        %v5180 = vld.sshfl [vmem:[#allocation1 + $0x8] sm:$0xff pattern:$0x75316420]
        %v5181 = vld.sshfl [vmem:[#allocation1 + $0x10] sm:$0xff pattern:$0x75316420]
        %v5182 = vld.sshfl [vmem:[#allocation1 + $0x18] sm:$0xff pattern:$0x75316420]
        %v5183 = vld.sshfl [vmem:[#allocation1 + $0x20] sm:$0xff pattern:$0x75316420]
        %v5184 = vld.sshfl [vmem:[#allocation1 + $0x28] sm:$0xff pattern:$0x75316420]
        %v5185 = vld.sshfl [vmem:[#allocation1 + $0x30] sm:$0xff pattern:$0x75316420]
        %v5186 = vld.sshfl [vmem:[#allocation1 + $0x38] sm:$0xff pattern:$0x75316420]
        %5187 = vst [vmem:[#allocation1] ss:$2 sm:$0xff] %v322
        %v5188 = vld.sshfl [vmem:[#allocation1] sm:$0xff pattern:$0x75316420]
        %v5189 = vld.sshfl [vmem:[#allocation1 + $0x8] sm:$0xff pattern:$0x75316420]
        %5208 = vrot.lane.b32.xlu0 %v5167, 79
        %v5209 = vpop.permute.xlu0 %5208
        %5210 = vrot.lane.b32.xlu0 %v5168, 79
        %v5211 = vpop.permute.xlu0 %5210
        %5212 = vrot.lane.b32.xlu0 %v5169, 79
        %v5213 = vpop.permute.xlu0 %5212
        %5214 = vrot.lane.b32.xlu0 %v5170, 79
        %v5215 = vpop.permute.xlu0 %5214
        %5216 = vrot.lane.b32.xlu0 %v5171, 79
        %v5217 = vpop.permute.xlu0 %5216
        %5218 = vrot.lane.b32.xlu0 %v5172, 79
        %v5219 = vpop.permute.xlu0 %5218
        %5220 = vrot.lane.b32.xlu0 %v5173, 79
        %v5221 = vpop.permute.xlu0 %5220
        %5222 = vrot.lane.b32.xlu0 %v5174, 79
        %v5223 = vpop.permute.xlu0 %5222
        %5224 = vrot.lane.b32.xlu0 %v5179, 79
        %v5225 = vpop.permute.xlu0 %5224
        %5226 = vrot.lane.b32.xlu0 %v5180, 79
        %v5227 = vpop.permute.xlu0 %5226
        %5228 = vrot.lane.b32.xlu0 %v5181, 79
        %v5229 = vpop.permute.xlu0 %5228
        %5230 = vrot.lane.b32.xlu0 %v5182, 79
        %v5231 = vpop.permute.xlu0 %5230
        %5232 = vrot.lane.b32.xlu0 %v5183, 79
        %v5233 = vpop.permute.xlu0 %5232
        %5234 = vrot.lane.b32.xlu0 %v5184, 79
        %v5235 = vpop.permute.xlu0 %5234
        %5236 = vrot.lane.b32.xlu0 %v5185, 79
        %v5237 = vpop.permute.xlu0 %5236
        %5238 = vrot.lane.b32.xlu0 %v5186, 79
        %v5239 = vpop.permute.xlu0 %5238
        %5240 = vrot.lane.b32.xlu0 %v5188, 79
        %v5241 = vpop.permute.xlu0 %5240
        %5242 = vrot.lane.b32.xlu0 %v5189, 79
        %v5243 = vpop.permute.xlu0 %5242
        %vm5244 = vcmp.lt.s32.totalorder %v327, 79
        %v5245 = vsel %vm5244, %v5241, %v5243
        %v5246 = vsel %vm5244, %v5239, %v5241
        %v5247 = vsel %vm5244, %v5237, %v5239
        %v5248 = vsel %vm5244, %v5235, %v5237
        %v5249 = vsel %vm5244, %v5233, %v5235
        %v5250 = vsel %vm5244, %v5231, %v5233
        %v5251 = vsel %vm5244, %v5229, %v5231
        %v5252 = vsel %vm5244, %v5227, %v5229
        %v5253 = vsel %vm5244, %v5225, %v5227
        %v5254 = vsel %vm5244, %v5223, %v5225
        %v5255 = vsel %vm5244, %v5221, %v5223
        %v5256 = vsel %vm5244, %v5219, %v5221
        %v5257 = vsel %vm5244, %v5217, %v5219
        %v5258 = vsel %vm5244, %v5215, %v5217
        %v5259 = vsel %vm5244, %v5213, %v5215
        %v5260 = vsel %vm5244, %v5211, %v5213
        %v5261 = vsel %vm5244, %v5209, %v5211
        %v5262 = vsel %vm5244, %v5243, %v5209
        %vm5263 = vmand %vm4021, %vm1772
        %vm5264 = vmand %vm4022, %vm1773
        %vm5265 = vmand %vm4023, %vm1774
        %vm5266 = vmand %vm4024, %vm1775
        %vm5267 = vmand %vm4025, %vm1776
        %vm5268 = vmand %vm4026, %vm1777
        %vm5269 = vmand %vm4027, %vm1778
        %vm5270 = vmand %vm4028, %vm1779
        %vm5271 = vmand %vm4029, %vm1780
        %vm5272 = vmand %vm4030, %vm1781
        %vm5273 = vmand %vm4031, %vm1782
        %vm5274 = vmand %vm4032, %vm1783
        %vm5275 = vmand %vm4033, %vm1784
        %vm5276 = vmand %vm4034, %vm1785
        %vm5277 = vmand %vm4035, %vm1786
        %vm5278 = vmand %vm4036, %vm1787
        %vm5279 = vmand %vm4037, %vm1788
        %vm5280 = vmand %vm4038, %vm1789
        %v5281 = vsel %vm5263, 1, 0
        %v5282 = vsel %vm5264, 1, 0
        %v5283 = vsel %vm5265, 1, 0
        %v5284 = vsel %vm5266, 1, 0
        %v5285 = vsel %vm5267, 1, 0
        %v5286 = vsel %vm5268, 1, 0
        %v5287 = vsel %vm5269, 1, 0
        %v5288 = vsel %vm5270, 1, 0
        %v5289 = vsel %vm5271, 1, 0
        %v5290 = vsel %vm5272, 1, 0
        %v5291 = vsel %vm5273, 1, 0
        %v5292 = vsel %vm5274, 1, 0
        %v5293 = vsel %vm5275, 1, 0
        %v5294 = vsel %vm5276, 1, 0
        %v5295 = vsel %vm5277, 1, 0
        %v5296 = vsel %vm5278, 1, 0
        %v5297 = vsel %vm5279, 1, 0
        %v5298 = vsel %vm5280, 1, 0
        %v5299 = vperm.slane %v5281, 0
        %v5300 = vperm.slane %v5282, 0
        %v5301 = vperm.slane %v5283, 0
        %v5302 = vperm.slane %v5284, 0
        %v5303 = vperm.slane %v5285, 0
        %v5304 = vperm.slane %v5286, 0
        %v5305 = vperm.slane %v5287, 0
        %v5306 = vperm.slane %v5288, 0
        %v5307 = vperm.slane %v5289, 0
        %v5308 = vperm.slane %v5290, 0
        %v5309 = vperm.slane %v5291, 0
        %v5310 = vperm.slane %v5292, 0
        %v5311 = vperm.slane %v5293, 0
        %v5312 = vperm.slane %v5294, 0
        %v5313 = vperm.slane %v5295, 0
        %v5314 = vperm.slane %v5296, 0
        %v5315 = vperm.slane %v5297, 0
        %v5316 = vperm.slane %v5298, 0
        %vm5317 = vcmp.eq.s32.totalorder %v5299, 1
        %vm5318 = vcmp.eq.s32.totalorder %v5300, 1
        %vm5319 = vcmp.eq.s32.totalorder %v5301, 1
        %vm5320 = vcmp.eq.s32.totalorder %v5302, 1
        %vm5321 = vcmp.eq.s32.totalorder %v5303, 1
        %vm5322 = vcmp.eq.s32.totalorder %v5304, 1
        %vm5323 = vcmp.eq.s32.totalorder %v5305, 1
        %vm5324 = vcmp.eq.s32.totalorder %v5306, 1
        %vm5325 = vcmp.eq.s32.totalorder %v5307, 1
        %vm5326 = vcmp.eq.s32.totalorder %v5308, 1
        %vm5327 = vcmp.eq.s32.totalorder %v5309, 1
        %vm5328 = vcmp.eq.s32.totalorder %v5310, 1
        %vm5329 = vcmp.eq.s32.totalorder %v5311, 1
        %vm5330 = vcmp.eq.s32.totalorder %v5312, 1
        %vm5331 = vcmp.eq.s32.totalorder %v5313, 1
        %vm5332 = vcmp.eq.s32.totalorder %v5314, 1
        %vm5333 = vcmp.eq.s32.totalorder %v5315, 1
        %vm5334 = vcmp.eq.s32.totalorder %v5316, 1
        %v5335 = vsel %vm5317, %v5261, 0.0
        %v5336 = vsel %vm5318, %v5260, 0.0
        %v5337 = vsel %vm5319, %v5259, 0.0
        %v5338 = vsel %vm5320, %v5258, 0.0
        %v5339 = vsel %vm5321, %v5257, 0.0
        %v5340 = vsel %vm5322, %v5256, 0.0
        %v5341 = vsel %vm5323, %v5255, 0.0
        %v5342 = vsel %vm5324, %v5254, 0.0
        %v5343 = vsel %vm5325, %v5253, 0.0
        %v5344 = vsel %vm5326, %v5252, 0.0
        %v5345 = vsel %vm5327, %v5251, 0.0
        %v5346 = vsel %vm5328, %v5250, 0.0
        %v5347 = vsel %vm5329, %v5249, 0.0
        %v5348 = vsel %vm5330, %v5248, 0.0
        %v5349 = vsel %vm5331, %v5247, 0.0
        %v5350 = vsel %vm5332, %v5246, 0.0
        %v5351 = vsel %vm5333, %v5245, 0.0
        %v5352 = vsel %vm5334, %v5262, 0.0
        %s5353 = scalar_lea.vmem %s273, 64 [#allocation2]
        %v5354 = vld [vmem:[%s5353] sm:$0xff]
        %v5356 = vsel %vm614, %v5354, 0
        %v5359 = vsel %vm618, %v5335, 0
        %v5362 = vsel %vm618, %v5336, 0
        %v5365 = vsel %vm618, %v5337, 0
        %v5368 = vsel %vm618, %v5338, 0
        %v5371 = vsel %vm618, %v5339, 0
        %v5374 = vsel %vm618, %v5340, 0
        %v5377 = vsel %vm618, %v5341, 0
        %v5380 = vsel %vm618, %v5342, 0
        %v5383 = vsel %vm618, %v5343, 0
        %v5386 = vsel %vm618, %v5344, 0
        %v5389 = vsel %vm618, %v5345, 0
        %v5392 = vsel %vm618, %v5346, 0
        %v5395 = vsel %vm618, %v5347, 0
        %v5398 = vsel %vm618, %v5348, 0
        %v5401 = vsel %vm618, %v5349, 0
        %v5404 = vsel %vm618, %v5350, 0
        %v5407 = vsel %vm618, %v5351, 0
        %v5410 = vsel %vm618, %v5352, 0
        %5412 = vmatpush.msra.mxu0 0.0
        %5413 = vmatpush.msra.mxu0 0.0
        %5414 = vmatpush.msra.mxu0 0.0
        %5415 = vmatpush.msra.mxu0 0.0
        %5416 = vmatpush.msra.mxu0 0.0
        %5417 = vmatpush.msra.mxu0 0.0
        %5418 = vmatpush.msra.mxu0 0.0
        %5419 = vmatpush.msra.mxu0 0.0
        %5420 = vmatpush.msra.mxu0 0.0
        %5421 = vmatpush.msra.mxu0 0.0
        %5422 = vmatpush.msra.mxu0 0.0
        %5423 = vmatpush.msra.mxu0 0.0
        %5424 = vmatpush.msra.mxu0 0.0
        %5425 = vmatpush.msra.mxu0 0.0
        %5426 = vmatpush.msra.mxu0 0.0
        %5427 = vmatpush.msra.mxu0 %v5359
        %5428 = vmatmul.f32.gmra.mxu0 %v5356
        %v5429 = vpop.f32.mrf.mxu0
        %v5430 = vadd.f32 0.0, %v5429
        %5431 = vdwg.mxu0
        %5432 = vmatpush.msra.mxu0 0.0
        %5433 = vmatpush.msra.mxu0 0.0
        %5434 = vmatpush.msra.mxu0 0.0
        %5435 = vmatpush.msra.mxu0 0.0
        %5436 = vmatpush.msra.mxu0 0.0
        %5437 = vmatpush.msra.mxu0 0.0
        %5438 = vmatpush.msra.mxu0 0.0
        %5439 = vmatpush.msra.mxu0 0.0
        %5440 = vmatpush.msra.mxu0 0.0
        %5441 = vmatpush.msra.mxu0 0.0
        %5442 = vmatpush.msra.mxu0 0.0
        %5443 = vmatpush.msra.mxu0 0.0
        %5444 = vmatpush.msra.mxu0 0.0
        %5445 = vmatpush.msra.mxu0 0.0
        %5446 = vmatpush.msra.mxu0 0.0
        %5447 = vmatpush.msra.mxu0 %v5362
        %5448 = vmatmul.f32.gmra.mxu0 %v5356
        %v5449 = vpop.f32.mrf.mxu0
        %v5450 = vadd.f32 0.0, %v5449
        %5451 = vdwg.mxu0
        %5452 = vmatpush.msra.mxu0 0.0
        %5453 = vmatpush.msra.mxu0 0.0
        %5454 = vmatpush.msra.mxu0 0.0
        %5455 = vmatpush.msra.mxu0 0.0
        %5456 = vmatpush.msra.mxu0 0.0
        %5457 = vmatpush.msra.mxu0 0.0
        %5458 = vmatpush.msra.mxu0 0.0
        %5459 = vmatpush.msra.mxu0 0.0
        %5460 = vmatpush.msra.mxu0 0.0
        %5461 = vmatpush.msra.mxu0 0.0
        %5462 = vmatpush.msra.mxu0 0.0
        %5463 = vmatpush.msra.mxu0 0.0
        %5464 = vmatpush.msra.mxu0 0.0
        %5465 = vmatpush.msra.mxu0 0.0
        %5466 = vmatpush.msra.mxu0 0.0
        %5467 = vmatpush.msra.mxu0 %v5365
        %5468 = vmatmul.f32.gmra.mxu0 %v5356
        %v5469 = vpop.f32.mrf.mxu0
        %v5470 = vadd.f32 0.0, %v5469
        %5471 = vdwg.mxu0
        %5472 = vmatpush.msra.mxu0 0.0
        %5473 = vmatpush.msra.mxu0 0.0
        %5474 = vmatpush.msra.mxu0 0.0
        %5475 = vmatpush.msra.mxu0 0.0
        %5476 = vmatpush.msra.mxu0 0.0
        %5477 = vmatpush.msra.mxu0 0.0
        %5478 = vmatpush.msra.mxu0 0.0
        %5479 = vmatpush.msra.mxu0 0.0
        %5480 = vmatpush.msra.mxu0 0.0
        %5481 = vmatpush.msra.mxu0 0.0
        %5482 = vmatpush.msra.mxu0 0.0
        %5483 = vmatpush.msra.mxu0 0.0
        %5484 = vmatpush.msra.mxu0 0.0
        %5485 = vmatpush.msra.mxu0 0.0
        %5486 = vmatpush.msra.mxu0 0.0
        %5487 = vmatpush.msra.mxu0 %v5368
        %5488 = vmatmul.f32.gmra.mxu0 %v5356
        %v5489 = vpop.f32.mrf.mxu0
        %v5490 = vadd.f32 0.0, %v5489
        %5491 = vdwg.mxu0
        %5492 = vmatpush.msra.mxu0 0.0
        %5493 = vmatpush.msra.mxu0 0.0
        %5494 = vmatpush.msra.mxu0 0.0
        %5495 = vmatpush.msra.mxu0 0.0
        %5496 = vmatpush.msra.mxu0 0.0
        %5497 = vmatpush.msra.mxu0 0.0
        %5498 = vmatpush.msra.mxu0 0.0
        %5499 = vmatpush.msra.mxu0 0.0
        %5500 = vmatpush.msra.mxu0 0.0
        %5501 = vmatpush.msra.mxu0 0.0
        %5502 = vmatpush.msra.mxu0 0.0
        %5503 = vmatpush.msra.mxu0 0.0
        %5504 = vmatpush.msra.mxu0 0.0
        %5505 = vmatpush.msra.mxu0 0.0
        %5506 = vmatpush.msra.mxu0 0.0
        %5507 = vmatpush.msra.mxu0 %v5371
        %5508 = vmatmul.f32.gmra.mxu0 %v5356
        %v5509 = vpop.f32.mrf.mxu0
        %v5510 = vadd.f32 0.0, %v5509
        %5511 = vdwg.mxu0
        %5512 = vmatpush.msra.mxu0 0.0
        %5513 = vmatpush.msra.mxu0 0.0
        %5514 = vmatpush.msra.mxu0 0.0
        %5515 = vmatpush.msra.mxu0 0.0
        %5516 = vmatpush.msra.mxu0 0.0
        %5517 = vmatpush.msra.mxu0 0.0
        %5518 = vmatpush.msra.mxu0 0.0
        %5519 = vmatpush.msra.mxu0 0.0
        %5520 = vmatpush.msra.mxu0 0.0
        %5521 = vmatpush.msra.mxu0 0.0
        %5522 = vmatpush.msra.mxu0 0.0
        %5523 = vmatpush.msra.mxu0 0.0
        %5524 = vmatpush.msra.mxu0 0.0
        %5525 = vmatpush.msra.mxu0 0.0
        %5526 = vmatpush.msra.mxu0 0.0
        %5527 = vmatpush.msra.mxu0 %v5374
        %5528 = vmatmul.f32.gmra.mxu0 %v5356
        %v5529 = vpop.f32.mrf.mxu0
        %v5530 = vadd.f32 0.0, %v5529
        %5531 = vdwg.mxu0
        %5532 = vmatpush.msra.mxu0 0.0
        %5533 = vmatpush.msra.mxu0 0.0
        %5534 = vmatpush.msra.mxu0 0.0
        %5535 = vmatpush.msra.mxu0 0.0
        %5536 = vmatpush.msra.mxu0 0.0
        %5537 = vmatpush.msra.mxu0 0.0
        %5538 = vmatpush.msra.mxu0 0.0
        %5539 = vmatpush.msra.mxu0 0.0
        %5540 = vmatpush.msra.mxu0 0.0
        %5541 = vmatpush.msra.mxu0 0.0
        %5542 = vmatpush.msra.mxu0 0.0
        %5543 = vmatpush.msra.mxu0 0.0
        %5544 = vmatpush.msra.mxu0 0.0
        %5545 = vmatpush.msra.mxu0 0.0
        %5546 = vmatpush.msra.mxu0 0.0
        %5547 = vmatpush.msra.mxu0 %v5377
        %5548 = vmatmul.f32.gmra.mxu0 %v5356
        %v5549 = vpop.f32.mrf.mxu0
        %v5550 = vadd.f32 0.0, %v5549
        %5551 = vdwg.mxu0
        %5552 = vmatpush.msra.mxu0 0.0
        %5553 = vmatpush.msra.mxu0 0.0
        %5554 = vmatpush.msra.mxu0 0.0
        %5555 = vmatpush.msra.mxu0 0.0
        %5556 = vmatpush.msra.mxu0 0.0
        %5557 = vmatpush.msra.mxu0 0.0
        %5558 = vmatpush.msra.mxu0 0.0
        %5559 = vmatpush.msra.mxu0 0.0
        %5560 = vmatpush.msra.mxu0 0.0
        %5561 = vmatpush.msra.mxu0 0.0
        %5562 = vmatpush.msra.mxu0 0.0
        %5563 = vmatpush.msra.mxu0 0.0
        %5564 = vmatpush.msra.mxu0 0.0
        %5565 = vmatpush.msra.mxu0 0.0
        %5566 = vmatpush.msra.mxu0 0.0
        %5567 = vmatpush.msra.mxu0 %v5380
        %5568 = vmatmul.f32.gmra.mxu0 %v5356
        %v5569 = vpop.f32.mrf.mxu0
        %v5570 = vadd.f32 0.0, %v5569
        %5571 = vdwg.mxu0
        %5572 = vmatpush.msra.mxu0 0.0
        %5573 = vmatpush.msra.mxu0 0.0
        %5574 = vmatpush.msra.mxu0 0.0
        %5575 = vmatpush.msra.mxu0 0.0
        %5576 = vmatpush.msra.mxu0 0.0
        %5577 = vmatpush.msra.mxu0 0.0
        %5578 = vmatpush.msra.mxu0 0.0
        %5579 = vmatpush.msra.mxu0 0.0
        %5580 = vmatpush.msra.mxu0 0.0
        %5581 = vmatpush.msra.mxu0 0.0
        %5582 = vmatpush.msra.mxu0 0.0
        %5583 = vmatpush.msra.mxu0 0.0
        %5584 = vmatpush.msra.mxu0 0.0
        %5585 = vmatpush.msra.mxu0 0.0
        %5586 = vmatpush.msra.mxu0 0.0
        %5587 = vmatpush.msra.mxu0 %v5383
        %5588 = vmatmul.f32.gmra.mxu0 %v5356
        %v5589 = vpop.f32.mrf.mxu0
        %v5590 = vadd.f32 0.0, %v5589
        %5591 = vdwg.mxu0
        %5592 = vmatpush.msra.mxu0 0.0
        %5593 = vmatpush.msra.mxu0 0.0
        %5594 = vmatpush.msra.mxu0 0.0
        %5595 = vmatpush.msra.mxu0 0.0
        %5596 = vmatpush.msra.mxu0 0.0
        %5597 = vmatpush.msra.mxu0 0.0
        %5598 = vmatpush.msra.mxu0 0.0
        %5599 = vmatpush.msra.mxu0 0.0
        %5600 = vmatpush.msra.mxu0 0.0
        %5601 = vmatpush.msra.mxu0 0.0
        %5602 = vmatpush.msra.mxu0 0.0
        %5603 = vmatpush.msra.mxu0 0.0
        %5604 = vmatpush.msra.mxu0 0.0
        %5605 = vmatpush.msra.mxu0 0.0
        %5606 = vmatpush.msra.mxu0 0.0
        %5607 = vmatpush.msra.mxu0 %v5386
        %5608 = vmatmul.f32.gmra.mxu0 %v5356
        %v5609 = vpop.f32.mrf.mxu0
        %v5610 = vadd.f32 0.0, %v5609
        %5611 = vdwg.mxu0
        %5612 = vmatpush.msra.mxu0 0.0
        %5613 = vmatpush.msra.mxu0 0.0
        %5614 = vmatpush.msra.mxu0 0.0
        %5615 = vmatpush.msra.mxu0 0.0
        %5616 = vmatpush.msra.mxu0 0.0
        %5617 = vmatpush.msra.mxu0 0.0
        %5618 = vmatpush.msra.mxu0 0.0
        %5619 = vmatpush.msra.mxu0 0.0
        %5620 = vmatpush.msra.mxu0 0.0
        %5621 = vmatpush.msra.mxu0 0.0
        %5622 = vmatpush.msra.mxu0 0.0
        %5623 = vmatpush.msra.mxu0 0.0
        %5624 = vmatpush.msra.mxu0 0.0
        %5625 = vmatpush.msra.mxu0 0.0
        %5626 = vmatpush.msra.mxu0 0.0
        %5627 = vmatpush.msra.mxu0 %v5389
        %5628 = vmatmul.f32.gmra.mxu0 %v5356
        %v5629 = vpop.f32.mrf.mxu0
        %v5630 = vadd.f32 0.0, %v5629
        %5631 = vdwg.mxu0
        %5632 = vmatpush.msra.mxu0 0.0
        %5633 = vmatpush.msra.mxu0 0.0
        %5634 = vmatpush.msra.mxu0 0.0
        %5635 = vmatpush.msra.mxu0 0.0
        %5636 = vmatpush.msra.mxu0 0.0
        %5637 = vmatpush.msra.mxu0 0.0
        %5638 = vmatpush.msra.mxu0 0.0
        %5639 = vmatpush.msra.mxu0 0.0
        %5640 = vmatpush.msra.mxu0 0.0
        %5641 = vmatpush.msra.mxu0 0.0
        %5642 = vmatpush.msra.mxu0 0.0
        %5643 = vmatpush.msra.mxu0 0.0
        %5644 = vmatpush.msra.mxu0 0.0
        %5645 = vmatpush.msra.mxu0 0.0
        %5646 = vmatpush.msra.mxu0 0.0
        %5647 = vmatpush.msra.mxu0 %v5392
        %5648 = vmatmul.f32.gmra.mxu0 %v5356
        %v5649 = vpop.f32.mrf.mxu0
        %v5650 = vadd.f32 0.0, %v5649
        %5651 = vdwg.mxu0
        %5652 = vmatpush.msra.mxu0 0.0
        %5653 = vmatpush.msra.mxu0 0.0
        %5654 = vmatpush.msra.mxu0 0.0
        %5655 = vmatpush.msra.mxu0 0.0
        %5656 = vmatpush.msra.mxu0 0.0
        %5657 = vmatpush.msra.mxu0 0.0
        %5658 = vmatpush.msra.mxu0 0.0
        %5659 = vmatpush.msra.mxu0 0.0
        %5660 = vmatpush.msra.mxu0 0.0
        %5661 = vmatpush.msra.mxu0 0.0
        %5662 = vmatpush.msra.mxu0 0.0
        %5663 = vmatpush.msra.mxu0 0.0
        %5664 = vmatpush.msra.mxu0 0.0
        %5665 = vmatpush.msra.mxu0 0.0
        %5666 = vmatpush.msra.mxu0 0.0
        %5667 = vmatpush.msra.mxu0 %v5395
        %5668 = vmatmul.f32.gmra.mxu0 %v5356
        %v5669 = vpop.f32.mrf.mxu0
        %v5670 = vadd.f32 0.0, %v5669
        %5671 = vdwg.mxu0
        %5672 = vmatpush.msra.mxu0 0.0
        %5673 = vmatpush.msra.mxu0 0.0
        %5674 = vmatpush.msra.mxu0 0.0
        %5675 = vmatpush.msra.mxu0 0.0
        %5676 = vmatpush.msra.mxu0 0.0
        %5677 = vmatpush.msra.mxu0 0.0
        %5678 = vmatpush.msra.mxu0 0.0
        %5679 = vmatpush.msra.mxu0 0.0
        %5680 = vmatpush.msra.mxu0 0.0
        %5681 = vmatpush.msra.mxu0 0.0
        %5682 = vmatpush.msra.mxu0 0.0
        %5683 = vmatpush.msra.mxu0 0.0
        %5684 = vmatpush.msra.mxu0 0.0
        %5685 = vmatpush.msra.mxu0 0.0
        %5686 = vmatpush.msra.mxu0 0.0
        %5687 = vmatpush.msra.mxu0 %v5398
        %5688 = vmatmul.f32.gmra.mxu0 %v5356
        %v5689 = vpop.f32.mrf.mxu0
        %v5690 = vadd.f32 0.0, %v5689
        %5691 = vdwg.mxu0
        %5692 = vmatpush.msra.mxu0 0.0
        %5693 = vmatpush.msra.mxu0 0.0
        %5694 = vmatpush.msra.mxu0 0.0
        %5695 = vmatpush.msra.mxu0 0.0
        %5696 = vmatpush.msra.mxu0 0.0
        %5697 = vmatpush.msra.mxu0 0.0
        %5698 = vmatpush.msra.mxu0 0.0
        %5699 = vmatpush.msra.mxu0 0.0
        %5700 = vmatpush.msra.mxu0 0.0
        %5701 = vmatpush.msra.mxu0 0.0
        %5702 = vmatpush.msra.mxu0 0.0
        %5703 = vmatpush.msra.mxu0 0.0
        %5704 = vmatpush.msra.mxu0 0.0
        %5705 = vmatpush.msra.mxu0 0.0
        %5706 = vmatpush.msra.mxu0 0.0
        %5707 = vmatpush.msra.mxu0 %v5401
        %5708 = vmatmul.f32.gmra.mxu0 %v5356
        %v5709 = vpop.f32.mrf.mxu0
        %v5710 = vadd.f32 0.0, %v5709
        %5711 = vdwg.mxu0
        %5712 = vmatpush.msra.mxu0 0.0
        %5713 = vmatpush.msra.mxu0 0.0
        %5714 = vmatpush.msra.mxu0 0.0
        %5715 = vmatpush.msra.mxu0 0.0
        %5716 = vmatpush.msra.mxu0 0.0
        %5717 = vmatpush.msra.mxu0 0.0
        %5718 = vmatpush.msra.mxu0 0.0
        %5719 = vmatpush.msra.mxu0 0.0
        %5720 = vmatpush.msra.mxu0 0.0
        %5721 = vmatpush.msra.mxu0 0.0
        %5722 = vmatpush.msra.mxu0 0.0
        %5723 = vmatpush.msra.mxu0 0.0
        %5724 = vmatpush.msra.mxu0 0.0
        %5725 = vmatpush.msra.mxu0 0.0
        %5726 = vmatpush.msra.mxu0 0.0
        %5727 = vmatpush.msra.mxu0 %v5404
        %5728 = vmatmul.f32.gmra.mxu0 %v5356
        %v5729 = vpop.f32.mrf.mxu0
        %v5730 = vadd.f32 0.0, %v5729
        %5731 = vdwg.mxu0
        %5732 = vmatpush.msra.mxu0 0.0
        %5733 = vmatpush.msra.mxu0 0.0
        %5734 = vmatpush.msra.mxu0 0.0
        %5735 = vmatpush.msra.mxu0 0.0
        %5736 = vmatpush.msra.mxu0 0.0
        %5737 = vmatpush.msra.mxu0 0.0
        %5738 = vmatpush.msra.mxu0 0.0
        %5739 = vmatpush.msra.mxu0 0.0
        %5740 = vmatpush.msra.mxu0 0.0
        %5741 = vmatpush.msra.mxu0 0.0
        %5742 = vmatpush.msra.mxu0 0.0
        %5743 = vmatpush.msra.mxu0 0.0
        %5744 = vmatpush.msra.mxu0 0.0
        %5745 = vmatpush.msra.mxu0 0.0
        %5746 = vmatpush.msra.mxu0 0.0
        %5747 = vmatpush.msra.mxu0 %v5407
        %5748 = vmatmul.f32.gmra.mxu0 %v5356
        %v5749 = vpop.f32.mrf.mxu0
        %v5750 = vadd.f32 0.0, %v5749
        %5751 = vdwg.mxu0
        %5752 = vmatpush.msra.mxu0 0.0
        %5753 = vmatpush.msra.mxu0 0.0
        %5754 = vmatpush.msra.mxu0 0.0
        %5755 = vmatpush.msra.mxu0 0.0
        %5756 = vmatpush.msra.mxu0 0.0
        %5757 = vmatpush.msra.mxu0 0.0
        %5758 = vmatpush.msra.mxu0 0.0
        %5759 = vmatpush.msra.mxu0 0.0
        %5760 = vmatpush.msra.mxu0 0.0
        %5761 = vmatpush.msra.mxu0 0.0
        %5762 = vmatpush.msra.mxu0 0.0
        %5763 = vmatpush.msra.mxu0 0.0
        %5764 = vmatpush.msra.mxu0 0.0
        %5765 = vmatpush.msra.mxu0 0.0
        %5766 = vmatpush.msra.mxu0 0.0
        %5767 = vmatpush.msra.mxu0 %v5410
        %5768 = vmatmul.f32.gmra.mxu0 %v5356
        %v5769 = vpop.f32.mrf.mxu0
        %v5770 = vadd.f32 0.0, %v5769
        %5771 = vdwg.mxu0
        %v5772 = vadd.f32 %v5142, %v5430
        %v5773 = vadd.f32 %v5143, %v5450
        %v5774 = vadd.f32 %v5144, %v5470
        %v5775 = vadd.f32 %v5145, %v5490
        %v5776 = vadd.f32 %v5146, %v5510
        %v5777 = vadd.f32 %v5147, %v5530
        %v5778 = vadd.f32 %v5148, %v5550
        %v5779 = vadd.f32 %v5149, %v5570
        %v5780 = vadd.f32 %v5150, %v5590
        %v5781 = vadd.f32 %v5151, %v5610
        %v5782 = vadd.f32 %v5152, %v5630
        %v5783 = vadd.f32 %v5153, %v5650
        %v5784 = vadd.f32 %v5154, %v5670
        %v5785 = vadd.f32 %v5155, %v5690
        %v5786 = vadd.f32 %v5156, %v5710
        %v5787 = vadd.f32 %v5157, %v5730
        %v5788 = vadd.f32 %v5158, %v5750
        %v5789 = vadd.f32 %v5159, %v5770
        %v5790 = vtanh.pop %v5772
        %v5791 = vtanh.pop %v5773
        %v5792 = vtanh.pop %v5774
        %v5793 = vtanh.pop %v5775
        %v5794 = vtanh.pop %v5776
        %v5795 = vtanh.pop %v5777
        %v5796 = vtanh.pop %v5778
        %v5797 = vtanh.pop %v5779
        %v5798 = vtanh.pop %v5780
        %v5799 = vtanh.pop %v5781
        %v5800 = vtanh.pop %v5782
        %v5801 = vtanh.pop %v5783
        %v5802 = vtanh.pop %v5784
        %v5803 = vtanh.pop %v5785
        %v5804 = vtanh.pop %v5786
        %v5805 = vtanh.pop %v5787
        %v5806 = vtanh.pop %v5788
        %v5807 = vtanh.pop %v5789
        %5808 = vst [vmem:[%s304] sm:$0xff] %v5790
        %5809 = vst [vmem:[%s304 + $0x8] sm:$0xff] %v5791
        %5810 = vst [vmem:[%s304 + $0x10] sm:$0xff] %v5792
        %5811 = vst [vmem:[%s304 + $0x18] sm:$0xff] %v5793
        %5812 = vst [vmem:[%s304 + $0x20] sm:$0xff] %v5794
        %5813 = vst [vmem:[%s304 + $0x28] sm:$0xff] %v5795
        %5814 = vst [vmem:[%s304 + $0x30] sm:$0xff] %v5796
        %5815 = vst [vmem:[%s304 + $0x38] sm:$0xff] %v5797
        %5816 = vst [vmem:[%s304 + $0x40] sm:$0xff] %v5798
        %5817 = vst [vmem:[%s304 + $0x48] sm:$0xff] %v5799
        %5818 = vst [vmem:[%s304 + $0x50] sm:$0xff] %v5800
        %5819 = vst [vmem:[%s304 + $0x58] sm:$0xff] %v5801
        %5820 = vst [vmem:[%s304 + $0x60] sm:$0xff] %v5802
        %5821 = vst [vmem:[%s304 + $0x68] sm:$0xff] %v5803
        %5822 = vst [vmem:[%s304 + $0x70] sm:$0xff] %v5804
        %5823 = vst [vmem:[%s304 + $0x78] sm:$0xff] %v5805
        %5824 = vst [vmem:[%s304 + $0x80] sm:$0xff] %v5806
        %5825 = vst [vmem:[%s304 + $0x88] sm:$0xff] %v5807
        %s5826 = sand.u32 %s139, 1
        %s5827 = scalar_lea.sflag [#allocation4], %s5826
        %s5828 = sand.u32 %s139, 1
        %s5829 = smul.addr %s5828, 144
        %s5830 = scalar_lea.vmem [#allocation3], %s5829
        // Predicated region
        $region75: #{tpu_custom_call.1} parent=69 // pred_check
          %p5831 = pneg %p149
        $region76: #{tpu_custom_call.1} parent=69 // pred_check_branch
          %5833 = sbr.rel (%p5831) target = $region78
        $region77: #{tpu_custom_call.1} parent=69 // pred_region
          %5835 = vsyncadd %s5827, 0
          %s5836 = smul.addr %s23, 18
          %s5837 = smul.addr %s22, 36
          %s5838 = sadd.s32 %s5836, %s5837
          %s5839 = smul.addr %s5838, 8
          %s5840 = scalar_lea.hbm %s4, %s5839
          %s5842 = sshll.u32 %s5830, 4
          %s5843 = int_to_ptr.vmem [resolvable:$true] %s5842
          %s5844 = sshll.u32 %s5840, 4
          %s5845 = int_to_ptr.hbm [resolvable:$true] %s5844
          %5847 = dma.vmem_to_hbm [thread:$0]  %s5843, 2304, %s5845, %s5827
        $region78: #{tpu_custom_call.1} parent=69 // pred_fallthru
          _
      $region70: #{tpu_custom_call.1} parent=5 // pred_fallthru
        _
      %p5848 = scmp.le.s32.totalorder 2, %s13
      // Predicated region
      $region79: #{tpu_custom_call.1} parent=5 // pred_check
        %p5849 = pneg %p5848
      $region80: #{tpu_custom_call.1} parent=5 // pred_check_branch
        %5851 = sbr.rel (%p5849) target = $region82
      $region81: #{tpu_custom_call.1} parent=5 // pred_region
        %s5852 = ssub.s32 %s13, 2
        // Predicated region
        $region83: #{tpu_custom_call.1} parent=81 // pred_check
          %p5853 = pneg %p155
        $region84: #{tpu_custom_call.1} parent=81 // pred_check_branch
          %5855 = sbr.rel (%p5853) target = $region86
        $region85: #{tpu_custom_call.1} parent=81 // pred_region
          %s5856 = sand.u32 %s140, 1
          %s5857 = scalar_lea.sflag [#allocation4], %s5856
          %s5858 = sand.u32 %s140, 1
          %s5859 = smul.addr %s5858, 144
          %s5860 = scalar_lea.vmem [#allocation3], %s5859
          %5862 = dma.done %s5857, 2304
        $region86: #{tpu_custom_call.1} parent=81 // pred_fallthru
          _
      $region82: #{tpu_custom_call.1} parent=5 // pred_fallthru
        _
    $region6: #{tpu_custom_call.1} parent=1 // loop_footer
      %s17 = sadd.s32 1, %s13
    $region7: #{tpu_custom_call.1} parent=1 // loop_footer_branch
      %12 = sbr.rel target = $region3
    $region8: #{tpu_custom_call.1} parent=1 // loop_exit
      _
    %5863 = vsyncpa [#allocation4], 1
    %s5864 = scalar_lea.sflag [#allocation4], 1
    %5865 = vsyncpa %s5864, 1

</llo_original>
